<compile_context>
chip_gen: v7x
topology: tpu7x:2x2x1
jax: 0.10.0
libtpu: 0.0.40
codegen_flags: <defaults>
</compile_context>

<pallas_src>
import jax
import jax.numpy as jnp
from jax import lax
from jax.experimental import pallas as pl
from jax.experimental.pallas import tpu as pltpu

BN_EPS = 1e-5


def _mish(x):
    # x * tanh(softplus(x)); softplus with PyTorch's threshold=20
    sp = jnp.where(x > 20.0, x, jnp.log1p(jnp.exp(jnp.minimum(x, 20.0))))
    return x * jnp.tanh(sp)


# --------------------------- fused kernel (one batch element per grid step) -----------------------
def fused_head_kernel(xs_ref, w1_ref, b1_ref, dww_ref, pwt_ref, b2_ref, o_ref, ypad_ref):
    Hp, Wp, C1 = ypad_ref.shape              # (H1+18, W1+18, 32)
    H1, W1 = Hp - 18, Wp - 18
    H2, W2 = H1 + 16, W1 + 16

    # ---- stage 1: conv1 (3x3, stride 2, pad 1) with BN folded, then Mish ------------------------
    # space-to-depth input: xs[i, j, py*2*Cin + px*Cin + c] = xpad[2i+py, 2j+px, c]
    xs = xs_ref[0]                           # [H1+1, W1+1, 4*Cin]
    w1 = w1_ref[...]                         # [4, 4*Cin, 32]   (BN scale already folded in)
    K = xs.shape[-1]
    acc1 = jnp.zeros((H1 * W1, C1), jnp.float32)
    for t, (oy, ox) in enumerate(((0, 0), (0, 1), (1, 0), (1, 1))):   # static, unrolled
        a = xs[oy:oy + H1, ox:ox + W1, :].reshape(H1 * W1, K)
        acc1 = acc1 + jnp.dot(a, w1[t], preferred_element_type=jnp.float32)
    y1 = _mish(acc1 + b1_ref[...])           # [H1*W1, 32]

    # ---- stage 2: ZeroPad2d(8) fused with the depthwise conv's pad(1), held in VMEM -------------
    ypad_ref[...] = jnp.zeros_like(ypad_ref)
    ypad_ref[9:9 + H1, 9:9 + W1, :] = y1.reshape(H1, W1, C1)

    # ---- stage 3: depthwise 3x3 (9 unrolled taps) + pointwise 1x1 + folded BN + Mish ------------
    dww = dww_ref[...]                       # [9, 1, 32]  (hoisted once)
    acc2 = jnp.zeros((H2, W2, C1), jnp.float32)
    for ky in range(3):                      # static, unrolled taps
        for kx in range(3):
            acc2 = acc2 + ypad_ref[ky:ky + H2, kx:kx + W2, :] * dww[3 * ky + kx]

    a2 = acc2.reshape(H2 * W2, C1)           # [H2*W2, 32]
    # pointwise conv with BN scale folded into the weight; output kept as [3, H2*W2] so the
    # final store is lane-dense (H2*W2 lanes) and the NCHW result is a free reshape outside.
    z = jnp.dot(pwt_ref[...], a2.T, preferred_element_type=jnp.float32)   # [3, H2*W2]
    o_ref[0] = _mish(z + b2_ref[...])


# --------------------------- wrapper: weight folding + single pallas_call -------------------------
@jax.jit
def cvitc_head_forward(x, p):
    # x: NCHW float32 (eval-mode module; BN uses running stats)
    B, Cin, Hin, Win = x.shape
    H1 = (Hin - 1) // 2 + 1
    W1 = (Win - 1) // 2 + 1
    Hh, Wh = H1 + 1, W1 + 1
    H2, W2 = H1 + 16, W1 + 16

    # space-to-depth(2) of the zero-padded input: one cheap XLA transpose, replaces the
    # previous 9x-duplicating im2col + transpose + reshape.
    xpad = jnp.pad(x, ((0, 0), (0, 0), (1, 2 * Hh - 1 - Hin), (1, 2 * Wh - 1 - Win)))
    xs = (xpad.reshape(B, Cin, Hh, 2, Wh, 2)
              .transpose(0, 2, 4, 3, 5, 1)
              .reshape(B, Hh, Wh, 4 * Cin))                           # [B, H1+1, W1+1, 4*Cin]

    # fold BN1 into conv1 and rearrange the 3x3/s2 kernel into 4 space-to-depth taps [4*Cin, 32]
    scale1 = p["g1"] / jnp.sqrt(p["v1"] + BN_EPS)                     # [32]
    bias1 = (p["b1"] - p["m1"] * scale1).reshape(1, 32)
    taps = []
    for oy in range(2):
        for ox in range(2):
            rows = []
            for py in range(2):
                for px in range(2):
                    ky, kx = 2 * oy + py, 2 * ox + px
                    if ky <= 2 and kx <= 2:
                        rows.append(p["w1"][:, :, ky, kx].T)          # [Cin, 32]
                    else:
                        rows.append(jnp.zeros((Cin, 32), jnp.float32))
            taps.append(jnp.concatenate(rows, axis=0))                # [4*Cin, 32]
    w1_taps = jnp.stack(taps, axis=0) * scale1[None, None, :]         # [4, 4*Cin, 32]

    # depthwise / pointwise params; fold BN2 + pointwise bias + depthwise bias
    dww = p["dw_w"][:, 0].transpose(1, 2, 0).reshape(9, 1, 32)        # [9, 1, 32]
    pww = p["pw_w"][:, :, 0, 0]                                       # [3, 32]
    scale2 = p["g2"] / jnp.sqrt(p["v2"] + BN_EPS)                     # [3]
    pwt = pww * scale2[:, None]                                       # [3, 32]
    b2f = (scale2 * (pww @ p["dw_b"] + p["pw_b"] - p["m2"]) + p["b2"]).reshape(3, 1)

    out = pl.pallas_call(
        fused_head_kernel,
        out_shape=jax.ShapeDtypeStruct((B, 3, H2 * W2), jnp.float32),
        grid_spec=pltpu.PrefetchScalarGridSpec(
            num_scalar_prefetch=0,
            grid=(B,),
            in_specs=[
                pl.BlockSpec((1, Hh, Wh, 4 * Cin), lambda b: (b, 0, 0, 0)),
                pl.BlockSpec((4, 4 * Cin, 32), lambda b: (0, 0, 0)),
                pl.BlockSpec((1, 32), lambda b: (0, 0)),
                pl.BlockSpec((9, 1, 32), lambda b: (0, 0, 0)),
                pl.BlockSpec((3, 32), lambda b: (0, 0)),
                pl.BlockSpec((3, 1), lambda b: (0, 0)),
            ],
            out_specs=pl.BlockSpec((1, 3, H2 * W2), lambda b: (b, 0, 0)),
            scratch_shapes=[pltpu.VMEM((H1 + 18, W1 + 18, 32), jnp.float32)],
        ),
        compiler_params=pltpu.CompilerParams(
            dimension_semantics=("parallel",)),   # shards batches across v7x's 2 TensorCores
    )(xs, w1_taps, bias1, dww, pwt, b2f)

    return out.reshape(B, 3, H2, W2)              # free view: already NCHW


# --------------------------- pure-JAX reference for the correctness check -------------------------
def reference_forward(x, p):
    dn = ("NCHW", "OIHW", "NCHW")
    y = lax.conv_general_dilated(x, p["w1"], (2, 2), ((1, 1), (1, 1)), dimension_numbers=dn)
    y = (y - p["m1"][None, :, None, None]) / jnp.sqrt(p["v1"][None, :, None, None] + BN_EPS)
    y = y * p["g1"][None, :, None, None] + p["b1"][None, :, None, None]
    y = _mish(y)
    y = jnp.pad(y, ((0, 0), (0, 0), (8, 8), (8, 8)))
    y = lax.conv_general_dilated(y, p["dw_w"], (1, 1), ((1, 1), (1, 1)),
                                 dimension_numbers=dn, feature_group_count=32)
    y = y + p["dw_b"][None, :, None, None]
    y = lax.conv_general_dilated(y, p["pw_w"], (1, 1), ((0, 0), (0, 0)), dimension_numbers=dn)
    y = y + p["pw_b"][None, :, None, None]
    y = (y - p["m2"][None, :, None, None]) / jnp.sqrt(p["v2"][None, :, None, None] + BN_EPS)
    y = y * p["g2"][None, :, None, None] + p["b2"][None, :, None, None]
    return _mish(y)


if __name__ == "__main__":
    key = jax.random.PRNGKey(0)
    ks = jax.random.split(key, 16)
    f32 = jnp.float32

    params = {
        # conv1: Conv2d(3, 32, 3, stride=2, pad=1, bias=False) + BN(32)
        "w1": jax.random.normal(ks[0], (32, 3, 3, 3), f32) * 0.1,
        "g1": jax.random.uniform(ks[1], (32,), f32, 0.8, 1.2),
        "b1": jax.random.normal(ks[2], (32,), f32) * 0.1,
        "m1": jax.random.normal(ks[3], (32,), f32) * 0.1,
        "v1": jax.random.uniform(ks[4], (32,), f32, 0.5, 1.5),
        # dp_conv: depthwise Conv2d(32,32,3,pad=1,groups=32) + pointwise Conv2d(32,3,1) + BN(3)
        "dw_w": jax.random.normal(ks[5], (32, 1, 3, 3), f32) * 0.1,
        "dw_b": jax.random.normal(ks[6], (32,), f32) * 0.1,
        "pw_w": jax.random.normal(ks[7], (3, 32, 1, 1), f32) * 0.1,
        "pw_b": jax.random.normal(ks[8], (3,), f32) * 0.1,
        "g2": jax.random.uniform(ks[9], (3,), f32, 0.8, 1.2),
        "b2": jax.random.normal(ks[10], (3,), f32) * 0.1,
        "m2": jax.random.normal(ks[11], (3,), f32) * 0.1,
        "v2": jax.random.uniform(ks[12], (3,), f32, 0.5, 1.5),
    }

    x = jax.random.normal(ks[13], (2, 3, 16, 16), f32)   # NCHW, like the PyTorch input

    out = jax.block_until_ready(cvitc_head_forward(x, params))
    ref = jax.block_until_ready(reference_forward(x, params))

    assert out.shape == (2, 3, 24, 24), out.shape
    assert jnp.allclose(out, ref, atol=5e-4, rtol=5e-4), float(jnp.max(jnp.abs(out - ref)))
    print("KERNEL_OK")
</pallas_src>

<mosaic_0001>
module attributes {stable_mosaic.version = 11 : i64} {
  func.func @fused_head_kernel(%arg0: i32, %arg1: memref<1x9x9x12xf32, #tpu.memory_space<vmem>>, %arg2: memref<4x12x32xf32, #tpu.memory_space<vmem>>, %arg3: memref<1x32xf32, #tpu.memory_space<vmem>>, %arg4: memref<9x1x32xf32, #tpu.memory_space<vmem>>, %arg5: memref<3x32xf32, #tpu.memory_space<vmem>>, %arg6: memref<3x1xf32, #tpu.memory_space<vmem>>, %arg7: memref<1x3x576xf32, #tpu.memory_space<vmem>>, %arg8: memref<26x26x32xf32, #tpu.memory_space<vmem>>) attributes {dimension_semantics = [#tpu.dimension_semantics<parallel>], iteration_bounds = array<i64: 2>, scalar_prefetch = 0 : i64, scratch_operands = 1 : i64, tpu.core_type = #tpu.core_type<tc>, window_params = [{transform_indices = @transform_0, window_bounds = array<i64: 1, 9, 9, 12>}, {pipeline_mode = #tpu.pipeline_mode<synchronous>, transform_indices = @transform_1, window_bounds = array<i64: 4, 12, 32>}, {pipeline_mode = #tpu.pipeline_mode<synchronous>, transform_indices = @transform_2, window_bounds = array<i64: 1, 32>}, {pipeline_mode = #tpu.pipeline_mode<synchronous>, transform_indices = @transform_3, window_bounds = array<i64: 9, 1, 32>}, {pipeline_mode = #tpu.pipeline_mode<synchronous>, transform_indices = @transform_4, window_bounds = array<i64: 3, 32>}, {pipeline_mode = #tpu.pipeline_mode<synchronous>, transform_indices = @transform_5, window_bounds = array<i64: 3, 1>}, {transform_indices = @transform_6, window_bounds = array<i64: 1, 3, 576>}]} {
    %c0 = arith.constant 0 : index
    %c0_0 = arith.constant 0 : index
    %c0_1 = arith.constant 0 : index
    %c0_2 = arith.constant 0 : index
    %0 = vector.load %arg1[%c0, %c0_0, %c0_1, %c0_2] : memref<1x9x9x12xf32, #tpu.memory_space<vmem>>, vector<1x9x9x12xf32>
    %1 = vector.shape_cast %0 : vector<1x9x9x12xf32> to vector<9x9x12xf32>
    %c0_3 = arith.constant 0 : index
    %c0_4 = arith.constant 0 : index
    %c0_5 = arith.constant 0 : index
    %2 = vector.load %arg2[%c0_3, %c0_4, %c0_5] : memref<4x12x32xf32, #tpu.memory_space<vmem>>, vector<4x12x32xf32>
    %cst = arith.constant 0.000000e+00 : f32
    %3 = vector.broadcast %cst : f32 to vector<64x32xf32>
    %4 = vector.extract_strided_slice %1 {offsets = [0, 0, 0], sizes = [8, 8, 12], strides = [1, 1, 1]} : vector<9x9x12xf32> to vector<8x8x12xf32>
    %5 = vector.shape_cast %4 : vector<8x8x12xf32> to vector<64x12xf32>
    %6 = vector.extract_strided_slice %2 {offsets = [0, 0, 0], sizes = [1, 12, 32], strides = [1, 1, 1]} : vector<4x12x32xf32> to vector<1x12x32xf32>
    %7 = vector.shape_cast %6 : vector<1x12x32xf32> to vector<12x32xf32>
    %cst_6 = arith.constant dense<0.000000e+00> : vector<64x32xf32>
    %8 = tpu.matmul %5, %7, %cst_6 {dimension_numbers = #tpu.dot_dimension_numbers<[1], [0], [0], [1], [0, 0, 1, 1], [], []>} : vector<64x12xf32>, vector<12x32xf32>, vector<64x32xf32> -> vector<64x32xf32>
    %9 = arith.addf %3, %8 : vector<64x32xf32>
    %10 = vector.extract_strided_slice %1 {offsets = [0, 1, 0], sizes = [8, 8, 12], strides = [1, 1, 1]} : vector<9x9x12xf32> to vector<8x8x12xf32>
    %11 = vector.shape_cast %10 : vector<8x8x12xf32> to vector<64x12xf32>
    %12 = vector.extract_strided_slice %2 {offsets = [1, 0, 0], sizes = [1, 12, 32], strides = [1, 1, 1]} : vector<4x12x32xf32> to vector<1x12x32xf32>
    %13 = vector.shape_cast %12 : vector<1x12x32xf32> to vector<12x32xf32>
    %cst_7 = arith.constant dense<0.000000e+00> : vector<64x32xf32>
    %14 = tpu.matmul %11, %13, %cst_7 {dimension_numbers = #tpu.dot_dimension_numbers<[1], [0], [0], [1], [0, 0, 1, 1], [], []>} : vector<64x12xf32>, vector<12x32xf32>, vector<64x32xf32> -> vector<64x32xf32>
    %15 = arith.addf %9, %14 : vector<64x32xf32>
    %16 = vector.extract_strided_slice %1 {offsets = [1, 0, 0], sizes = [8, 8, 12], strides = [1, 1, 1]} : vector<9x9x12xf32> to vector<8x8x12xf32>
    %17 = vector.shape_cast %16 : vector<8x8x12xf32> to vector<64x12xf32>
    %18 = vector.extract_strided_slice %2 {offsets = [2, 0, 0], sizes = [1, 12, 32], strides = [1, 1, 1]} : vector<4x12x32xf32> to vector<1x12x32xf32>
    %19 = vector.shape_cast %18 : vector<1x12x32xf32> to vector<12x32xf32>
    %cst_8 = arith.constant dense<0.000000e+00> : vector<64x32xf32>
    %20 = tpu.matmul %17, %19, %cst_8 {dimension_numbers = #tpu.dot_dimension_numbers<[1], [0], [0], [1], [0, 0, 1, 1], [], []>} : vector<64x12xf32>, vector<12x32xf32>, vector<64x32xf32> -> vector<64x32xf32>
    %21 = arith.addf %15, %20 : vector<64x32xf32>
    %22 = vector.extract_strided_slice %1 {offsets = [1, 1, 0], sizes = [8, 8, 12], strides = [1, 1, 1]} : vector<9x9x12xf32> to vector<8x8x12xf32>
    %23 = vector.shape_cast %22 : vector<8x8x12xf32> to vector<64x12xf32>
    %24 = vector.extract_strided_slice %2 {offsets = [3, 0, 0], sizes = [1, 12, 32], strides = [1, 1, 1]} : vector<4x12x32xf32> to vector<1x12x32xf32>
    %25 = vector.shape_cast %24 : vector<1x12x32xf32> to vector<12x32xf32>
    %cst_9 = arith.constant dense<0.000000e+00> : vector<64x32xf32>
    %26 = tpu.matmul %23, %25, %cst_9 {dimension_numbers = #tpu.dot_dimension_numbers<[1], [0], [0], [1], [0, 0, 1, 1], [], []>} : vector<64x12xf32>, vector<12x32xf32>, vector<64x32xf32> -> vector<64x32xf32>
    %27 = arith.addf %21, %26 : vector<64x32xf32>
    %c0_10 = arith.constant 0 : index
    %c0_11 = arith.constant 0 : index
    %28 = vector.load %arg3[%c0_10, %c0_11] : memref<1x32xf32, #tpu.memory_space<vmem>>, vector<1x32xf32>
    %29 = vector.broadcast %28 : vector<1x32xf32> to vector<64x32xf32>
    %30 = arith.addf %27, %29 : vector<64x32xf32>
    %cst_12 = arith.constant 2.000000e+01 : f32
    %31 = vector.broadcast %cst_12 : f32 to vector<64x32xf32>
    %32 = arith.cmpf ogt, %30, %31 : vector<64x32xf32>
    %cst_13 = arith.constant 2.000000e+01 : f32
    %33 = vector.broadcast %cst_13 : f32 to vector<64x32xf32>
    %34 = arith.minimumf %30, %33 : vector<64x32xf32>
    %35 = math.exp %34 : vector<64x32xf32>
    %36 = math.log1p %35 : vector<64x32xf32>
    %37 = arith.select %32, %30, %36 : vector<64x32xi1>, vector<64x32xf32>
    %38 = math.tanh %37 : vector<64x32xf32>
    %39 = arith.mulf %30, %38 : vector<64x32xf32>
    %cst_14 = arith.constant 0.000000e+00 : f32
    %40 = vector.broadcast %cst_14 : f32 to vector<26x26x32xf32>
    %c0_15 = arith.constant 0 : index
    %c0_16 = arith.constant 0 : index
    %c0_17 = arith.constant 0 : index
    %41 = vector.load %arg8[%c0_15, %c0_16, %c0_17] : memref<26x26x32xf32, #tpu.memory_space<vmem>>, vector<26x26x32xf32>
    tpu.vector_store %arg8[%c0_15, %c0_16, %c0_17], %40 {strides = array<i32>} : memref<26x26x32xf32, #tpu.memory_space<vmem>>, vector<26x26x32xf32>,
    %42 = vector.shape_cast %39 : vector<64x32xf32> to vector<8x8x32xf32>
    %c9 = arith.constant 9 : index
    %c9_18 = arith.constant 9 : index
    %c0_19 = arith.constant 0 : index
    %43 = vector.load %arg8[%c9, %c9_18, %c0_19] : memref<26x26x32xf32, #tpu.memory_space<vmem>>, vector<8x8x32xf32>
    tpu.vector_store %arg8[%c9, %c9_18, %c0_19], %42 {strides = array<i32>} : memref<26x26x32xf32, #tpu.memory_space<vmem>>, vector<8x8x32xf32>,
    %c0_20 = arith.constant 0 : index
    %c0_21 = arith.constant 0 : index
    %c0_22 = arith.constant 0 : index
    %44 = vector.load %arg4[%c0_20, %c0_21, %c0_22] : memref<9x1x32xf32, #tpu.memory_space<vmem>>, vector<9x1x32xf32>
    %cst_23 = arith.constant 0.000000e+00 : f32
    %45 = vector.broadcast %cst_23 : f32 to vector<24x24x32xf32>
    %c0_24 = arith.constant 0 : index
    %c0_25 = arith.constant 0 : index
    %c0_26 = arith.constant 0 : index
    %46 = vector.load %arg8[%c0_24, %c0_25, %c0_26] : memref<26x26x32xf32, #tpu.memory_space<vmem>>, vector<24x24x32xf32>
    %47 = vector.extract_strided_slice %44 {offsets = [0, 0, 0], sizes = [1, 1, 32], strides = [1, 1, 1]} : vector<9x1x32xf32> to vector<1x1x32xf32>
    %48 = vector.shape_cast %47 : vector<1x1x32xf32> to vector<1x32xf32>
    %49 = vector.shape_cast %48 : vector<1x32xf32> to vector<1x1x32xf32>
    %50 = vector.broadcast %49 : vector<1x1x32xf32> to vector<24x24x32xf32>
    %51 = arith.mulf %46, %50 : vector<24x24x32xf32>
    %52 = arith.addf %45, %51 : vector<24x24x32xf32>
    %c0_27 = arith.constant 0 : index
    %c1 = arith.constant 1 : index
    %c0_28 = arith.constant 0 : index
    %53 = vector.load %arg8[%c0_27, %c1, %c0_28] : memref<26x26x32xf32, #tpu.memory_space<vmem>>, vector<24x24x32xf32>
    %54 = vector.extract_strided_slice %44 {offsets = [1, 0, 0], sizes = [1, 1, 32], strides = [1, 1, 1]} : vector<9x1x32xf32> to vector<1x1x32xf32>
    %55 = vector.shape_cast %54 : vector<1x1x32xf32> to vector<1x32xf32>
    %56 = vector.shape_cast %55 : vector<1x32xf32> to vector<1x1x32xf32>
    %57 = vector.broadcast %56 : vector<1x1x32xf32> to vector<24x24x32xf32>
    %58 = arith.mulf %53, %57 : vector<24x24x32xf32>
    %59 = arith.addf %52, %58 : vector<24x24x32xf32>
    %c0_29 = arith.constant 0 : index
    %c2 = arith.constant 2 : index
    %c0_30 = arith.constant 0 : index
    %60 = vector.load %arg8[%c0_29, %c2, %c0_30] : memref<26x26x32xf32, #tpu.memory_space<vmem>>, vector<24x24x32xf32>
    %61 = vector.extract_strided_slice %44 {offsets = [2, 0, 0], sizes = [1, 1, 32], strides = [1, 1, 1]} : vector<9x1x32xf32> to vector<1x1x32xf32>
    %62 = vector.shape_cast %61 : vector<1x1x32xf32> to vector<1x32xf32>
    %63 = vector.shape_cast %62 : vector<1x32xf32> to vector<1x1x32xf32>
    %64 = vector.broadcast %63 : vector<1x1x32xf32> to vector<24x24x32xf32>
    %65 = arith.mulf %60, %64 : vector<24x24x32xf32>
    %66 = arith.addf %59, %65 : vector<24x24x32xf32>
    %c1_31 = arith.constant 1 : index
    %c0_32 = arith.constant 0 : index
    %c0_33 = arith.constant 0 : index
    %67 = vector.load %arg8[%c1_31, %c0_32, %c0_33] : memref<26x26x32xf32, #tpu.memory_space<vmem>>, vector<24x24x32xf32>
    %68 = vector.extract_strided_slice %44 {offsets = [3, 0, 0], sizes = [1, 1, 32], strides = [1, 1, 1]} : vector<9x1x32xf32> to vector<1x1x32xf32>
    %69 = vector.shape_cast %68 : vector<1x1x32xf32> to vector<1x32xf32>
    %70 = vector.shape_cast %69 : vector<1x32xf32> to vector<1x1x32xf32>
    %71 = vector.broadcast %70 : vector<1x1x32xf32> to vector<24x24x32xf32>
    %72 = arith.mulf %67, %71 : vector<24x24x32xf32>
    %73 = arith.addf %66, %72 : vector<24x24x32xf32>
    %c1_34 = arith.constant 1 : index
    %c1_35 = arith.constant 1 : index
    %c0_36 = arith.constant 0 : index
    %74 = vector.load %arg8[%c1_34, %c1_35, %c0_36] : memref<26x26x32xf32, #tpu.memory_space<vmem>>, vector<24x24x32xf32>
    %75 = vector.extract_strided_slice %44 {offsets = [4, 0, 0], sizes = [1, 1, 32], strides = [1, 1, 1]} : vector<9x1x32xf32> to vector<1x1x32xf32>
    %76 = vector.shape_cast %75 : vector<1x1x32xf32> to vector<1x32xf32>
    %77 = vector.shape_cast %76 : vector<1x32xf32> to vector<1x1x32xf32>
    %78 = vector.broadcast %77 : vector<1x1x32xf32> to vector<24x24x32xf32>
    %79 = arith.mulf %74, %78 : vector<24x24x32xf32>
    %80 = arith.addf %73, %79 : vector<24x24x32xf32>
    %c1_37 = arith.constant 1 : index
    %c2_38 = arith.constant 2 : index
    %c0_39 = arith.constant 0 : index
    %81 = vector.load %arg8[%c1_37, %c2_38, %c0_39] : memref<26x26x32xf32, #tpu.memory_space<vmem>>, vector<24x24x32xf32>
    %82 = vector.extract_strided_slice %44 {offsets = [5, 0, 0], sizes = [1, 1, 32], strides = [1, 1, 1]} : vector<9x1x32xf32> to vector<1x1x32xf32>
    %83 = vector.shape_cast %82 : vector<1x1x32xf32> to vector<1x32xf32>
    %84 = vector.shape_cast %83 : vector<1x32xf32> to vector<1x1x32xf32>
    %85 = vector.broadcast %84 : vector<1x1x32xf32> to vector<24x24x32xf32>
    %86 = arith.mulf %81, %85 : vector<24x24x32xf32>
    %87 = arith.addf %80, %86 : vector<24x24x32xf32>
    %c2_40 = arith.constant 2 : index
    %c0_41 = arith.constant 0 : index
    %c0_42 = arith.constant 0 : index
    %88 = vector.load %arg8[%c2_40, %c0_41, %c0_42] : memref<26x26x32xf32, #tpu.memory_space<vmem>>, vector<24x24x32xf32>
    %89 = vector.extract_strided_slice %44 {offsets = [6, 0, 0], sizes = [1, 1, 32], strides = [1, 1, 1]} : vector<9x1x32xf32> to vector<1x1x32xf32>
    %90 = vector.shape_cast %89 : vector<1x1x32xf32> to vector<1x32xf32>
    %91 = vector.shape_cast %90 : vector<1x32xf32> to vector<1x1x32xf32>
    %92 = vector.broadcast %91 : vector<1x1x32xf32> to vector<24x24x32xf32>
    %93 = arith.mulf %88, %92 : vector<24x24x32xf32>
    %94 = arith.addf %87, %93 : vector<24x24x32xf32>
    %c2_43 = arith.constant 2 : index
    %c1_44 = arith.constant 1 : index
    %c0_45 = arith.constant 0 : index
    %95 = vector.load %arg8[%c2_43, %c1_44, %c0_45] : memref<26x26x32xf32, #tpu.memory_space<vmem>>, vector<24x24x32xf32>
    %96 = vector.extract_strided_slice %44 {offsets = [7, 0, 0], sizes = [1, 1, 32], strides = [1, 1, 1]} : vector<9x1x32xf32> to vector<1x1x32xf32>
    %97 = vector.shape_cast %96 : vector<1x1x32xf32> to vector<1x32xf32>
    %98 = vector.shape_cast %97 : vector<1x32xf32> to vector<1x1x32xf32>
    %99 = vector.broadcast %98 : vector<1x1x32xf32> to vector<24x24x32xf32>
    %100 = arith.mulf %95, %99 : vector<24x24x32xf32>
    %101 = arith.addf %94, %100 : vector<24x24x32xf32>
    %c2_46 = arith.constant 2 : index
    %c2_47 = arith.constant 2 : index
    %c0_48 = arith.constant 0 : index
    %102 = vector.load %arg8[%c2_46, %c2_47, %c0_48] : memref<26x26x32xf32, #tpu.memory_space<vmem>>, vector<24x24x32xf32>
    %103 = vector.extract_strided_slice %44 {offsets = [8, 0, 0], sizes = [1, 1, 32], strides = [1, 1, 1]} : vector<9x1x32xf32> to vector<1x1x32xf32>
    %104 = vector.shape_cast %103 : vector<1x1x32xf32> to vector<1x32xf32>
    %105 = vector.shape_cast %104 : vector<1x32xf32> to vector<1x1x32xf32>
    %106 = vector.broadcast %105 : vector<1x1x32xf32> to vector<24x24x32xf32>
    %107 = arith.mulf %102, %106 : vector<24x24x32xf32>
    %108 = arith.addf %101, %107 : vector<24x24x32xf32>
    %109 = vector.shape_cast %108 : vector<24x24x32xf32> to vector<576x32xf32>
    %c0_49 = arith.constant 0 : index
    %c0_50 = arith.constant 0 : index
    %110 = vector.load %arg5[%c0_49, %c0_50] : memref<3x32xf32, #tpu.memory_space<vmem>>, vector<3x32xf32>
    %111 = tpu.transpose %109, [1, 0] : vector<576x32xf32> -> vector<32x576xf32>
    %cst_51 = arith.constant dense<0.000000e+00> : vector<3x576xf32>
    %112 = tpu.matmul %110, %111, %cst_51 {dimension_numbers = #tpu.dot_dimension_numbers<[1], [0], [0], [1], [0, 0, 1, 1], [], []>} : vector<3x32xf32>, vector<32x576xf32>, vector<3x576xf32> -> vector<3x576xf32>
    %c0_52 = arith.constant 0 : index
    %c0_53 = arith.constant 0 : index
    %113 = vector.load %arg6[%c0_52, %c0_53] : memref<3x1xf32, #tpu.memory_space<vmem>>, vector<3x1xf32>
    %114 = vector.broadcast %113 : vector<3x1xf32> to vector<3x576xf32>
    %115 = arith.addf %112, %114 : vector<3x576xf32>
    %cst_54 = arith.constant 2.000000e+01 : f32
    %116 = vector.broadcast %cst_54 : f32 to vector<3x576xf32>
    %117 = arith.cmpf ogt, %115, %116 : vector<3x576xf32>
    %cst_55 = arith.constant 2.000000e+01 : f32
    %118 = vector.broadcast %cst_55 : f32 to vector<3x576xf32>
    %119 = arith.minimumf %115, %118 : vector<3x576xf32>
    %120 = math.exp %119 : vector<3x576xf32>
    %121 = math.log1p %120 : vector<3x576xf32>
    %122 = arith.select %117, %115, %121 : vector<3x576xi1>, vector<3x576xf32>
    %123 = math.tanh %122 : vector<3x576xf32>
    %124 = arith.mulf %115, %123 : vector<3x576xf32>
    %c0_56 = arith.constant 0 : index
    %c0_57 = arith.constant 0 : index
    %c0_58 = arith.constant 0 : index
    %125 = vector.load %arg7[%c0_56, %c0_57, %c0_58] : memref<1x3x576xf32, #tpu.memory_space<vmem>>, vector<1x3x576xf32>
    %126 = vector.shape_cast %125 : vector<1x3x576xf32> to vector<3x576xf32>
    %127 = vector.shape_cast %124 : vector<3x576xf32> to vector<1x3x576xf32>
    tpu.vector_store %arg7[%c0_56, %c0_57, %c0_58], %127 {strides = array<i32>} : memref<1x3x576xf32, #tpu.memory_space<vmem>>, vector<1x3x576xf32>,
    return
  }
  func.func @transform_0(%arg0: i32) -> (i32, i32, i32, i32) {
    %c0_i32 = arith.constant 0 : i32
    %c0_i32_0 = arith.constant 0 : i32
    %c0_i32_1 = arith.constant 0 : i32
    %c0_i32_2 = arith.constant 0 : i32
    return %arg0, %c0_i32, %c0_i32_0, %c0_i32_1 : i32, i32, i32, i32
  }
  func.func @transform_1(%arg0: i32) -> (i32, i32, i32) {
    %c0_i32 = arith.constant 0 : i32
    %c0_i32_0 = arith.constant 0 : i32
    %c0_i32_1 = arith.constant 0 : i32
    %c0_i32_2 = arith.constant 0 : i32
    return %c0_i32, %c0_i32_0, %c0_i32_1 : i32, i32, i32
  }
  func.func @transform_2(%arg0: i32) -> (i32, i32) {
    %c0_i32 = arith.constant 0 : i32
    %c0_i32_0 = arith.constant 0 : i32
    %c0_i32_1 = arith.constant 0 : i32
    return %c0_i32, %c0_i32_0 : i32, i32
  }
  func.func @transform_3(%arg0: i32) -> (i32, i32, i32) {
    %c0_i32 = arith.constant 0 : i32
    %c0_i32_0 = arith.constant 0 : i32
    %c0_i32_1 = arith.constant 0 : i32
    %c0_i32_2 = arith.constant 0 : i32
    return %c0_i32, %c0_i32_0, %c0_i32_1 : i32, i32, i32
  }
  func.func @transform_4(%arg0: i32) -> (i32, i32) {
    %c0_i32 = arith.constant 0 : i32
    %c0_i32_0 = arith.constant 0 : i32
    %c0_i32_1 = arith.constant 0 : i32
    return %c0_i32, %c0_i32_0 : i32, i32
  }
  func.func @transform_5(%arg0: i32) -> (i32, i32) {
    %c0_i32 = arith.constant 0 : i32
    %c0_i32_0 = arith.constant 0 : i32
    %c0_i32_1 = arith.constant 0 : i32
    return %c0_i32, %c0_i32_0 : i32, i32
  }
  func.func @transform_6(%arg0: i32) -> (i32, i32, i32) {
    %c0_i32 = arith.constant 0 : i32
    %c0_i32_0 = arith.constant 0 : i32
    %c0_i32_1 = arith.constant 0 : i32
    return %arg0, %c0_i32, %c0_i32_0 : i32, i32, i32
  }
}

</mosaic_0001>

<llo_original>
// kernel: cvitc_head_forward.1
$region0: #{cvitc_head_forward.1}
  #allocation0 [shape = 'u32[]', space=smem, size = 0x4, offset = 0x4, fixed_abs, tag = 'smem constant byte address 0x4 - core index']
  #allocation1 [shape = 'u32[144,128]{1,0:T(1,128)}', space=vmem, size = 0x12000, scoped, tag = 'internal scratch']
  #allocation2 [shape = 'f32[26,26,32]{2,1,0:T(8,128)}', space=vmem, size = 0x68000, scoped, tag = 'scratch operand']
  %s0 = inlined_call_operand.vmem [shape: f32[2,9,9,12], index: 0, kind: input, shape index: {}]
  %s1 = inlined_call_operand.vmem [shape: f32[4,12,32], index: 1, kind: input, shape index: {}]
  %s2 = inlined_call_operand.vmem [shape: f32[1,32], index: 2, kind: input, shape index: {}]
  %s3 = inlined_call_operand.vmem [shape: f32[9,1,32], index: 3, kind: input, shape index: {}]
  %s4 = inlined_call_operand.vmem [shape: f32[3,32], index: 4, kind: input, shape index: {}]
  %s5 = inlined_call_operand.vmem [shape: f32[3,1], index: 5, kind: input, shape index: {}]
  %s6 = inlined_call_operand.vmem [shape: f32[2,3,576], index: 6, kind: output, shape index: {}]
  %s7 = sld [smem:[#allocation0]]
  $region57: #{cvitc_head_forward.1} parent=0
    _
  %s9 = ssub.s32 1, %s7
  %s10 = scalar_select 0, %s9, %s7
  loop: start=0, step=1, limit=4
  $region2: #{cvitc_head_forward.1} parent=0 // loop_pre_header
    _
  $region3: #{cvitc_head_forward.1} parent=0 // loop_header
    %s12 = sphi 0, %s16
    %p13 = scmp.ge.s32.totalorder %s12, 4
    %s22 = sphi 0, %s24
    %s25 = sphi 0, %s22
    %s26 = sphi 0, %s25
    %s42 = sphi 0, %s26
    %s46 = sphi 0, %s46
    %s48 = sphi 0, %s46
    %s49 = sphi 0, %s48
    %s63 = sphi 0, %s49
    %s67 = sphi 0, %s67
    %s69 = sphi 0, %s67
    %s70 = sphi 0, %s69
    %s84 = sphi 0, %s70
    %s88 = sphi 0, %s88
    %s90 = sphi 0, %s88
    %s91 = sphi 0, %s90
    %s105 = sphi 0, %s91
    %s109 = sphi 0, %s109
    %s111 = sphi 0, %s109
    %s112 = sphi 0, %s111
    %s126 = sphi 0, %s112
    %s130 = sphi 0, %s130
    %s132 = sphi 0, %s130
    %s133 = sphi 0, %s132
    %s147 = sphi 0, %s133
    %s153 = sphi 0, %s155
    %s156 = sphi 0, %s153
    %s157 = sphi 0, %s156
    %s173 = sphi 0, %s157
  $region4: #{cvitc_head_forward.1} parent=0 // loop_header_branch
    %15 = sbr.rel (%p13) target = $region8
  $region5: #{cvitc_head_forward.1} parent=0 // loop_body
    %s17 = ssub.s32 %s12, 1
    %s18 = ssub.s32 %s12, 2
    %s19 = sadd.s32 %s12, 1
    %s20 = ssub.s32 %s12, %s19
    %p21 = scmp.eq.s32.totalorder %s20, 0
    %s23 = sadd.s32 %s22, 1
    %s24 = scalar_select %p21, %s22, %s23
    %p27 = pneg %p21
    %p28 = scmp.eq.s32.totalorder %s12, 1
    %p29 = por %p27, %p28
    %p30 = scmp.ne.s32.totalorder %s22, %s25
    %p31 = scmp.eq.s32.totalorder %s12, 0
    %p32 = por %p30, %p31
    %p33 = scmp.ne.s32.totalorder %s22, %s25
    %p34 = scmp.eq.s32.totalorder %s17, 1
    %p35 = por %p33, %p34
    %p36 = scmp.ne.s32.totalorder %s25, %s26
    %p37 = scmp.eq.s32.totalorder %s17, 0
    %p38 = por %p36, %p37
    %p39 = scmp.ne.s32.totalorder %s25, %s26
    %p40 = scmp.eq.s32.totalorder %s18, 1
    %p41 = por %p39, %p40
    %p43 = scmp.ne.s32.totalorder %s26, %s42
    %p44 = scmp.eq.s32.totalorder %s18, 0
    %p45 = por %p43, %p44
    %s47 = sadd.s32 %s46, 1
    %p50 = scmp.eq.s32.totalorder %s12, 1
    %p51 = scmp.ne.s32.totalorder %s46, %s48
    %p52 = scmp.eq.s32.totalorder %s12, 0
    %p53 = por %p51, %p52
    %p54 = scmp.ne.s32.totalorder %s46, %s48
    %p55 = scmp.eq.s32.totalorder %s17, 1
    %p56 = por %p54, %p55
    %p57 = scmp.ne.s32.totalorder %s48, %s49
    %p58 = scmp.eq.s32.totalorder %s17, 0
    %p59 = por %p57, %p58
    %p60 = scmp.ne.s32.totalorder %s48, %s49
    %p61 = scmp.eq.s32.totalorder %s18, 1
    %p62 = por %p60, %p61
    %p64 = scmp.ne.s32.totalorder %s49, %s63
    %p65 = scmp.eq.s32.totalorder %s18, 0
    %p66 = por %p64, %p65
    %s68 = sadd.s32 %s67, 1
    %p71 = scmp.eq.s32.totalorder %s12, 1
    %p72 = scmp.ne.s32.totalorder %s67, %s69
    %p73 = scmp.eq.s32.totalorder %s12, 0
    %p74 = por %p72, %p73
    %p75 = scmp.ne.s32.totalorder %s67, %s69
    %p76 = scmp.eq.s32.totalorder %s17, 1
    %p77 = por %p75, %p76
    %p78 = scmp.ne.s32.totalorder %s69, %s70
    %p79 = scmp.eq.s32.totalorder %s17, 0
    %p80 = por %p78, %p79
    %p81 = scmp.ne.s32.totalorder %s69, %s70
    %p82 = scmp.eq.s32.totalorder %s18, 1
    %p83 = por %p81, %p82
    %p85 = scmp.ne.s32.totalorder %s70, %s84
    %p86 = scmp.eq.s32.totalorder %s18, 0
    %p87 = por %p85, %p86
    %s89 = sadd.s32 %s88, 1
    %p92 = scmp.eq.s32.totalorder %s12, 1
    %p93 = scmp.ne.s32.totalorder %s88, %s90
    %p94 = scmp.eq.s32.totalorder %s12, 0
    %p95 = por %p93, %p94
    %p96 = scmp.ne.s32.totalorder %s88, %s90
    %p97 = scmp.eq.s32.totalorder %s17, 1
    %p98 = por %p96, %p97
    %p99 = scmp.ne.s32.totalorder %s90, %s91
    %p100 = scmp.eq.s32.totalorder %s17, 0
    %p101 = por %p99, %p100
    %p102 = scmp.ne.s32.totalorder %s90, %s91
    %p103 = scmp.eq.s32.totalorder %s18, 1
    %p104 = por %p102, %p103
    %p106 = scmp.ne.s32.totalorder %s91, %s105
    %p107 = scmp.eq.s32.totalorder %s18, 0
    %p108 = por %p106, %p107
    %s110 = sadd.s32 %s109, 1
    %p113 = scmp.eq.s32.totalorder %s12, 1
    %p114 = scmp.ne.s32.totalorder %s109, %s111
    %p115 = scmp.eq.s32.totalorder %s12, 0
    %p116 = por %p114, %p115
    %p117 = scmp.ne.s32.totalorder %s109, %s111
    %p118 = scmp.eq.s32.totalorder %s17, 1
    %p119 = por %p117, %p118
    %p120 = scmp.ne.s32.totalorder %s111, %s112
    %p121 = scmp.eq.s32.totalorder %s17, 0
    %p122 = por %p120, %p121
    %p123 = scmp.ne.s32.totalorder %s111, %s112
    %p124 = scmp.eq.s32.totalorder %s18, 1
    %p125 = por %p123, %p124
    %p127 = scmp.ne.s32.totalorder %s112, %s126
    %p128 = scmp.eq.s32.totalorder %s18, 0
    %p129 = por %p127, %p128
    %s131 = sadd.s32 %s130, 1
    %p134 = scmp.eq.s32.totalorder %s12, 1
    %p135 = scmp.ne.s32.totalorder %s130, %s132
    %p136 = scmp.eq.s32.totalorder %s12, 0
    %p137 = por %p135, %p136
    %p138 = scmp.ne.s32.totalorder %s130, %s132
    %p139 = scmp.eq.s32.totalorder %s17, 1
    %p140 = por %p138, %p139
    %p141 = scmp.ne.s32.totalorder %s132, %s133
    %p142 = scmp.eq.s32.totalorder %s17, 0
    %p143 = por %p141, %p142
    %p144 = scmp.ne.s32.totalorder %s132, %s133
    %p145 = scmp.eq.s32.totalorder %s18, 1
    %p146 = por %p144, %p145
    %p148 = scmp.ne.s32.totalorder %s133, %s147
    %p149 = scmp.eq.s32.totalorder %s18, 0
    %p150 = por %p148, %p149
    %s151 = ssub.s32 %s12, %s19
    %p152 = scmp.eq.s32.totalorder %s151, 0
    %s154 = sadd.s32 %s153, 1
    %s155 = scalar_select %p152, %s153, %s154
    %p158 = pneg %p152
    %p159 = scmp.eq.s32.totalorder %s12, 1
    %p160 = por %p158, %p159
    %p161 = scmp.ne.s32.totalorder %s153, %s156
    %p162 = scmp.eq.s32.totalorder %s12, 0
    %p163 = por %p161, %p162
    %p164 = scmp.ne.s32.totalorder %s153, %s156
    %p165 = scmp.eq.s32.totalorder %s17, 1
    %p166 = por %p164, %p165
    %p167 = scmp.ne.s32.totalorder %s156, %s157
    %p168 = scmp.eq.s32.totalorder %s17, 0
    %p169 = por %p167, %p168
    %p170 = scmp.ne.s32.totalorder %s156, %s157
    %p171 = scmp.eq.s32.totalorder %s18, 1
    %p172 = por %p170, %p171
    %p174 = scmp.ne.s32.totalorder %s157, %s173
    %p175 = scmp.eq.s32.totalorder %s18, 0
    %p176 = por %p174, %p175
    %p177 = scmp.le.s32.totalorder 1, %s12
    %p178 = scmp.lt.s32.totalorder %s12, 3
    %p179 = pnand %p177, %p178
    %p180 = pneg %p179
    // Predicated region
    $region9: #{cvitc_head_forward.1} parent=5 // pred_check
      _
    $region10: #{cvitc_head_forward.1} parent=5 // pred_check_branch
      %182 = sbr.rel (%p179) target = $region12
    $region11: #{cvitc_head_forward.1} parent=5 // pred_region
      %s183 = ssub.s32 %s12, 1
      // Predicated region
      $region13: #{cvitc_head_forward.1} parent=11 // pred_check
        %p184 = pneg %p59
      $region14: #{cvitc_head_forward.1} parent=11 // pred_check_branch
        %186 = sbr.rel (%p184) target = $region16
      $region15: #{cvitc_head_forward.1} parent=11 // pred_region
        _
      $region16: #{cvitc_head_forward.1} parent=11 // pred_fallthru
        _
      // Predicated region
      $region17: #{cvitc_head_forward.1} parent=11 // pred_check
        %p187 = pneg %p80
      $region18: #{cvitc_head_forward.1} parent=11 // pred_check_branch
        %189 = sbr.rel (%p187) target = $region20
      $region19: #{cvitc_head_forward.1} parent=11 // pred_region
        _
      $region20: #{cvitc_head_forward.1} parent=11 // pred_fallthru
        _
      // Predicated region
      $region21: #{cvitc_head_forward.1} parent=11 // pred_check
        %p190 = pneg %p101
      $region22: #{cvitc_head_forward.1} parent=11 // pred_check_branch
        %192 = sbr.rel (%p190) target = $region24
      $region23: #{cvitc_head_forward.1} parent=11 // pred_region
        _
      $region24: #{cvitc_head_forward.1} parent=11 // pred_fallthru
        _
      // Predicated region
      $region25: #{cvitc_head_forward.1} parent=11 // pred_check
        %p193 = pneg %p122
      $region26: #{cvitc_head_forward.1} parent=11 // pred_check_branch
        %195 = sbr.rel (%p193) target = $region28
      $region27: #{cvitc_head_forward.1} parent=11 // pred_region
        _
      $region28: #{cvitc_head_forward.1} parent=11 // pred_fallthru
        _
      // Predicated region
      $region29: #{cvitc_head_forward.1} parent=11 // pred_check
        %p196 = pneg %p143
      $region30: #{cvitc_head_forward.1} parent=11 // pred_check_branch
        %198 = sbr.rel (%p196) target = $region32
      $region31: #{cvitc_head_forward.1} parent=11 // pred_region
        _
      $region32: #{cvitc_head_forward.1} parent=11 // pred_fallthru
        _
    $region12: #{cvitc_head_forward.1} parent=5 // pred_fallthru
      _
    %p199 = scmp.lt.s32.totalorder %s12, 2
    // Predicated region
    $region33: #{cvitc_head_forward.1} parent=5 // pred_check
      %p200 = pneg %p199
    $region34: #{cvitc_head_forward.1} parent=5 // pred_check_branch
      %202 = sbr.rel (%p200) target = $region36
    $region35: #{cvitc_head_forward.1} parent=5 // pred_region
      // Predicated region
      $region37: #{cvitc_head_forward.1} parent=35 // pred_check
        %p203 = pneg %p32
      $region38: #{cvitc_head_forward.1} parent=35 // pred_check_branch
        %205 = sbr.rel (%p203) target = $region40
      $region39: #{cvitc_head_forward.1} parent=35 // pred_region
        %p206 = scmp.lt.s32.totalorder %s12, 1
        %s207 = scalar_select %p206, %s12, 1
        %s208 = smul.addr %s207, 18
        %s209 = smul.addr %s208, 8
        %s210 = scalar_lea.vmem %s0, %s209
      $region40: #{cvitc_head_forward.1} parent=35 // pred_fallthru
        _
    $region36: #{cvitc_head_forward.1} parent=5 // pred_fallthru
      _
    %p211 = scmp.le.s32.totalorder 1, %s12
    %p212 = scmp.lt.s32.totalorder %s12, 3
    %p213 = pnand %p211, %p212
    %p214 = pneg %p213
    // Predicated region
    $region41: #{cvitc_head_forward.1} parent=5 // pred_check
      _
    $region42: #{cvitc_head_forward.1} parent=5 // pred_check_branch
      %216 = sbr.rel (%p213) target = $region44
    $region43: #{cvitc_head_forward.1} parent=5 // pred_region
      %s217 = ssub.s32 %s12, 1
      %p218 = scmp.lt.s32.totalorder %s17, 1
      %s219 = scalar_select %p218, %s17, 1
      %s220 = smul.addr %s219, 18
      %s221 = smul.addr %s220, 8
      %s222 = scalar_lea.vmem %s0, %s221
      %p223 = pneg %p38
      %p224 = pneg %p35
      %p225 = pneg %p59
      %p226 = pneg %p56
      %p227 = pneg %p80
      %p228 = pneg %p77
      %p229 = pneg %p101
      %p230 = pneg %p98
      %p231 = pneg %p122
      %p232 = pneg %p119
      %p233 = pneg %p143
      %p234 = pneg %p140
      %p235 = pneg %p169
      %p236 = pneg %p166
      %p237 = scmp.lt.s32.totalorder %s17, 1
      %s238 = scalar_select %p237, %s17, 1
      %s239 = smul.addr %s238, 5
      %s240 = smul.addr %s239, 4
      %s241 = scalar_lea.vmem %s6, %s240
      %p242 = scmp.lt.s32.totalorder %s17, 1
      %s243 = scalar_select %p242, %s17, 1
      %s244 = smul.addr %s243, 18
      %s245 = smul.addr %s244, 8
      %s246 = scalar_lea.vmem %s0, %s245
      %p247 = scmp.lt.s32.totalorder %s17, 1
      %s248 = scalar_select %p247, %s17, 1
      %s249 = smul.addr %s248, 5
      %s250 = smul.addr %s249, 4
      %s251 = scalar_lea.vmem %s6, %s250
      %v252 = vld [vmem:[%s246] sm:$0xff]
      %v253 = vld [vmem:[%s246 + $0x8] sm:$0x1]
      %v254 = vld [vmem:[%s246 + $0x10] sm:$0xff]
      %v255 = vld [vmem:[%s246 + $0x18] sm:$0x1]
      %v256 = vld [vmem:[%s246 + $0x20] sm:$0xff]
      %v257 = vld [vmem:[%s246 + $0x28] sm:$0x1]
      %v258 = vld [vmem:[%s246 + $0x30] sm:$0xff]
      %v259 = vld [vmem:[%s246 + $0x38] sm:$0x1]
      %v260 = vld [vmem:[%s246 + $0x40] sm:$0xff]
      %v261 = vld [vmem:[%s246 + $0x48] sm:$0x1]
      %v262 = vld [vmem:[%s246 + $0x50] sm:$0xff]
      %v263 = vld [vmem:[%s246 + $0x58] sm:$0x1]
      %v264 = vld [vmem:[%s246 + $0x60] sm:$0xff]
      %v265 = vld [vmem:[%s246 + $0x68] sm:$0x1]
      %v266 = vld [vmem:[%s246 + $0x70] sm:$0xff]
      %v267 = vld [vmem:[%s246 + $0x78] sm:$0x1]
      %v268 = vld [vmem:[%s246 + $0x80] sm:$0xff]
      %v269 = vld [vmem:[%s246 + $0x88] sm:$0x1]
      %v270 = vld [vmem:[%s1] sm:$0xff]
      %v271 = vld [vmem:[%s1 + $0x8] sm:$0xf]
      %v272 = vld [vmem:[%s1 + $0x10] sm:$0xff]
      %v273 = vld [vmem:[%s1 + $0x18] sm:$0xf]
      %v274 = vld [vmem:[%s1 + $0x20] sm:$0xff]
      %v275 = vld [vmem:[%s1 + $0x28] sm:$0xf]
      %v276 = vld [vmem:[%s1 + $0x30] sm:$0xff]
      %v277 = vld [vmem:[%s1 + $0x38] sm:$0xf]
      %vm294 = vcmask 1046528
      %v295 = vrot.slane %v252, 1
      %v296 = vrot.slane %v253, 1
      %v297 = vsel %vm294, %v295, %v296
      %v298 = vrot.slane %v254, 1
      %v299 = vrot.slane %v255, 1
      %v300 = vsel %vm294, %v298, %v299
      %v301 = vrot.slane %v256, 1
      %v302 = vrot.slane %v257, 1
      %v303 = vsel %vm294, %v301, %v302
      %v304 = vrot.slane %v258, 1
      %v305 = vrot.slane %v259, 1
      %v306 = vsel %vm294, %v304, %v305
      %v307 = vrot.slane %v260, 1
      %v308 = vrot.slane %v261, 1
      %v309 = vsel %vm294, %v307, %v308
      %v310 = vrot.slane %v262, 1
      %v311 = vrot.slane %v263, 1
      %v312 = vsel %vm294, %v310, %v311
      %v313 = vrot.slane %v264, 1
      %v314 = vrot.slane %v265, 1
      %v315 = vsel %vm294, %v313, %v314
      %v316 = vrot.slane %v266, 1
      %v317 = vrot.slane %v267, 1
      %v318 = vsel %vm294, %v316, %v317
      %vm319 = vcmask 97280
      %v320 = vsel %vm319, %v297, 0
      %v322 = vsel %vm319, %v300, 0
      %v324 = vsel %vm319, %v303, 0
      %v326 = vsel %vm319, %v306, 0
      %v328 = vsel %vm319, %v309, 0
      %v330 = vsel %vm319, %v312, 0
      %v332 = vsel %vm319, %v315, 0
      %v334 = vsel %vm319, %v318, 0
      %vm336 = vcmask 1043456
      %v338 = vsel %vm336, %v273, 0
      %340 = vmatprep.subr.mxu0 0.0
      %341 = vmatpush1.msra.mxu0 %v272
      %342 = vmatprep.subr.mxu0 0.0
      %343 = vmatpush1.msra.mxu0 %v338
      %344 = vmatprep.subr.mxu0 0.0
      %345 = vmatpush1.msra.mxu0 0.0
      %346 = vmatprep.subr.mxu0 0.0
      %347 = vmatpush1.msra.mxu0 0.0
      %348 = vmatprep.subr.mxu0 0.0
      %349 = vmatpush1.msra.mxu0 0.0
      %350 = vmatprep.subr.mxu0 0.0
      %351 = vmatpush1.msra.mxu0 0.0
      %352 = vmatprep.subr.mxu0 0.0
      %353 = vmatpush1.msra.mxu0 0.0
      %354 = vmatprep.subr.mxu0 0.0
      %355 = vmatpush1.msra.mxu0 0.0
      %356 = vmatprep.subr.mxu0 0.0
      %357 = vmatpush1.msra.mxu0 0.0
      %358 = vmatprep.subr.mxu0 0.0
      %359 = vmatpush1.msra.mxu0 0.0
      %360 = vmatprep.subr.mxu0 0.0
      %361 = vmatpush1.msra.mxu0 0.0
      %362 = vmatprep.subr.mxu0 0.0
      %363 = vmatpush1.msra.mxu0 0.0
      %364 = vmatprep.subr.mxu0 0.0
      %365 = vmatpush1.msra.mxu0 0.0
      %366 = vmatprep.subr.mxu0 0.0
      %367 = vmatpush1.msra.mxu0 0.0
      %368 = vmatprep.subr.mxu0 0.0
      %369 = vmatpush1.msra.mxu0 0.0
      %370 = vmatprep.subr.mxu0 0.0
      %371 = vmatpush1.msra.mxu0 0.0
      %372 = vmatprep.subr.mxu0 0.0
      %373 = vmatpush1.msra.mxu0 0.0
      %374 = vmatprep.subr.mxu0 0.0
      %375 = vmatpush1.msra.mxu0 0.0
      %376 = vmatprep.subr.mxu0 0.0
      %377 = vmatpush1.msra.mxu0 0.0
      %378 = vmatprep.subr.mxu0 0.0
      %379 = vmatpush1.msra.mxu0 0.0
      %380 = vmatprep.subr.mxu0 0.0
      %381 = vmatpush1.msra.mxu0 0.0
      %382 = vmatprep.subr.mxu0 0.0
      %383 = vmatpush1.msra.mxu0 0.0
      %384 = vmatprep.subr.mxu0 0.0
      %385 = vmatpush1.msra.mxu0 0.0
      %386 = vmatprep.subr.mxu0 0.0
      %387 = vmatpush1.msra.mxu0 0.0
      %388 = vmatprep.subr.mxu0 0.0
      %389 = vmatpush1.msra.mxu0 0.0
      %390 = vmatprep.subr.mxu0 0.0
      %391 = vmatpush1.msra.mxu0 0.0
      %392 = vmatprep.subr.mxu0 0.0
      %393 = vmatpush1.msra.mxu0 0.0
      %394 = vmatprep.subr.mxu0 0.0
      %395 = vmatpush1.msra.mxu0 0.0
      %396 = vmatprep.subr.mxu0 0.0
      %397 = vmatpush1.msra.mxu0 0.0
      %398 = vmatprep.subr.mxu0 0.0
      %399 = vmatpush1.msra.mxu0 0.0
      %400 = vmatprep.subr.mxu0 0.0
      %401 = vmatpush1.msra.mxu0 0.0
      %402 = vmatprep.subr.mxu0 0.0
      %403 = vmatpush1.msra.mxu0 0.0
      %404 = vmatprep.mubr.f32.mxu0 0.0
      %405 = vmatmul.mubr.f32.gmra.mrb[0].mxu0 %v320
      %v406 = vpop.f32.mrb[0].mxu0
      %v407 = vadd.f32 0.0, %v406
      %v408 = vpop.f32.mrb[0].mxu0
      %409 = vmatprep.mubr.f32.mxu0 0.0
      %410 = vmatmul.mubr.f32.gmra.mrb[0].mxu0 %v322
      %v411 = vpop.f32.mrb[0].mxu0
      %v412 = vadd.f32 0.0, %v411
      %v413 = vpop.f32.mrb[0].mxu0
      %414 = vmatprep.mubr.f32.mxu0 0.0
      %415 = vmatmul.mubr.f32.gmra.mrb[0].mxu0 %v324
      %v416 = vpop.f32.mrb[0].mxu0
      %v417 = vadd.f32 0.0, %v416
      %v418 = vpop.f32.mrb[0].mxu0
      %419 = vmatprep.mubr.f32.mxu0 0.0
      %420 = vmatmul.mubr.f32.gmra.mrb[0].mxu0 %v326
      %v421 = vpop.f32.mrb[0].mxu0
      %v422 = vadd.f32 0.0, %v421
      %v423 = vpop.f32.mrb[0].mxu0
      %424 = vmatprep.mubr.f32.mxu0 0.0
      %425 = vmatmul.mubr.f32.gmra.mrb[0].mxu0 %v328
      %v426 = vpop.f32.mrb[0].mxu0
      %v427 = vadd.f32 0.0, %v426
      %v428 = vpop.f32.mrb[0].mxu0
      %429 = vmatprep.mubr.f32.mxu0 0.0
      %430 = vmatmul.mubr.f32.gmra.mrb[0].mxu0 %v330
      %v431 = vpop.f32.mrb[0].mxu0
      %v432 = vadd.f32 0.0, %v431
      %v433 = vpop.f32.mrb[0].mxu0
      %434 = vmatprep.mubr.f32.mxu0 0.0
      %435 = vmatmul.mubr.f32.gmra.mrb[0].mxu0 %v332
      %v436 = vpop.f32.mrb[0].mxu0
      %v437 = vadd.f32 0.0, %v436
      %v438 = vpop.f32.mrb[0].mxu0
      %439 = vmatprep.mubr.f32.mxu0 0.0
      %440 = vmatmul.mubr.f32.gmra.mrb[0].mxu0 %v334
      %v441 = vpop.f32.mrb[0].mxu0
      %v442 = vadd.f32 0.0, %v441
      %v443 = vpop.f32.mrb[0].mxu0
      %444 = vdwg.mxu0
      %v445 = vsel %vm319, %v252, 0
      %v447 = vsel %vm319, %v254, 0
      %v449 = vsel %vm319, %v256, 0
      %v451 = vsel %vm319, %v258, 0
      %v453 = vsel %vm319, %v260, 0
      %v455 = vsel %vm319, %v262, 0
      %v457 = vsel %vm319, %v264, 0
      %v459 = vsel %vm319, %v266, 0
      %v462 = vsel %vm336, %v271, 0
      %464 = vmatprep.subr.mxu0 0.0
      %465 = vmatpush1.msra.mxu0 %v270
      %466 = vmatprep.subr.mxu0 0.0
      %467 = vmatpush1.msra.mxu0 %v462
      %468 = vmatprep.subr.mxu0 0.0
      %469 = vmatpush1.msra.mxu0 0.0
      %470 = vmatprep.subr.mxu0 0.0
      %471 = vmatpush1.msra.mxu0 0.0
      %472 = vmatprep.subr.mxu0 0.0
      %473 = vmatpush1.msra.mxu0 0.0
      %474 = vmatprep.subr.mxu0 0.0
      %475 = vmatpush1.msra.mxu0 0.0
      %476 = vmatprep.subr.mxu0 0.0
      %477 = vmatpush1.msra.mxu0 0.0
      %478 = vmatprep.subr.mxu0 0.0
      %479 = vmatpush1.msra.mxu0 0.0
      %480 = vmatprep.subr.mxu0 0.0
      %481 = vmatpush1.msra.mxu0 0.0
      %482 = vmatprep.subr.mxu0 0.0
      %483 = vmatpush1.msra.mxu0 0.0
      %484 = vmatprep.subr.mxu0 0.0
      %485 = vmatpush1.msra.mxu0 0.0
      %486 = vmatprep.subr.mxu0 0.0
      %487 = vmatpush1.msra.mxu0 0.0
      %488 = vmatprep.subr.mxu0 0.0
      %489 = vmatpush1.msra.mxu0 0.0
      %490 = vmatprep.subr.mxu0 0.0
      %491 = vmatpush1.msra.mxu0 0.0
      %492 = vmatprep.subr.mxu0 0.0
      %493 = vmatpush1.msra.mxu0 0.0
      %494 = vmatprep.subr.mxu0 0.0
      %495 = vmatpush1.msra.mxu0 0.0
      %496 = vmatprep.subr.mxu0 0.0
      %497 = vmatpush1.msra.mxu0 0.0
      %498 = vmatprep.subr.mxu0 0.0
      %499 = vmatpush1.msra.mxu0 0.0
      %500 = vmatprep.subr.mxu0 0.0
      %501 = vmatpush1.msra.mxu0 0.0
      %502 = vmatprep.subr.mxu0 0.0
      %503 = vmatpush1.msra.mxu0 0.0
      %504 = vmatprep.subr.mxu0 0.0
      %505 = vmatpush1.msra.mxu0 0.0
      %506 = vmatprep.subr.mxu0 0.0
      %507 = vmatpush1.msra.mxu0 0.0
      %508 = vmatprep.subr.mxu0 0.0
      %509 = vmatpush1.msra.mxu0 0.0
      %510 = vmatprep.subr.mxu0 0.0
      %511 = vmatpush1.msra.mxu0 0.0
      %512 = vmatprep.subr.mxu0 0.0
      %513 = vmatpush1.msra.mxu0 0.0
      %514 = vmatprep.subr.mxu0 0.0
      %515 = vmatpush1.msra.mxu0 0.0
      %516 = vmatprep.subr.mxu0 0.0
      %517 = vmatpush1.msra.mxu0 0.0
      %518 = vmatprep.subr.mxu0 0.0
      %519 = vmatpush1.msra.mxu0 0.0
      %520 = vmatprep.subr.mxu0 0.0
      %521 = vmatpush1.msra.mxu0 0.0
      %522 = vmatprep.subr.mxu0 0.0
      %523 = vmatpush1.msra.mxu0 0.0
      %524 = vmatprep.subr.mxu0 0.0
      %525 = vmatpush1.msra.mxu0 0.0
      %526 = vmatprep.subr.mxu0 0.0
      %527 = vmatpush1.msra.mxu0 0.0
      %528 = vmatprep.mubr.f32.mxu0 0.0
      %529 = vmatmul.mubr.f32.gmra.mrb[0].mxu0 %v445
      %v530 = vpop.f32.mrb[0].mxu0
      %v531 = vadd.f32 %v407, %v530
      %v532 = vpop.f32.mrb[0].mxu0
      %533 = vmatprep.mubr.f32.mxu0 0.0
      %534 = vmatmul.mubr.f32.gmra.mrb[0].mxu0 %v447
      %v535 = vpop.f32.mrb[0].mxu0
      %v536 = vadd.f32 %v412, %v535
      %v537 = vpop.f32.mrb[0].mxu0
      %538 = vmatprep.mubr.f32.mxu0 0.0
      %539 = vmatmul.mubr.f32.gmra.mrb[0].mxu0 %v449
      %v540 = vpop.f32.mrb[0].mxu0
      %v541 = vadd.f32 %v417, %v540
      %v542 = vpop.f32.mrb[0].mxu0
      %543 = vmatprep.mubr.f32.mxu0 0.0
      %544 = vmatmul.mubr.f32.gmra.mrb[0].mxu0 %v451
      %v545 = vpop.f32.mrb[0].mxu0
      %v546 = vadd.f32 %v422, %v545
      %v547 = vpop.f32.mrb[0].mxu0
      %548 = vmatprep.mubr.f32.mxu0 0.0
      %549 = vmatmul.mubr.f32.gmra.mrb[0].mxu0 %v453
      %v550 = vpop.f32.mrb[0].mxu0
      %v551 = vadd.f32 %v427, %v550
      %v552 = vpop.f32.mrb[0].mxu0
      %553 = vmatprep.mubr.f32.mxu0 0.0
      %554 = vmatmul.mubr.f32.gmra.mrb[0].mxu0 %v455
      %v555 = vpop.f32.mrb[0].mxu0
      %v556 = vadd.f32 %v432, %v555
      %v557 = vpop.f32.mrb[0].mxu0
      %558 = vmatprep.mubr.f32.mxu0 0.0
      %559 = vmatmul.mubr.f32.gmra.mrb[0].mxu0 %v457
      %v560 = vpop.f32.mrb[0].mxu0
      %v561 = vadd.f32 %v437, %v560
      %v562 = vpop.f32.mrb[0].mxu0
      %563 = vmatprep.mubr.f32.mxu0 0.0
      %564 = vmatmul.mubr.f32.gmra.mrb[0].mxu0 %v459
      %v565 = vpop.f32.mrb[0].mxu0
      %v566 = vadd.f32 %v442, %v565
      %v567 = vpop.f32.mrb[0].mxu0
      %568 = vdwg.mxu0
      %v570 = vsel %vm319, %v268, 0
      %v573 = vsel %vm336, %v275, 0
      %575 = vmatprep.subr.mxu0 0.0
      %576 = vmatpush1.msra.mxu0 %v274
      %577 = vmatprep.subr.mxu0 0.0
      %578 = vmatpush1.msra.mxu0 %v573
      %579 = vmatprep.subr.mxu0 0.0
      %580 = vmatpush1.msra.mxu0 0.0
      %581 = vmatprep.subr.mxu0 0.0
      %582 = vmatpush1.msra.mxu0 0.0
      %583 = vmatprep.subr.mxu0 0.0
      %584 = vmatpush1.msra.mxu0 0.0
      %585 = vmatprep.subr.mxu0 0.0
      %586 = vmatpush1.msra.mxu0 0.0
      %587 = vmatprep.subr.mxu0 0.0
      %588 = vmatpush1.msra.mxu0 0.0
      %589 = vmatprep.subr.mxu0 0.0
      %590 = vmatpush1.msra.mxu0 0.0
      %591 = vmatprep.subr.mxu0 0.0
      %592 = vmatpush1.msra.mxu0 0.0
      %593 = vmatprep.subr.mxu0 0.0
      %594 = vmatpush1.msra.mxu0 0.0
      %595 = vmatprep.subr.mxu0 0.0
      %596 = vmatpush1.msra.mxu0 0.0
      %597 = vmatprep.subr.mxu0 0.0
      %598 = vmatpush1.msra.mxu0 0.0
      %599 = vmatprep.subr.mxu0 0.0
      %600 = vmatpush1.msra.mxu0 0.0
      %601 = vmatprep.subr.mxu0 0.0
      %602 = vmatpush1.msra.mxu0 0.0
      %603 = vmatprep.subr.mxu0 0.0
      %604 = vmatpush1.msra.mxu0 0.0
      %605 = vmatprep.subr.mxu0 0.0
      %606 = vmatpush1.msra.mxu0 0.0
      %607 = vmatprep.subr.mxu0 0.0
      %608 = vmatpush1.msra.mxu0 0.0
      %609 = vmatprep.subr.mxu0 0.0
      %610 = vmatpush1.msra.mxu0 0.0
      %611 = vmatprep.subr.mxu0 0.0
      %612 = vmatpush1.msra.mxu0 0.0
      %613 = vmatprep.subr.mxu0 0.0
      %614 = vmatpush1.msra.mxu0 0.0
      %615 = vmatprep.subr.mxu0 0.0
      %616 = vmatpush1.msra.mxu0 0.0
      %617 = vmatprep.subr.mxu0 0.0
      %618 = vmatpush1.msra.mxu0 0.0
      %619 = vmatprep.subr.mxu0 0.0
      %620 = vmatpush1.msra.mxu0 0.0
      %621 = vmatprep.subr.mxu0 0.0
      %622 = vmatpush1.msra.mxu0 0.0
      %623 = vmatprep.subr.mxu0 0.0
      %624 = vmatpush1.msra.mxu0 0.0
      %625 = vmatprep.subr.mxu0 0.0
      %626 = vmatpush1.msra.mxu0 0.0
      %627 = vmatprep.subr.mxu0 0.0
      %628 = vmatpush1.msra.mxu0 0.0
      %629 = vmatprep.subr.mxu0 0.0
      %630 = vmatpush1.msra.mxu0 0.0
      %631 = vmatprep.subr.mxu0 0.0
      %632 = vmatpush1.msra.mxu0 0.0
      %633 = vmatprep.subr.mxu0 0.0
      %634 = vmatpush1.msra.mxu0 0.0
      %635 = vmatprep.subr.mxu0 0.0
      %636 = vmatpush1.msra.mxu0 0.0
      %637 = vmatprep.subr.mxu0 0.0
      %638 = vmatpush1.msra.mxu0 0.0
      %639 = vmatprep.mubr.f32.mxu0 0.0
      %640 = vmatmul.mubr.f32.gmra.mrb[0].mxu0 %v447
      %v641 = vpop.f32.mrb[0].mxu0
      %v642 = vadd.f32 0.0, %v641
      %v643 = vpop.f32.mrb[0].mxu0
      %644 = vmatprep.mubr.f32.mxu0 0.0
      %645 = vmatmul.mubr.f32.gmra.mrb[0].mxu0 %v449
      %v646 = vpop.f32.mrb[0].mxu0
      %v647 = vadd.f32 0.0, %v646
      %v648 = vpop.f32.mrb[0].mxu0
      %649 = vmatprep.mubr.f32.mxu0 0.0
      %650 = vmatmul.mubr.f32.gmra.mrb[0].mxu0 %v451
      %v651 = vpop.f32.mrb[0].mxu0
      %v652 = vadd.f32 0.0, %v651
      %v653 = vpop.f32.mrb[0].mxu0
      %654 = vmatprep.mubr.f32.mxu0 0.0
      %655 = vmatmul.mubr.f32.gmra.mrb[0].mxu0 %v453
      %v656 = vpop.f32.mrb[0].mxu0
      %v657 = vadd.f32 0.0, %v656
      %v658 = vpop.f32.mrb[0].mxu0
      %659 = vmatprep.mubr.f32.mxu0 0.0
      %660 = vmatmul.mubr.f32.gmra.mrb[0].mxu0 %v455
      %v661 = vpop.f32.mrb[0].mxu0
      %v662 = vadd.f32 0.0, %v661
      %v663 = vpop.f32.mrb[0].mxu0
      %664 = vmatprep.mubr.f32.mxu0 0.0
      %665 = vmatmul.mubr.f32.gmra.mrb[0].mxu0 %v457
      %v666 = vpop.f32.mrb[0].mxu0
      %v667 = vadd.f32 0.0, %v666
      %v668 = vpop.f32.mrb[0].mxu0
      %669 = vmatprep.mubr.f32.mxu0 0.0
      %670 = vmatmul.mubr.f32.gmra.mrb[0].mxu0 %v459
      %v671 = vpop.f32.mrb[0].mxu0
      %v672 = vadd.f32 0.0, %v671
      %v673 = vpop.f32.mrb[0].mxu0
      %674 = vmatprep.mubr.f32.mxu0 0.0
      %675 = vmatmul.mubr.f32.gmra.mrb[0].mxu0 %v570
      %v676 = vpop.f32.mrb[0].mxu0
      %v677 = vadd.f32 0.0, %v676
      %v678 = vpop.f32.mrb[0].mxu0
      %679 = vdwg.mxu0
      %v680 = vadd.f32 %v531, %v642
      %v681 = vadd.f32 %v536, %v647
      %v682 = vadd.f32 %v541, %v652
      %v683 = vadd.f32 %v546, %v657
      %v684 = vadd.f32 %v551, %v662
      %v685 = vadd.f32 %v556, %v667
      %v686 = vadd.f32 %v561, %v672
      %v687 = vadd.f32 %v566, %v677
      %v689 = vrot.slane %v268, 1
      %v690 = vrot.slane %v269, 1
      %v691 = vsel %vm294, %v689, %v690
      %v692 = vsel %vm319, %v691, 0
      %v695 = vsel %vm336, %v277, 0
      %697 = vmatprep.subr.mxu0 0.0
      %698 = vmatpush1.msra.mxu0 %v276
      %699 = vmatprep.subr.mxu0 0.0
      %700 = vmatpush1.msra.mxu0 %v695
      %701 = vmatprep.subr.mxu0 0.0
      %702 = vmatpush1.msra.mxu0 0.0
      %703 = vmatprep.subr.mxu0 0.0
      %704 = vmatpush1.msra.mxu0 0.0
      %705 = vmatprep.subr.mxu0 0.0
      %706 = vmatpush1.msra.mxu0 0.0
      %707 = vmatprep.subr.mxu0 0.0
      %708 = vmatpush1.msra.mxu0 0.0
      %709 = vmatprep.subr.mxu0 0.0
      %710 = vmatpush1.msra.mxu0 0.0
      %711 = vmatprep.subr.mxu0 0.0
      %712 = vmatpush1.msra.mxu0 0.0
      %713 = vmatprep.subr.mxu0 0.0
      %714 = vmatpush1.msra.mxu0 0.0
      %715 = vmatprep.subr.mxu0 0.0
      %716 = vmatpush1.msra.mxu0 0.0
      %717 = vmatprep.subr.mxu0 0.0
      %718 = vmatpush1.msra.mxu0 0.0
      %719 = vmatprep.subr.mxu0 0.0
      %720 = vmatpush1.msra.mxu0 0.0
      %721 = vmatprep.subr.mxu0 0.0
      %722 = vmatpush1.msra.mxu0 0.0
      %723 = vmatprep.subr.mxu0 0.0
      %724 = vmatpush1.msra.mxu0 0.0
      %725 = vmatprep.subr.mxu0 0.0
      %726 = vmatpush1.msra.mxu0 0.0
      %727 = vmatprep.subr.mxu0 0.0
      %728 = vmatpush1.msra.mxu0 0.0
      %729 = vmatprep.subr.mxu0 0.0
      %730 = vmatpush1.msra.mxu0 0.0
      %731 = vmatprep.subr.mxu0 0.0
      %732 = vmatpush1.msra.mxu0 0.0
      %733 = vmatprep.subr.mxu0 0.0
      %734 = vmatpush1.msra.mxu0 0.0
      %735 = vmatprep.subr.mxu0 0.0
      %736 = vmatpush1.msra.mxu0 0.0
      %737 = vmatprep.subr.mxu0 0.0
      %738 = vmatpush1.msra.mxu0 0.0
      %739 = vmatprep.subr.mxu0 0.0
      %740 = vmatpush1.msra.mxu0 0.0
      %741 = vmatprep.subr.mxu0 0.0
      %742 = vmatpush1.msra.mxu0 0.0
      %743 = vmatprep.subr.mxu0 0.0
      %744 = vmatpush1.msra.mxu0 0.0
      %745 = vmatprep.subr.mxu0 0.0
      %746 = vmatpush1.msra.mxu0 0.0
      %747 = vmatprep.subr.mxu0 0.0
      %748 = vmatpush1.msra.mxu0 0.0
      %749 = vmatprep.subr.mxu0 0.0
      %750 = vmatpush1.msra.mxu0 0.0
      %751 = vmatprep.subr.mxu0 0.0
      %752 = vmatpush1.msra.mxu0 0.0
      %753 = vmatprep.subr.mxu0 0.0
      %754 = vmatpush1.msra.mxu0 0.0
      %755 = vmatprep.subr.mxu0 0.0
      %756 = vmatpush1.msra.mxu0 0.0
      %757 = vmatprep.subr.mxu0 0.0
      %758 = vmatpush1.msra.mxu0 0.0
      %759 = vmatprep.subr.mxu0 0.0
      %760 = vmatpush1.msra.mxu0 0.0
      %761 = vmatprep.mubr.f32.mxu0 0.0
      %762 = vmatmul.mubr.f32.gmra.mrb[0].mxu0 %v322
      %v763 = vpop.f32.mrb[0].mxu0
      %v764 = vadd.f32 0.0, %v763
      %v765 = vpop.f32.mrb[0].mxu0
      %766 = vmatprep.mubr.f32.mxu0 0.0
      %767 = vmatmul.mubr.f32.gmra.mrb[0].mxu0 %v324
      %v768 = vpop.f32.mrb[0].mxu0
      %v769 = vadd.f32 0.0, %v768
      %v770 = vpop.f32.mrb[0].mxu0
      %771 = vmatprep.mubr.f32.mxu0 0.0
      %772 = vmatmul.mubr.f32.gmra.mrb[0].mxu0 %v326
      %v773 = vpop.f32.mrb[0].mxu0
      %v774 = vadd.f32 0.0, %v773
      %v775 = vpop.f32.mrb[0].mxu0
      %776 = vmatprep.mubr.f32.mxu0 0.0
      %777 = vmatmul.mubr.f32.gmra.mrb[0].mxu0 %v328
      %v778 = vpop.f32.mrb[0].mxu0
      %v779 = vadd.f32 0.0, %v778
      %v780 = vpop.f32.mrb[0].mxu0
      %781 = vmatprep.mubr.f32.mxu0 0.0
      %782 = vmatmul.mubr.f32.gmra.mrb[0].mxu0 %v330
      %v783 = vpop.f32.mrb[0].mxu0
      %v784 = vadd.f32 0.0, %v783
      %v785 = vpop.f32.mrb[0].mxu0
      %786 = vmatprep.mubr.f32.mxu0 0.0
      %787 = vmatmul.mubr.f32.gmra.mrb[0].mxu0 %v332
      %v788 = vpop.f32.mrb[0].mxu0
      %v789 = vadd.f32 0.0, %v788
      %v790 = vpop.f32.mrb[0].mxu0
      %791 = vmatprep.mubr.f32.mxu0 0.0
      %792 = vmatmul.mubr.f32.gmra.mrb[0].mxu0 %v334
      %v793 = vpop.f32.mrb[0].mxu0
      %v794 = vadd.f32 0.0, %v793
      %v795 = vpop.f32.mrb[0].mxu0
      %796 = vmatprep.mubr.f32.mxu0 0.0
      %797 = vmatmul.mubr.f32.gmra.mrb[0].mxu0 %v692
      %v798 = vpop.f32.mrb[0].mxu0
      %v799 = vadd.f32 0.0, %v798
      %v800 = vpop.f32.mrb[0].mxu0
      %801 = vdwg.mxu0
      %v802 = vadd.f32 %v680, %v764
      %v803 = vadd.f32 %v681, %v769
      %v804 = vadd.f32 %v682, %v774
      %v805 = vadd.f32 %v683, %v779
      %v806 = vadd.f32 %v684, %v784
      %v807 = vadd.f32 %v685, %v789
      %v808 = vadd.f32 %v686, %v794
      %v809 = vadd.f32 %v687, %v799
      %v810 = vld [vmem:[%s2] sm:$0x1]
      %v812 = vlaneseq
      %v813 = vshrl.u32 %v812, 7
      %v814 = vsub.s32 0, %v813
      %v815 = vrot.slane %v810, %v814
      %v817 = vadd.f32 %v802, %v815
      %v818 = vadd.f32 %v803, %v815
      %v819 = vadd.f32 %v804, %v815
      %v820 = vadd.f32 %v805, %v815
      %v821 = vadd.f32 %v806, %v815
      %v822 = vadd.f32 %v807, %v815
      %v823 = vadd.f32 %v808, %v815
      %v824 = vadd.f32 %v809, %v815
      %vm825 = vcmp.gt.f32.partialorder %v817, 20.0
      %vm826 = vcmp.gt.f32.partialorder %v818, 20.0
      %vm827 = vcmp.gt.f32.partialorder %v819, 20.0
      %vm828 = vcmp.gt.f32.partialorder %v820, 20.0
      %vm829 = vcmp.gt.f32.partialorder %v821, 20.0
      %vm830 = vcmp.gt.f32.partialorder %v822, 20.0
      %vm831 = vcmp.gt.f32.partialorder %v823, 20.0
      %vm832 = vcmp.gt.f32.partialorder %v824, 20.0
      %v833 = vmin.f32 %v817, 20.0
      %v834 = vmin.f32 %v818, 20.0
      %v835 = vmin.f32 %v819, 20.0
      %v836 = vmin.f32 %v820, 20.0
      %v837 = vmin.f32 %v821, 20.0
      %v838 = vmin.f32 %v822, 20.0
      %v839 = vmin.f32 %v823, 20.0
      %v840 = vmin.f32 %v824, 20.0
      %v841 = vmul.f32 %v833, 1.442695
      %v842 = vpow.pop %v841
      %v843 = vmul.f32 %v834, 1.442695
      %v844 = vpow.pop %v843
      %v845 = vmul.f32 %v835, 1.442695
      %v846 = vpow.pop %v845
      %v847 = vmul.f32 %v836, 1.442695
      %v848 = vpow.pop %v847
      %v849 = vmul.f32 %v837, 1.442695
      %v850 = vpow.pop %v849
      %v851 = vmul.f32 %v838, 1.442695
      %v852 = vpow.pop %v851
      %v853 = vmul.f32 %v839, 1.442695
      %v854 = vpow.pop %v853
      %v855 = vmul.f32 %v840, 1.442695
      %v856 = vpow.pop %v855
      %v857 = vadd.f32 %v842, 1.0
      %v858 = vlog2.pop %v857
      %v859 = vmul.f32 %v858, 0.6931472
      %v860 = vmul.f32 -0.5, %v842
      %v861 = vadd.f32 %v860, 1.0
      %v862 = vmul.f32 %v861, %v842
      %v863 = vand.u32 2147483647, %v842
      %vm864 = vcmp.lt.f32.partialorder %v863, 0.0004427343
      %v865 = vsel %vm864, %v862, %v859
      %v866 = vadd.f32 %v844, 1.0
      %v867 = vlog2.pop %v866
      %v868 = vmul.f32 %v867, 0.6931472
      %v869 = vmul.f32 -0.5, %v844
      %v870 = vadd.f32 %v869, 1.0
      %v871 = vmul.f32 %v870, %v844
      %v872 = vand.u32 2147483647, %v844
      %vm873 = vcmp.lt.f32.partialorder %v872, 0.0004427343
      %v874 = vsel %vm873, %v871, %v868
      %v875 = vadd.f32 %v846, 1.0
      %v876 = vlog2.pop %v875
      %v877 = vmul.f32 %v876, 0.6931472
      %v878 = vmul.f32 -0.5, %v846
      %v879 = vadd.f32 %v878, 1.0
      %v880 = vmul.f32 %v879, %v846
      %v881 = vand.u32 2147483647, %v846
      %vm882 = vcmp.lt.f32.partialorder %v881, 0.0004427343
      %v883 = vsel %vm882, %v880, %v877
      %v884 = vadd.f32 %v848, 1.0
      %v885 = vlog2.pop %v884
      %v886 = vmul.f32 %v885, 0.6931472
      %v887 = vmul.f32 -0.5, %v848
      %v888 = vadd.f32 %v887, 1.0
      %v889 = vmul.f32 %v888, %v848
      %v890 = vand.u32 2147483647, %v848
      %vm891 = vcmp.lt.f32.partialorder %v890, 0.0004427343
      %v892 = vsel %vm891, %v889, %v886
      %v893 = vadd.f32 %v850, 1.0
      %v894 = vlog2.pop %v893
      %v895 = vmul.f32 %v894, 0.6931472
      %v896 = vmul.f32 -0.5, %v850
      %v897 = vadd.f32 %v896, 1.0
      %v898 = vmul.f32 %v897, %v850
      %v899 = vand.u32 2147483647, %v850
      %vm900 = vcmp.lt.f32.partialorder %v899, 0.0004427343
      %v901 = vsel %vm900, %v898, %v895
      %v902 = vadd.f32 %v852, 1.0
      %v903 = vlog2.pop %v902
      %v904 = vmul.f32 %v903, 0.6931472
      %v905 = vmul.f32 -0.5, %v852
      %v906 = vadd.f32 %v905, 1.0
      %v907 = vmul.f32 %v906, %v852
      %v908 = vand.u32 2147483647, %v852
      %vm909 = vcmp.lt.f32.partialorder %v908, 0.0004427343
      %v910 = vsel %vm909, %v907, %v904
      %v911 = vadd.f32 %v854, 1.0
      %v912 = vlog2.pop %v911
      %v913 = vmul.f32 %v912, 0.6931472
      %v914 = vmul.f32 -0.5, %v854
      %v915 = vadd.f32 %v914, 1.0
      %v916 = vmul.f32 %v915, %v854
      %v917 = vand.u32 2147483647, %v854
      %vm918 = vcmp.lt.f32.partialorder %v917, 0.0004427343
      %v919 = vsel %vm918, %v916, %v913
      %v920 = vadd.f32 %v856, 1.0
      %v921 = vlog2.pop %v920
      %v922 = vmul.f32 %v921, 0.6931472
      %v923 = vmul.f32 -0.5, %v856
      %v924 = vadd.f32 %v923, 1.0
      %v925 = vmul.f32 %v924, %v856
      %v926 = vand.u32 2147483647, %v856
      %vm927 = vcmp.lt.f32.partialorder %v926, 0.0004427343
      %v928 = vsel %vm927, %v925, %v922
      %v929 = vsel %vm825, %v817, %v865
      %v930 = vsel %vm826, %v818, %v874
      %v931 = vsel %vm827, %v819, %v883
      %v932 = vsel %vm828, %v820, %v892
      %v933 = vsel %vm829, %v821, %v901
      %v934 = vsel %vm830, %v822, %v910
      %v935 = vsel %vm831, %v823, %v919
      %v936 = vsel %vm832, %v824, %v928
      %v937 = vtanh.pop %v929
      %v938 = vtanh.pop %v930
      %v939 = vtanh.pop %v931
      %v940 = vtanh.pop %v932
      %v941 = vtanh.pop %v933
      %v942 = vtanh.pop %v934
      %v943 = vtanh.pop %v935
      %v944 = vtanh.pop %v936
      %v945 = vmul.f32 %v817, %v937
      %v946 = vmul.f32 %v818, %v938
      %v947 = vmul.f32 %v819, %v939
      %v948 = vmul.f32 %v820, %v940
      %v949 = vmul.f32 %v821, %v941
      %v950 = vmul.f32 %v822, %v942
      %v951 = vmul.f32 %v823, %v943
      %v952 = vmul.f32 %v824, %v944
      %vm953 = vcmask 261120
      %954 = vst.msk [vmem:[#allocation2] sm:$0xff] %vm953, 0.0
      %955 = vst.msk [vmem:[#allocation2 + $0x8] sm:$0xff] %vm953, 0.0
      %956 = vst.msk [vmem:[#allocation2 + $0x10] sm:$0xff] %vm953, 0.0
      %vm957 = vcmask 254976
      %958 = vst.msk [vmem:[#allocation2 + $0x18] sm:$0x3] %vm957, 0.0
      %959 = vst.msk [vmem:[#allocation2 + $0x20] sm:$0xff] %vm953, 0.0
      %960 = vst.msk [vmem:[#allocation2 + $0x28] sm:$0xff] %vm953, 0.0
      %961 = vst.msk [vmem:[#allocation2 + $0x30] sm:$0xff] %vm953, 0.0
      %962 = vst.msk [vmem:[#allocation2 + $0x38] sm:$0x3] %vm957, 0.0
      %963 = vst.msk [vmem:[#allocation2 + $0x40] sm:$0xff] %vm953, 0.0
      %964 = vst.msk [vmem:[#allocation2 + $0x48] sm:$0xff] %vm953, 0.0
      %965 = vst.msk [vmem:[#allocation2 + $0x50] sm:$0xff] %vm953, 0.0
      %966 = vst.msk [vmem:[#allocation2 + $0x58] sm:$0x3] %vm957, 0.0
      %967 = vst.msk [vmem:[#allocation2 + $0x60] sm:$0xff] %vm953, 0.0
      %968 = vst.msk [vmem:[#allocation2 + $0x68] sm:$0xff] %vm953, 0.0
      %969 = vst.msk [vmem:[#allocation2 + $0x70] sm:$0xff] %vm953, 0.0
      %970 = vst.msk [vmem:[#allocation2 + $0x78] sm:$0x3] %vm957, 0.0
      %971 = vst.msk [vmem:[#allocation2 + $0x80] sm:$0xff] %vm953, 0.0
      %972 = vst.msk [vmem:[#allocation2 + $0x88] sm:$0xff] %vm953, 0.0
      %973 = vst.msk [vmem:[#allocation2 + $0x90] sm:$0xff] %vm953, 0.0
      %974 = vst.msk [vmem:[#allocation2 + $0x98] sm:$0x3] %vm957, 0.0
      %975 = vst.msk [vmem:[#allocation2 + $0xa0] sm:$0xff] %vm953, 0.0
      %976 = vst.msk [vmem:[#allocation2 + $0xa8] sm:$0xff] %vm953, 0.0
      %977 = vst.msk [vmem:[#allocation2 + $0xb0] sm:$0xff] %vm953, 0.0
      %978 = vst.msk [vmem:[#allocation2 + $0xb8] sm:$0x3] %vm957, 0.0
      %979 = vst.msk [vmem:[#allocation2 + $0xc0] sm:$0xff] %vm953, 0.0
      %980 = vst.msk [vmem:[#allocation2 + $0xc8] sm:$0xff] %vm953, 0.0
      %981 = vst.msk [vmem:[#allocation2 + $0xd0] sm:$0xff] %vm953, 0.0
      %982 = vst.msk [vmem:[#allocation2 + $0xd8] sm:$0x3] %vm957, 0.0
      %983 = vst.msk [vmem:[#allocation2 + $0xe0] sm:$0xff] %vm953, 0.0
      %984 = vst.msk [vmem:[#allocation2 + $0xe8] sm:$0xff] %vm953, 0.0
      %985 = vst.msk [vmem:[#allocation2 + $0xf0] sm:$0xff] %vm953, 0.0
      %986 = vst.msk [vmem:[#allocation2 + $0xf8] sm:$0x3] %vm957, 0.0
      %987 = vst.msk [vmem:[#allocation2 + $0x100] sm:$0xff] %vm953, 0.0
      %988 = vst.msk [vmem:[#allocation2 + $0x108] sm:$0xff] %vm953, 0.0
      %989 = vst.msk [vmem:[#allocation2 + $0x110] sm:$0xff] %vm953, 0.0
      %990 = vst.msk [vmem:[#allocation2 + $0x118] sm:$0x3] %vm957, 0.0
      %991 = vst.msk [vmem:[#allocation2 + $0x120] sm:$0xff] %vm953, 0.0
      %992 = vst.msk [vmem:[#allocation2 + $0x128] sm:$0xff] %vm953, 0.0
      %993 = vst.msk [vmem:[#allocation2 + $0x130] sm:$0xff] %vm953, 0.0
      %994 = vst.msk [vmem:[#allocation2 + $0x138] sm:$0x3] %vm957, 0.0
      %995 = vst.msk [vmem:[#allocation2 + $0x140] sm:$0xff] %vm953, 0.0
      %996 = vst.msk [vmem:[#allocation2 + $0x148] sm:$0xff] %vm953, 0.0
      %997 = vst.msk [vmem:[#allocation2 + $0x150] sm:$0xff] %vm953, 0.0
      %998 = vst.msk [vmem:[#allocation2 + $0x158] sm:$0x3] %vm957, 0.0
      %999 = vst.msk [vmem:[#allocation2 + $0x160] sm:$0xff] %vm953, 0.0
      %1000 = vst.msk [vmem:[#allocation2 + $0x168] sm:$0xff] %vm953, 0.0
      %1001 = vst.msk [vmem:[#allocation2 + $0x170] sm:$0xff] %vm953, 0.0
      %1002 = vst.msk [vmem:[#allocation2 + $0x178] sm:$0x3] %vm957, 0.0
      %1003 = vst.msk [vmem:[#allocation2 + $0x180] sm:$0xff] %vm953, 0.0
      %1004 = vst.msk [vmem:[#allocation2 + $0x188] sm:$0xff] %vm953, 0.0
      %1005 = vst.msk [vmem:[#allocation2 + $0x190] sm:$0xff] %vm953, 0.0
      %1006 = vst.msk [vmem:[#allocation2 + $0x198] sm:$0x3] %vm957, 0.0
      %1007 = vst.msk [vmem:[#allocation2 + $0x1a0] sm:$0xff] %vm953, 0.0
      %1008 = vst.msk [vmem:[#allocation2 + $0x1a8] sm:$0xff] %vm953, 0.0
      %1009 = vst.msk [vmem:[#allocation2 + $0x1b0] sm:$0xff] %vm953, 0.0
      %1010 = vst.msk [vmem:[#allocation2 + $0x1b8] sm:$0x3] %vm957, 0.0
      %1011 = vst.msk [vmem:[#allocation2 + $0x1c0] sm:$0xff] %vm953, 0.0
      %1012 = vst.msk [vmem:[#allocation2 + $0x1c8] sm:$0xff] %vm953, 0.0
      %1013 = vst.msk [vmem:[#allocation2 + $0x1d0] sm:$0xff] %vm953, 0.0
      %1014 = vst.msk [vmem:[#allocation2 + $0x1d8] sm:$0x3] %vm957, 0.0
      %1015 = vst.msk [vmem:[#allocation2 + $0x1e0] sm:$0xff] %vm953, 0.0
      %1016 = vst.msk [vmem:[#allocation2 + $0x1e8] sm:$0xff] %vm953, 0.0
      %1017 = vst.msk [vmem:[#allocation2 + $0x1f0] sm:$0xff] %vm953, 0.0
      %1018 = vst.msk [vmem:[#allocation2 + $0x1f8] sm:$0x3] %vm957, 0.0
      %1019 = vst.msk [vmem:[#allocation2 + $0x200] sm:$0xff] %vm953, 0.0
      %1020 = vst.msk [vmem:[#allocation2 + $0x208] sm:$0xff] %vm953, 0.0
      %1021 = vst.msk [vmem:[#allocation2 + $0x210] sm:$0xff] %vm953, 0.0
      %1022 = vst.msk [vmem:[#allocation2 + $0x218] sm:$0x3] %vm957, 0.0
      %1023 = vst.msk [vmem:[#allocation2 + $0x220] sm:$0xff] %vm953, 0.0
      %1024 = vst.msk [vmem:[#allocation2 + $0x228] sm:$0xff] %vm953, 0.0
      %1025 = vst.msk [vmem:[#allocation2 + $0x230] sm:$0xff] %vm953, 0.0
      %1026 = vst.msk [vmem:[#allocation2 + $0x238] sm:$0x3] %vm957, 0.0
      %1027 = vst.msk [vmem:[#allocation2 + $0x240] sm:$0xff] %vm953, 0.0
      %1028 = vst.msk [vmem:[#allocation2 + $0x248] sm:$0xff] %vm953, 0.0
      %1029 = vst.msk [vmem:[#allocation2 + $0x250] sm:$0xff] %vm953, 0.0
      %1030 = vst.msk [vmem:[#allocation2 + $0x258] sm:$0x3] %vm957, 0.0
      %1031 = vst.msk [vmem:[#allocation2 + $0x260] sm:$0xff] %vm953, 0.0
      %1032 = vst.msk [vmem:[#allocation2 + $0x268] sm:$0xff] %vm953, 0.0
      %1033 = vst.msk [vmem:[#allocation2 + $0x270] sm:$0xff] %vm953, 0.0
      %1034 = vst.msk [vmem:[#allocation2 + $0x278] sm:$0x3] %vm957, 0.0
      %1035 = vst.msk [vmem:[#allocation2 + $0x280] sm:$0xff] %vm953, 0.0
      %1036 = vst.msk [vmem:[#allocation2 + $0x288] sm:$0xff] %vm953, 0.0
      %1037 = vst.msk [vmem:[#allocation2 + $0x290] sm:$0xff] %vm953, 0.0
      %1038 = vst.msk [vmem:[#allocation2 + $0x298] sm:$0x3] %vm957, 0.0
      %1039 = vst.msk [vmem:[#allocation2 + $0x2a0] sm:$0xff] %vm953, 0.0
      %1040 = vst.msk [vmem:[#allocation2 + $0x2a8] sm:$0xff] %vm953, 0.0
      %1041 = vst.msk [vmem:[#allocation2 + $0x2b0] sm:$0xff] %vm953, 0.0
      %1042 = vst.msk [vmem:[#allocation2 + $0x2b8] sm:$0x3] %vm957, 0.0
      %1043 = vst.msk [vmem:[#allocation2 + $0x2c0] sm:$0xff] %vm953, 0.0
      %1044 = vst.msk [vmem:[#allocation2 + $0x2c8] sm:$0xff] %vm953, 0.0
      %1045 = vst.msk [vmem:[#allocation2 + $0x2d0] sm:$0xff] %vm953, 0.0
      %1046 = vst.msk [vmem:[#allocation2 + $0x2d8] sm:$0x3] %vm957, 0.0
      %1047 = vst.msk [vmem:[#allocation2 + $0x2e0] sm:$0xff] %vm953, 0.0
      %1048 = vst.msk [vmem:[#allocation2 + $0x2e8] sm:$0xff] %vm953, 0.0
      %1049 = vst.msk [vmem:[#allocation2 + $0x2f0] sm:$0xff] %vm953, 0.0
      %1050 = vst.msk [vmem:[#allocation2 + $0x2f8] sm:$0x3] %vm957, 0.0
      %1051 = vst.msk [vmem:[#allocation2 + $0x300] sm:$0xff] %vm953, 0.0
      %1052 = vst.msk [vmem:[#allocation2 + $0x308] sm:$0xff] %vm953, 0.0
      %1053 = vst.msk [vmem:[#allocation2 + $0x310] sm:$0xff] %vm953, 0.0
      %1054 = vst.msk [vmem:[#allocation2 + $0x318] sm:$0x3] %vm957, 0.0
      %1055 = vst.msk [vmem:[#allocation2 + $0x320] sm:$0xff] %vm953, 0.0
      %1056 = vst.msk [vmem:[#allocation2 + $0x328] sm:$0xff] %vm953, 0.0
      %1057 = vst.msk [vmem:[#allocation2 + $0x330] sm:$0xff] %vm953, 0.0
      %1058 = vst.msk [vmem:[#allocation2 + $0x338] sm:$0x3] %vm957, 0.0
      %s1059 = scalar_lea.vmem [#allocation2], 288
      %1060 = vst.msk [vmem:[%s1059 + $0x9] sm:$0xff] %vm953, %v945
      %1061 = vst.msk [vmem:[%s1059 + $0x29] sm:$0xff] %vm953, %v946
      %1062 = vst.msk [vmem:[%s1059 + $0x49] sm:$0xff] %vm953, %v947
      %1063 = vst.msk [vmem:[%s1059 + $0x69] sm:$0xff] %vm953, %v948
      %1064 = vst.msk [vmem:[%s1059 + $0x89] sm:$0xff] %vm953, %v949
      %1065 = vst.msk [vmem:[%s1059 + $0xa9] sm:$0xff] %vm953, %v950
      %1066 = vst.msk [vmem:[%s1059 + $0xc9] sm:$0xff] %vm953, %v951
      %1067 = vst.msk [vmem:[%s1059 + $0xe9] sm:$0xff] %vm953, %v952
      %v1068 = vld [vmem:[%s3] sm:$0x1]
      %v1069 = vld [vmem:[%s3 + $0x1] sm:$0x1]
      %v1070 = vld [vmem:[%s3 + $0x2] sm:$0x1]
      %v1071 = vld [vmem:[%s3 + $0x3] sm:$0x1]
      %v1072 = vld [vmem:[%s3 + $0x4] sm:$0x1]
      %v1073 = vld [vmem:[%s3 + $0x5] sm:$0x1]
      %v1074 = vld [vmem:[%s3 + $0x6] sm:$0x1]
      %v1075 = vld [vmem:[%s3 + $0x7] sm:$0x1]
      %v1076 = vld [vmem:[%s3 + $0x8] sm:$0x1]
      %v1077 = vld [vmem:[#allocation2] sm:$0xff]
      %v1078 = vld [vmem:[#allocation2 + $0x8] sm:$0xff]
      %v1079 = vld [vmem:[#allocation2 + $0x10] sm:$0xff]
      %v1080 = vld [vmem:[#allocation2 + $0x20] sm:$0xff]
      %v1081 = vld [vmem:[#allocation2 + $0x28] sm:$0xff]
      %v1082 = vld [vmem:[#allocation2 + $0x30] sm:$0xff]
      %v1083 = vld [vmem:[#allocation2 + $0x40] sm:$0xff]
      %v1084 = vld [vmem:[#allocation2 + $0x48] sm:$0xff]
      %v1085 = vld [vmem:[#allocation2 + $0x50] sm:$0xff]
      %v1086 = vld [vmem:[#allocation2 + $0x60] sm:$0xff]
      %v1087 = vld [vmem:[#allocation2 + $0x68] sm:$0xff]
      %v1088 = vld [vmem:[#allocation2 + $0x70] sm:$0xff]
      %v1089 = vld [vmem:[#allocation2 + $0x80] sm:$0xff]
      %v1090 = vld [vmem:[#allocation2 + $0x88] sm:$0xff]
      %v1091 = vld [vmem:[#allocation2 + $0x90] sm:$0xff]
      %v1092 = vld [vmem:[#allocation2 + $0xa0] sm:$0xff]
      %v1093 = vld [vmem:[#allocation2 + $0xa8] sm:$0xff]
      %v1094 = vld [vmem:[#allocation2 + $0xb0] sm:$0xff]
      %v1095 = vld [vmem:[#allocation2 + $0xc0] sm:$0xff]
      %v1096 = vld [vmem:[#allocation2 + $0xc8] sm:$0xff]
      %v1097 = vld [vmem:[#allocation2 + $0xd0] sm:$0xff]
      %v1098 = vld [vmem:[#allocation2 + $0xe0] sm:$0xff]
      %v1099 = vld [vmem:[#allocation2 + $0xe8] sm:$0xff]
      %v1100 = vld [vmem:[#allocation2 + $0xf0] sm:$0xff]
      %v1101 = vld [vmem:[#allocation2 + $0x100] sm:$0xff]
      %v1102 = vld [vmem:[#allocation2 + $0x108] sm:$0xff]
      %v1103 = vld [vmem:[#allocation2 + $0x110] sm:$0xff]
      %v1104 = vld [vmem:[#allocation2 + $0x120] sm:$0xff]
      %v1105 = vld [vmem:[#allocation2 + $0x128] sm:$0xff]
      %v1106 = vld [vmem:[#allocation2 + $0x130] sm:$0xff]
      %v1107 = vld [vmem:[#allocation2 + $0x140] sm:$0xff]
      %v1108 = vld [vmem:[#allocation2 + $0x148] sm:$0xff]
      %v1109 = vld [vmem:[#allocation2 + $0x150] sm:$0xff]
      %v1110 = vld [vmem:[#allocation2 + $0x160] sm:$0xff]
      %v1111 = vld [vmem:[#allocation2 + $0x168] sm:$0xff]
      %v1112 = vld [vmem:[#allocation2 + $0x170] sm:$0xff]
      %v1113 = vld [vmem:[#allocation2 + $0x180] sm:$0xff]
      %v1114 = vld [vmem:[#allocation2 + $0x188] sm:$0xff]
      %v1115 = vld [vmem:[#allocation2 + $0x190] sm:$0xff]
      %v1116 = vld [vmem:[#allocation2 + $0x1a0] sm:$0xff]
      %v1117 = vld [vmem:[#allocation2 + $0x1a8] sm:$0xff]
      %v1118 = vld [vmem:[#allocation2 + $0x1b0] sm:$0xff]
      %v1119 = vld [vmem:[#allocation2 + $0x1c0] sm:$0xff]
      %v1120 = vld [vmem:[#allocation2 + $0x1c8] sm:$0xff]
      %v1121 = vld [vmem:[#allocation2 + $0x1d0] sm:$0xff]
      %v1122 = vld [vmem:[#allocation2 + $0x1e0] sm:$0xff]
      %v1123 = vld [vmem:[#allocation2 + $0x1e8] sm:$0xff]
      %v1124 = vld [vmem:[#allocation2 + $0x1f0] sm:$0xff]
      %v1125 = vld [vmem:[#allocation2 + $0x200] sm:$0xff]
      %v1126 = vld [vmem:[#allocation2 + $0x208] sm:$0xff]
      %v1127 = vld [vmem:[#allocation2 + $0x210] sm:$0xff]
      %v1128 = vld [vmem:[#allocation2 + $0x220] sm:$0xff]
      %v1129 = vld [vmem:[#allocation2 + $0x228] sm:$0xff]
      %v1130 = vld [vmem:[#allocation2 + $0x230] sm:$0xff]
      %v1131 = vld [vmem:[#allocation2 + $0x240] sm:$0xff]
      %v1132 = vld [vmem:[#allocation2 + $0x248] sm:$0xff]
      %v1133 = vld [vmem:[#allocation2 + $0x250] sm:$0xff]
      %v1134 = vld [vmem:[#allocation2 + $0x260] sm:$0xff]
      %v1135 = vld [vmem:[#allocation2 + $0x268] sm:$0xff]
      %v1136 = vld [vmem:[#allocation2 + $0x270] sm:$0xff]
      %v1137 = vld [vmem:[#allocation2 + $0x280] sm:$0xff]
      %v1138 = vld [vmem:[#allocation2 + $0x288] sm:$0xff]
      %v1139 = vld [vmem:[#allocation2 + $0x290] sm:$0xff]
      %v1140 = vld [vmem:[#allocation2 + $0x2a0] sm:$0xff]
      %v1141 = vld [vmem:[#allocation2 + $0x2a8] sm:$0xff]
      %v1142 = vld [vmem:[#allocation2 + $0x2b0] sm:$0xff]
      %v1143 = vld [vmem:[#allocation2 + $0x2c0] sm:$0xff]
      %v1144 = vld [vmem:[#allocation2 + $0x2c8] sm:$0xff]
      %v1145 = vld [vmem:[#allocation2 + $0x2d0] sm:$0xff]
      %v1146 = vld [vmem:[#allocation2 + $0x2e0] sm:$0xff]
      %v1147 = vld [vmem:[#allocation2 + $0x2e8] sm:$0xff]
      %v1148 = vld [vmem:[#allocation2 + $0x2f0] sm:$0xff]
      %v1150 = vlaneseq
      %v1151 = vshrl.u32 %v1150, 7
      %v1152 = vsub.s32 0, %v1151
      %v1153 = vrot.slane %v1068, %v1152
      %v1155 = vmul.f32 %v1077, %v1153
      %v1156 = vmul.f32 %v1078, %v1153
      %v1157 = vmul.f32 %v1079, %v1153
      %v1158 = vmul.f32 %v1080, %v1153
      %v1159 = vmul.f32 %v1081, %v1153
      %v1160 = vmul.f32 %v1082, %v1153
      %v1161 = vmul.f32 %v1083, %v1153
      %v1162 = vmul.f32 %v1084, %v1153
      %v1163 = vmul.f32 %v1085, %v1153
      %v1164 = vmul.f32 %v1086, %v1153
      %v1165 = vmul.f32 %v1087, %v1153
      %v1166 = vmul.f32 %v1088, %v1153
      %v1167 = vmul.f32 %v1089, %v1153
      %v1168 = vmul.f32 %v1090, %v1153
      %v1169 = vmul.f32 %v1091, %v1153
      %v1170 = vmul.f32 %v1092, %v1153
      %v1171 = vmul.f32 %v1093, %v1153
      %v1172 = vmul.f32 %v1094, %v1153
      %v1173 = vmul.f32 %v1095, %v1153
      %v1174 = vmul.f32 %v1096, %v1153
      %v1175 = vmul.f32 %v1097, %v1153
      %v1176 = vmul.f32 %v1098, %v1153
      %v1177 = vmul.f32 %v1099, %v1153
      %v1178 = vmul.f32 %v1100, %v1153
      %v1179 = vmul.f32 %v1101, %v1153
      %v1180 = vmul.f32 %v1102, %v1153
      %v1181 = vmul.f32 %v1103, %v1153
      %v1182 = vmul.f32 %v1104, %v1153
      %v1183 = vmul.f32 %v1105, %v1153
      %v1184 = vmul.f32 %v1106, %v1153
      %v1185 = vmul.f32 %v1107, %v1153
      %v1186 = vmul.f32 %v1108, %v1153
      %v1187 = vmul.f32 %v1109, %v1153
      %v1188 = vmul.f32 %v1110, %v1153
      %v1189 = vmul.f32 %v1111, %v1153
      %v1190 = vmul.f32 %v1112, %v1153
      %v1191 = vmul.f32 %v1113, %v1153
      %v1192 = vmul.f32 %v1114, %v1153
      %v1193 = vmul.f32 %v1115, %v1153
      %v1194 = vmul.f32 %v1116, %v1153
      %v1195 = vmul.f32 %v1117, %v1153
      %v1196 = vmul.f32 %v1118, %v1153
      %v1197 = vmul.f32 %v1119, %v1153
      %v1198 = vmul.f32 %v1120, %v1153
      %v1199 = vmul.f32 %v1121, %v1153
      %v1200 = vmul.f32 %v1122, %v1153
      %v1201 = vmul.f32 %v1123, %v1153
      %v1202 = vmul.f32 %v1124, %v1153
      %v1203 = vmul.f32 %v1125, %v1153
      %v1204 = vmul.f32 %v1126, %v1153
      %v1205 = vmul.f32 %v1127, %v1153
      %v1206 = vmul.f32 %v1128, %v1153
      %v1207 = vmul.f32 %v1129, %v1153
      %v1208 = vmul.f32 %v1130, %v1153
      %v1209 = vmul.f32 %v1131, %v1153
      %v1210 = vmul.f32 %v1132, %v1153
      %v1211 = vmul.f32 %v1133, %v1153
      %v1212 = vmul.f32 %v1134, %v1153
      %v1213 = vmul.f32 %v1135, %v1153
      %v1214 = vmul.f32 %v1136, %v1153
      %v1215 = vmul.f32 %v1137, %v1153
      %v1216 = vmul.f32 %v1138, %v1153
      %v1217 = vmul.f32 %v1139, %v1153
      %v1218 = vmul.f32 %v1140, %v1153
      %v1219 = vmul.f32 %v1141, %v1153
      %v1220 = vmul.f32 %v1142, %v1153
      %v1221 = vmul.f32 %v1143, %v1153
      %v1222 = vmul.f32 %v1144, %v1153
      %v1223 = vmul.f32 %v1145, %v1153
      %v1224 = vmul.f32 %v1146, %v1153
      %v1225 = vmul.f32 %v1147, %v1153
      %v1226 = vmul.f32 %v1148, %v1153
      %v1227 = vadd.f32 %v1155, 0.0
      %v1228 = vadd.f32 %v1156, 0.0
      %v1229 = vadd.f32 %v1157, 0.0
      %v1230 = vadd.f32 %v1158, 0.0
      %v1231 = vadd.f32 %v1159, 0.0
      %v1232 = vadd.f32 %v1160, 0.0
      %v1233 = vadd.f32 %v1161, 0.0
      %v1234 = vadd.f32 %v1162, 0.0
      %v1235 = vadd.f32 %v1163, 0.0
      %v1236 = vadd.f32 %v1164, 0.0
      %v1237 = vadd.f32 %v1165, 0.0
      %v1238 = vadd.f32 %v1166, 0.0
      %v1239 = vadd.f32 %v1167, 0.0
      %v1240 = vadd.f32 %v1168, 0.0
      %v1241 = vadd.f32 %v1169, 0.0
      %v1242 = vadd.f32 %v1170, 0.0
      %v1243 = vadd.f32 %v1171, 0.0
      %v1244 = vadd.f32 %v1172, 0.0
      %v1245 = vadd.f32 %v1173, 0.0
      %v1246 = vadd.f32 %v1174, 0.0
      %v1247 = vadd.f32 %v1175, 0.0
      %v1248 = vadd.f32 %v1176, 0.0
      %v1249 = vadd.f32 %v1177, 0.0
      %v1250 = vadd.f32 %v1178, 0.0
      %v1251 = vadd.f32 %v1179, 0.0
      %v1252 = vadd.f32 %v1180, 0.0
      %v1253 = vadd.f32 %v1181, 0.0
      %v1254 = vadd.f32 %v1182, 0.0
      %v1255 = vadd.f32 %v1183, 0.0
      %v1256 = vadd.f32 %v1184, 0.0
      %v1257 = vadd.f32 %v1185, 0.0
      %v1258 = vadd.f32 %v1186, 0.0
      %v1259 = vadd.f32 %v1187, 0.0
      %v1260 = vadd.f32 %v1188, 0.0
      %v1261 = vadd.f32 %v1189, 0.0
      %v1262 = vadd.f32 %v1190, 0.0
      %v1263 = vadd.f32 %v1191, 0.0
      %v1264 = vadd.f32 %v1192, 0.0
      %v1265 = vadd.f32 %v1193, 0.0
      %v1266 = vadd.f32 %v1194, 0.0
      %v1267 = vadd.f32 %v1195, 0.0
      %v1268 = vadd.f32 %v1196, 0.0
      %v1269 = vadd.f32 %v1197, 0.0
      %v1270 = vadd.f32 %v1198, 0.0
      %v1271 = vadd.f32 %v1199, 0.0
      %v1272 = vadd.f32 %v1200, 0.0
      %v1273 = vadd.f32 %v1201, 0.0
      %v1274 = vadd.f32 %v1202, 0.0
      %v1275 = vadd.f32 %v1203, 0.0
      %v1276 = vadd.f32 %v1204, 0.0
      %v1277 = vadd.f32 %v1205, 0.0
      %v1278 = vadd.f32 %v1206, 0.0
      %v1279 = vadd.f32 %v1207, 0.0
      %v1280 = vadd.f32 %v1208, 0.0
      %v1281 = vadd.f32 %v1209, 0.0
      %v1282 = vadd.f32 %v1210, 0.0
      %v1283 = vadd.f32 %v1211, 0.0
      %v1284 = vadd.f32 %v1212, 0.0
      %v1285 = vadd.f32 %v1213, 0.0
      %v1286 = vadd.f32 %v1214, 0.0
      %v1287 = vadd.f32 %v1215, 0.0
      %v1288 = vadd.f32 %v1216, 0.0
      %v1289 = vadd.f32 %v1217, 0.0
      %v1290 = vadd.f32 %v1218, 0.0
      %v1291 = vadd.f32 %v1219, 0.0
      %v1292 = vadd.f32 %v1220, 0.0
      %v1293 = vadd.f32 %v1221, 0.0
      %v1294 = vadd.f32 %v1222, 0.0
      %v1295 = vadd.f32 %v1223, 0.0
      %v1296 = vadd.f32 %v1224, 0.0
      %v1297 = vadd.f32 %v1225, 0.0
      %v1298 = vadd.f32 %v1226, 0.0
      %v1299 = vld [vmem:[#allocation2 + $0x1] sm:$0xff]
      %v1300 = vld [vmem:[#allocation2 + $0x9] sm:$0xff]
      %v1301 = vld [vmem:[#allocation2 + $0x11] sm:$0xff]
      %v1302 = vld [vmem:[#allocation2 + $0x21] sm:$0xff]
      %v1303 = vld [vmem:[#allocation2 + $0x29] sm:$0xff]
      %v1304 = vld [vmem:[#allocation2 + $0x31] sm:$0xff]
      %v1305 = vld [vmem:[#allocation2 + $0x41] sm:$0xff]
      %v1306 = vld [vmem:[#allocation2 + $0x49] sm:$0xff]
      %v1307 = vld [vmem:[#allocation2 + $0x51] sm:$0xff]
      %v1308 = vld [vmem:[#allocation2 + $0x61] sm:$0xff]
      %v1309 = vld [vmem:[#allocation2 + $0x69] sm:$0xff]
      %v1310 = vld [vmem:[#allocation2 + $0x71] sm:$0xff]
      %v1311 = vld [vmem:[#allocation2 + $0x81] sm:$0xff]
      %v1312 = vld [vmem:[#allocation2 + $0x89] sm:$0xff]
      %v1313 = vld [vmem:[#allocation2 + $0x91] sm:$0xff]
      %v1314 = vld [vmem:[#allocation2 + $0xa1] sm:$0xff]
      %v1315 = vld [vmem:[#allocation2 + $0xa9] sm:$0xff]
      %v1316 = vld [vmem:[#allocation2 + $0xb1] sm:$0xff]
      %v1317 = vld [vmem:[#allocation2 + $0xc1] sm:$0xff]
      %v1318 = vld [vmem:[#allocation2 + $0xc9] sm:$0xff]
      %v1319 = vld [vmem:[#allocation2 + $0xd1] sm:$0xff]
      %v1320 = vld [vmem:[#allocation2 + $0xe1] sm:$0xff]
      %v1321 = vld [vmem:[#allocation2 + $0xe9] sm:$0xff]
      %v1322 = vld [vmem:[#allocation2 + $0xf1] sm:$0xff]
      %v1323 = vld [vmem:[#allocation2 + $0x101] sm:$0xff]
      %v1324 = vld [vmem:[#allocation2 + $0x109] sm:$0xff]
      %v1325 = vld [vmem:[#allocation2 + $0x111] sm:$0xff]
      %v1326 = vld [vmem:[#allocation2 + $0x121] sm:$0xff]
      %v1327 = vld [vmem:[#allocation2 + $0x129] sm:$0xff]
      %v1328 = vld [vmem:[#allocation2 + $0x131] sm:$0xff]
      %v1329 = vld [vmem:[#allocation2 + $0x141] sm:$0xff]
      %v1330 = vld [vmem:[#allocation2 + $0x149] sm:$0xff]
      %v1331 = vld [vmem:[#allocation2 + $0x151] sm:$0xff]
      %v1332 = vld [vmem:[#allocation2 + $0x161] sm:$0xff]
      %v1333 = vld [vmem:[#allocation2 + $0x169] sm:$0xff]
      %v1334 = vld [vmem:[#allocation2 + $0x171] sm:$0xff]
      %v1335 = vld [vmem:[#allocation2 + $0x181] sm:$0xff]
      %v1336 = vld [vmem:[#allocation2 + $0x189] sm:$0xff]
      %v1337 = vld [vmem:[#allocation2 + $0x191] sm:$0xff]
      %v1338 = vld [vmem:[#allocation2 + $0x1a1] sm:$0xff]
      %v1339 = vld [vmem:[#allocation2 + $0x1a9] sm:$0xff]
      %v1340 = vld [vmem:[#allocation2 + $0x1b1] sm:$0xff]
      %v1341 = vld [vmem:[#allocation2 + $0x1c1] sm:$0xff]
      %v1342 = vld [vmem:[#allocation2 + $0x1c9] sm:$0xff]
      %v1343 = vld [vmem:[#allocation2 + $0x1d1] sm:$0xff]
      %v1344 = vld [vmem:[#allocation2 + $0x1e1] sm:$0xff]
      %v1345 = vld [vmem:[#allocation2 + $0x1e9] sm:$0xff]
      %v1346 = vld [vmem:[#allocation2 + $0x1f1] sm:$0xff]
      %v1347 = vld [vmem:[#allocation2 + $0x201] sm:$0xff]
      %v1348 = vld [vmem:[#allocation2 + $0x209] sm:$0xff]
      %v1349 = vld [vmem:[#allocation2 + $0x211] sm:$0xff]
      %v1350 = vld [vmem:[#allocation2 + $0x221] sm:$0xff]
      %v1351 = vld [vmem:[#allocation2 + $0x229] sm:$0xff]
      %v1352 = vld [vmem:[#allocation2 + $0x231] sm:$0xff]
      %v1353 = vld [vmem:[#allocation2 + $0x241] sm:$0xff]
      %v1354 = vld [vmem:[#allocation2 + $0x249] sm:$0xff]
      %v1355 = vld [vmem:[#allocation2 + $0x251] sm:$0xff]
      %v1356 = vld [vmem:[#allocation2 + $0x261] sm:$0xff]
      %v1357 = vld [vmem:[#allocation2 + $0x269] sm:$0xff]
      %v1358 = vld [vmem:[#allocation2 + $0x271] sm:$0xff]
      %v1359 = vld [vmem:[#allocation2 + $0x281] sm:$0xff]
      %v1360 = vld [vmem:[#allocation2 + $0x289] sm:$0xff]
      %v1361 = vld [vmem:[#allocation2 + $0x291] sm:$0xff]
      %v1362 = vld [vmem:[#allocation2 + $0x2a1] sm:$0xff]
      %v1363 = vld [vmem:[#allocation2 + $0x2a9] sm:$0xff]
      %v1364 = vld [vmem:[#allocation2 + $0x2b1] sm:$0xff]
      %v1365 = vld [vmem:[#allocation2 + $0x2c1] sm:$0xff]
      %v1366 = vld [vmem:[#allocation2 + $0x2c9] sm:$0xff]
      %v1367 = vld [vmem:[#allocation2 + $0x2d1] sm:$0xff]
      %v1368 = vld [vmem:[#allocation2 + $0x2e1] sm:$0xff]
      %v1369 = vld [vmem:[#allocation2 + $0x2e9] sm:$0xff]
      %v1370 = vld [vmem:[#allocation2 + $0x2f1] sm:$0xff]
      %v1372 = vlaneseq
      %v1373 = vshrl.u32 %v1372, 7
      %v1374 = vsub.s32 0, %v1373
      %v1375 = vrot.slane %v1069, %v1374
      %v1377 = vmul.f32 %v1299, %v1375
      %v1378 = vmul.f32 %v1300, %v1375
      %v1379 = vmul.f32 %v1301, %v1375
      %v1380 = vmul.f32 %v1302, %v1375
      %v1381 = vmul.f32 %v1303, %v1375
      %v1382 = vmul.f32 %v1304, %v1375
      %v1383 = vmul.f32 %v1305, %v1375
      %v1384 = vmul.f32 %v1306, %v1375
      %v1385 = vmul.f32 %v1307, %v1375
      %v1386 = vmul.f32 %v1308, %v1375
      %v1387 = vmul.f32 %v1309, %v1375
      %v1388 = vmul.f32 %v1310, %v1375
      %v1389 = vmul.f32 %v1311, %v1375
      %v1390 = vmul.f32 %v1312, %v1375
      %v1391 = vmul.f32 %v1313, %v1375
      %v1392 = vmul.f32 %v1314, %v1375
      %v1393 = vmul.f32 %v1315, %v1375
      %v1394 = vmul.f32 %v1316, %v1375
      %v1395 = vmul.f32 %v1317, %v1375
      %v1396 = vmul.f32 %v1318, %v1375
      %v1397 = vmul.f32 %v1319, %v1375
      %v1398 = vmul.f32 %v1320, %v1375
      %v1399 = vmul.f32 %v1321, %v1375
      %v1400 = vmul.f32 %v1322, %v1375
      %v1401 = vmul.f32 %v1323, %v1375
      %v1402 = vmul.f32 %v1324, %v1375
      %v1403 = vmul.f32 %v1325, %v1375
      %v1404 = vmul.f32 %v1326, %v1375
      %v1405 = vmul.f32 %v1327, %v1375
      %v1406 = vmul.f32 %v1328, %v1375
      %v1407 = vmul.f32 %v1329, %v1375
      %v1408 = vmul.f32 %v1330, %v1375
      %v1409 = vmul.f32 %v1331, %v1375
      %v1410 = vmul.f32 %v1332, %v1375
      %v1411 = vmul.f32 %v1333, %v1375
      %v1412 = vmul.f32 %v1334, %v1375
      %v1413 = vmul.f32 %v1335, %v1375
      %v1414 = vmul.f32 %v1336, %v1375
      %v1415 = vmul.f32 %v1337, %v1375
      %v1416 = vmul.f32 %v1338, %v1375
      %v1417 = vmul.f32 %v1339, %v1375
      %v1418 = vmul.f32 %v1340, %v1375
      %v1419 = vmul.f32 %v1341, %v1375
      %v1420 = vmul.f32 %v1342, %v1375
      %v1421 = vmul.f32 %v1343, %v1375
      %v1422 = vmul.f32 %v1344, %v1375
      %v1423 = vmul.f32 %v1345, %v1375
      %v1424 = vmul.f32 %v1346, %v1375
      %v1425 = vmul.f32 %v1347, %v1375
      %v1426 = vmul.f32 %v1348, %v1375
      %v1427 = vmul.f32 %v1349, %v1375
      %v1428 = vmul.f32 %v1350, %v1375
      %v1429 = vmul.f32 %v1351, %v1375
      %v1430 = vmul.f32 %v1352, %v1375
      %v1431 = vmul.f32 %v1353, %v1375
      %v1432 = vmul.f32 %v1354, %v1375
      %v1433 = vmul.f32 %v1355, %v1375
      %v1434 = vmul.f32 %v1356, %v1375
      %v1435 = vmul.f32 %v1357, %v1375
      %v1436 = vmul.f32 %v1358, %v1375
      %v1437 = vmul.f32 %v1359, %v1375
      %v1438 = vmul.f32 %v1360, %v1375
      %v1439 = vmul.f32 %v1361, %v1375
      %v1440 = vmul.f32 %v1362, %v1375
      %v1441 = vmul.f32 %v1363, %v1375
      %v1442 = vmul.f32 %v1364, %v1375
      %v1443 = vmul.f32 %v1365, %v1375
      %v1444 = vmul.f32 %v1366, %v1375
      %v1445 = vmul.f32 %v1367, %v1375
      %v1446 = vmul.f32 %v1368, %v1375
      %v1447 = vmul.f32 %v1369, %v1375
      %v1448 = vmul.f32 %v1370, %v1375
      %v1449 = vadd.f32 %v1227, %v1377
      %v1450 = vadd.f32 %v1228, %v1378
      %v1451 = vadd.f32 %v1229, %v1379
      %v1452 = vadd.f32 %v1230, %v1380
      %v1453 = vadd.f32 %v1231, %v1381
      %v1454 = vadd.f32 %v1232, %v1382
      %v1455 = vadd.f32 %v1233, %v1383
      %v1456 = vadd.f32 %v1234, %v1384
      %v1457 = vadd.f32 %v1235, %v1385
      %v1458 = vadd.f32 %v1236, %v1386
      %v1459 = vadd.f32 %v1237, %v1387
      %v1460 = vadd.f32 %v1238, %v1388
      %v1461 = vadd.f32 %v1239, %v1389
      %v1462 = vadd.f32 %v1240, %v1390
      %v1463 = vadd.f32 %v1241, %v1391
      %v1464 = vadd.f32 %v1242, %v1392
      %v1465 = vadd.f32 %v1243, %v1393
      %v1466 = vadd.f32 %v1244, %v1394
      %v1467 = vadd.f32 %v1245, %v1395
      %v1468 = vadd.f32 %v1246, %v1396
      %v1469 = vadd.f32 %v1247, %v1397
      %v1470 = vadd.f32 %v1248, %v1398
      %v1471 = vadd.f32 %v1249, %v1399
      %v1472 = vadd.f32 %v1250, %v1400
      %v1473 = vadd.f32 %v1251, %v1401
      %v1474 = vadd.f32 %v1252, %v1402
      %v1475 = vadd.f32 %v1253, %v1403
      %v1476 = vadd.f32 %v1254, %v1404
      %v1477 = vadd.f32 %v1255, %v1405
      %v1478 = vadd.f32 %v1256, %v1406
      %v1479 = vadd.f32 %v1257, %v1407
      %v1480 = vadd.f32 %v1258, %v1408
      %v1481 = vadd.f32 %v1259, %v1409
      %v1482 = vadd.f32 %v1260, %v1410
      %v1483 = vadd.f32 %v1261, %v1411
      %v1484 = vadd.f32 %v1262, %v1412
      %v1485 = vadd.f32 %v1263, %v1413
      %v1486 = vadd.f32 %v1264, %v1414
      %v1487 = vadd.f32 %v1265, %v1415
      %v1488 = vadd.f32 %v1266, %v1416
      %v1489 = vadd.f32 %v1267, %v1417
      %v1490 = vadd.f32 %v1268, %v1418
      %v1491 = vadd.f32 %v1269, %v1419
      %v1492 = vadd.f32 %v1270, %v1420
      %v1493 = vadd.f32 %v1271, %v1421
      %v1494 = vadd.f32 %v1272, %v1422
      %v1495 = vadd.f32 %v1273, %v1423
      %v1496 = vadd.f32 %v1274, %v1424
      %v1497 = vadd.f32 %v1275, %v1425
      %v1498 = vadd.f32 %v1276, %v1426
      %v1499 = vadd.f32 %v1277, %v1427
      %v1500 = vadd.f32 %v1278, %v1428
      %v1501 = vadd.f32 %v1279, %v1429
      %v1502 = vadd.f32 %v1280, %v1430
      %v1503 = vadd.f32 %v1281, %v1431
      %v1504 = vadd.f32 %v1282, %v1432
      %v1505 = vadd.f32 %v1283, %v1433
      %v1506 = vadd.f32 %v1284, %v1434
      %v1507 = vadd.f32 %v1285, %v1435
      %v1508 = vadd.f32 %v1286, %v1436
      %v1509 = vadd.f32 %v1287, %v1437
      %v1510 = vadd.f32 %v1288, %v1438
      %v1511 = vadd.f32 %v1289, %v1439
      %v1512 = vadd.f32 %v1290, %v1440
      %v1513 = vadd.f32 %v1291, %v1441
      %v1514 = vadd.f32 %v1292, %v1442
      %v1515 = vadd.f32 %v1293, %v1443
      %v1516 = vadd.f32 %v1294, %v1444
      %v1517 = vadd.f32 %v1295, %v1445
      %v1518 = vadd.f32 %v1296, %v1446
      %v1519 = vadd.f32 %v1297, %v1447
      %v1520 = vadd.f32 %v1298, %v1448
      %v1521 = vld [vmem:[#allocation2 + $0x2] sm:$0xff]
      %v1522 = vld [vmem:[#allocation2 + $0xa] sm:$0xff]
      %v1523 = vld [vmem:[#allocation2 + $0x12] sm:$0xff]
      %v1524 = vld [vmem:[#allocation2 + $0x22] sm:$0xff]
      %v1525 = vld [vmem:[#allocation2 + $0x2a] sm:$0xff]
      %v1526 = vld [vmem:[#allocation2 + $0x32] sm:$0xff]
      %v1527 = vld [vmem:[#allocation2 + $0x42] sm:$0xff]
      %v1528 = vld [vmem:[#allocation2 + $0x4a] sm:$0xff]
      %v1529 = vld [vmem:[#allocation2 + $0x52] sm:$0xff]
      %v1530 = vld [vmem:[#allocation2 + $0x62] sm:$0xff]
      %v1531 = vld [vmem:[#allocation2 + $0x6a] sm:$0xff]
      %v1532 = vld [vmem:[#allocation2 + $0x72] sm:$0xff]
      %v1533 = vld [vmem:[#allocation2 + $0x82] sm:$0xff]
      %v1534 = vld [vmem:[#allocation2 + $0x8a] sm:$0xff]
      %v1535 = vld [vmem:[#allocation2 + $0x92] sm:$0xff]
      %v1536 = vld [vmem:[#allocation2 + $0xa2] sm:$0xff]
      %v1537 = vld [vmem:[#allocation2 + $0xaa] sm:$0xff]
      %v1538 = vld [vmem:[#allocation2 + $0xb2] sm:$0xff]
      %v1539 = vld [vmem:[#allocation2 + $0xc2] sm:$0xff]
      %v1540 = vld [vmem:[#allocation2 + $0xca] sm:$0xff]
      %v1541 = vld [vmem:[#allocation2 + $0xd2] sm:$0xff]
      %v1542 = vld [vmem:[#allocation2 + $0xe2] sm:$0xff]
      %v1543 = vld [vmem:[#allocation2 + $0xea] sm:$0xff]
      %v1544 = vld [vmem:[#allocation2 + $0xf2] sm:$0xff]
      %v1545 = vld [vmem:[#allocation2 + $0x102] sm:$0xff]
      %v1546 = vld [vmem:[#allocation2 + $0x10a] sm:$0xff]
      %v1547 = vld [vmem:[#allocation2 + $0x112] sm:$0xff]
      %v1548 = vld [vmem:[#allocation2 + $0x122] sm:$0xff]
      %v1549 = vld [vmem:[#allocation2 + $0x12a] sm:$0xff]
      %v1550 = vld [vmem:[#allocation2 + $0x132] sm:$0xff]
      %v1551 = vld [vmem:[#allocation2 + $0x142] sm:$0xff]
      %v1552 = vld [vmem:[#allocation2 + $0x14a] sm:$0xff]
      %v1553 = vld [vmem:[#allocation2 + $0x152] sm:$0xff]
      %v1554 = vld [vmem:[#allocation2 + $0x162] sm:$0xff]
      %v1555 = vld [vmem:[#allocation2 + $0x16a] sm:$0xff]
      %v1556 = vld [vmem:[#allocation2 + $0x172] sm:$0xff]
      %v1557 = vld [vmem:[#allocation2 + $0x182] sm:$0xff]
      %v1558 = vld [vmem:[#allocation2 + $0x18a] sm:$0xff]
      %v1559 = vld [vmem:[#allocation2 + $0x192] sm:$0xff]
      %v1560 = vld [vmem:[#allocation2 + $0x1a2] sm:$0xff]
      %v1561 = vld [vmem:[#allocation2 + $0x1aa] sm:$0xff]
      %v1562 = vld [vmem:[#allocation2 + $0x1b2] sm:$0xff]
      %v1563 = vld [vmem:[#allocation2 + $0x1c2] sm:$0xff]
      %v1564 = vld [vmem:[#allocation2 + $0x1ca] sm:$0xff]
      %v1565 = vld [vmem:[#allocation2 + $0x1d2] sm:$0xff]
      %v1566 = vld [vmem:[#allocation2 + $0x1e2] sm:$0xff]
      %v1567 = vld [vmem:[#allocation2 + $0x1ea] sm:$0xff]
      %v1568 = vld [vmem:[#allocation2 + $0x1f2] sm:$0xff]
      %v1569 = vld [vmem:[#allocation2 + $0x202] sm:$0xff]
      %v1570 = vld [vmem:[#allocation2 + $0x20a] sm:$0xff]
      %v1571 = vld [vmem:[#allocation2 + $0x212] sm:$0xff]
      %v1572 = vld [vmem:[#allocation2 + $0x222] sm:$0xff]
      %v1573 = vld [vmem:[#allocation2 + $0x22a] sm:$0xff]
      %v1574 = vld [vmem:[#allocation2 + $0x232] sm:$0xff]
      %v1575 = vld [vmem:[#allocation2 + $0x242] sm:$0xff]
      %v1576 = vld [vmem:[#allocation2 + $0x24a] sm:$0xff]
      %v1577 = vld [vmem:[#allocation2 + $0x252] sm:$0xff]
      %v1578 = vld [vmem:[#allocation2 + $0x262] sm:$0xff]
      %v1579 = vld [vmem:[#allocation2 + $0x26a] sm:$0xff]
      %v1580 = vld [vmem:[#allocation2 + $0x272] sm:$0xff]
      %v1581 = vld [vmem:[#allocation2 + $0x282] sm:$0xff]
      %v1582 = vld [vmem:[#allocation2 + $0x28a] sm:$0xff]
      %v1583 = vld [vmem:[#allocation2 + $0x292] sm:$0xff]
      %v1584 = vld [vmem:[#allocation2 + $0x2a2] sm:$0xff]
      %v1585 = vld [vmem:[#allocation2 + $0x2aa] sm:$0xff]
      %v1586 = vld [vmem:[#allocation2 + $0x2b2] sm:$0xff]
      %v1587 = vld [vmem:[#allocation2 + $0x2c2] sm:$0xff]
      %v1588 = vld [vmem:[#allocation2 + $0x2ca] sm:$0xff]
      %v1589 = vld [vmem:[#allocation2 + $0x2d2] sm:$0xff]
      %v1590 = vld [vmem:[#allocation2 + $0x2e2] sm:$0xff]
      %v1591 = vld [vmem:[#allocation2 + $0x2ea] sm:$0xff]
      %v1592 = vld [vmem:[#allocation2 + $0x2f2] sm:$0xff]
      %v1594 = vlaneseq
      %v1595 = vshrl.u32 %v1594, 7
      %v1596 = vsub.s32 0, %v1595
      %v1597 = vrot.slane %v1070, %v1596
      %v1599 = vmul.f32 %v1521, %v1597
      %v1600 = vmul.f32 %v1522, %v1597
      %v1601 = vmul.f32 %v1523, %v1597
      %v1602 = vmul.f32 %v1524, %v1597
      %v1603 = vmul.f32 %v1525, %v1597
      %v1604 = vmul.f32 %v1526, %v1597
      %v1605 = vmul.f32 %v1527, %v1597
      %v1606 = vmul.f32 %v1528, %v1597
      %v1607 = vmul.f32 %v1529, %v1597
      %v1608 = vmul.f32 %v1530, %v1597
      %v1609 = vmul.f32 %v1531, %v1597
      %v1610 = vmul.f32 %v1532, %v1597
      %v1611 = vmul.f32 %v1533, %v1597
      %v1612 = vmul.f32 %v1534, %v1597
      %v1613 = vmul.f32 %v1535, %v1597
      %v1614 = vmul.f32 %v1536, %v1597
      %v1615 = vmul.f32 %v1537, %v1597
      %v1616 = vmul.f32 %v1538, %v1597
      %v1617 = vmul.f32 %v1539, %v1597
      %v1618 = vmul.f32 %v1540, %v1597
      %v1619 = vmul.f32 %v1541, %v1597
      %v1620 = vmul.f32 %v1542, %v1597
      %v1621 = vmul.f32 %v1543, %v1597
      %v1622 = vmul.f32 %v1544, %v1597
      %v1623 = vmul.f32 %v1545, %v1597
      %v1624 = vmul.f32 %v1546, %v1597
      %v1625 = vmul.f32 %v1547, %v1597
      %v1626 = vmul.f32 %v1548, %v1597
      %v1627 = vmul.f32 %v1549, %v1597
      %v1628 = vmul.f32 %v1550, %v1597
      %v1629 = vmul.f32 %v1551, %v1597
      %v1630 = vmul.f32 %v1552, %v1597
      %v1631 = vmul.f32 %v1553, %v1597
      %v1632 = vmul.f32 %v1554, %v1597
      %v1633 = vmul.f32 %v1555, %v1597
      %v1634 = vmul.f32 %v1556, %v1597
      %v1635 = vmul.f32 %v1557, %v1597
      %v1636 = vmul.f32 %v1558, %v1597
      %v1637 = vmul.f32 %v1559, %v1597
      %v1638 = vmul.f32 %v1560, %v1597
      %v1639 = vmul.f32 %v1561, %v1597
      %v1640 = vmul.f32 %v1562, %v1597
      %v1641 = vmul.f32 %v1563, %v1597
      %v1642 = vmul.f32 %v1564, %v1597
      %v1643 = vmul.f32 %v1565, %v1597
      %v1644 = vmul.f32 %v1566, %v1597
      %v1645 = vmul.f32 %v1567, %v1597
      %v1646 = vmul.f32 %v1568, %v1597
      %v1647 = vmul.f32 %v1569, %v1597
      %v1648 = vmul.f32 %v1570, %v1597
      %v1649 = vmul.f32 %v1571, %v1597
      %v1650 = vmul.f32 %v1572, %v1597
      %v1651 = vmul.f32 %v1573, %v1597
      %v1652 = vmul.f32 %v1574, %v1597
      %v1653 = vmul.f32 %v1575, %v1597
      %v1654 = vmul.f32 %v1576, %v1597
      %v1655 = vmul.f32 %v1577, %v1597
      %v1656 = vmul.f32 %v1578, %v1597
      %v1657 = vmul.f32 %v1579, %v1597
      %v1658 = vmul.f32 %v1580, %v1597
      %v1659 = vmul.f32 %v1581, %v1597
      %v1660 = vmul.f32 %v1582, %v1597
      %v1661 = vmul.f32 %v1583, %v1597
      %v1662 = vmul.f32 %v1584, %v1597
      %v1663 = vmul.f32 %v1585, %v1597
      %v1664 = vmul.f32 %v1586, %v1597
      %v1665 = vmul.f32 %v1587, %v1597
      %v1666 = vmul.f32 %v1588, %v1597
      %v1667 = vmul.f32 %v1589, %v1597
      %v1668 = vmul.f32 %v1590, %v1597
      %v1669 = vmul.f32 %v1591, %v1597
      %v1670 = vmul.f32 %v1592, %v1597
      %v1671 = vadd.f32 %v1449, %v1599
      %v1672 = vadd.f32 %v1450, %v1600
      %v1673 = vadd.f32 %v1451, %v1601
      %v1674 = vadd.f32 %v1452, %v1602
      %v1675 = vadd.f32 %v1453, %v1603
      %v1676 = vadd.f32 %v1454, %v1604
      %v1677 = vadd.f32 %v1455, %v1605
      %v1678 = vadd.f32 %v1456, %v1606
      %v1679 = vadd.f32 %v1457, %v1607
      %v1680 = vadd.f32 %v1458, %v1608
      %v1681 = vadd.f32 %v1459, %v1609
      %v1682 = vadd.f32 %v1460, %v1610
      %v1683 = vadd.f32 %v1461, %v1611
      %v1684 = vadd.f32 %v1462, %v1612
      %v1685 = vadd.f32 %v1463, %v1613
      %v1686 = vadd.f32 %v1464, %v1614
      %v1687 = vadd.f32 %v1465, %v1615
      %v1688 = vadd.f32 %v1466, %v1616
      %v1689 = vadd.f32 %v1467, %v1617
      %v1690 = vadd.f32 %v1468, %v1618
      %v1691 = vadd.f32 %v1469, %v1619
      %v1692 = vadd.f32 %v1470, %v1620
      %v1693 = vadd.f32 %v1471, %v1621
      %v1694 = vadd.f32 %v1472, %v1622
      %v1695 = vadd.f32 %v1473, %v1623
      %v1696 = vadd.f32 %v1474, %v1624
      %v1697 = vadd.f32 %v1475, %v1625
      %v1698 = vadd.f32 %v1476, %v1626
      %v1699 = vadd.f32 %v1477, %v1627
      %v1700 = vadd.f32 %v1478, %v1628
      %v1701 = vadd.f32 %v1479, %v1629
      %v1702 = vadd.f32 %v1480, %v1630
      %v1703 = vadd.f32 %v1481, %v1631
      %v1704 = vadd.f32 %v1482, %v1632
      %v1705 = vadd.f32 %v1483, %v1633
      %v1706 = vadd.f32 %v1484, %v1634
      %v1707 = vadd.f32 %v1485, %v1635
      %v1708 = vadd.f32 %v1486, %v1636
      %v1709 = vadd.f32 %v1487, %v1637
      %v1710 = vadd.f32 %v1488, %v1638
      %v1711 = vadd.f32 %v1489, %v1639
      %v1712 = vadd.f32 %v1490, %v1640
      %v1713 = vadd.f32 %v1491, %v1641
      %v1714 = vadd.f32 %v1492, %v1642
      %v1715 = vadd.f32 %v1493, %v1643
      %v1716 = vadd.f32 %v1494, %v1644
      %v1717 = vadd.f32 %v1495, %v1645
      %v1718 = vadd.f32 %v1496, %v1646
      %v1719 = vadd.f32 %v1497, %v1647
      %v1720 = vadd.f32 %v1498, %v1648
      %v1721 = vadd.f32 %v1499, %v1649
      %v1722 = vadd.f32 %v1500, %v1650
      %v1723 = vadd.f32 %v1501, %v1651
      %v1724 = vadd.f32 %v1502, %v1652
      %v1725 = vadd.f32 %v1503, %v1653
      %v1726 = vadd.f32 %v1504, %v1654
      %v1727 = vadd.f32 %v1505, %v1655
      %v1728 = vadd.f32 %v1506, %v1656
      %v1729 = vadd.f32 %v1507, %v1657
      %v1730 = vadd.f32 %v1508, %v1658
      %v1731 = vadd.f32 %v1509, %v1659
      %v1732 = vadd.f32 %v1510, %v1660
      %v1733 = vadd.f32 %v1511, %v1661
      %v1734 = vadd.f32 %v1512, %v1662
      %v1735 = vadd.f32 %v1513, %v1663
      %v1736 = vadd.f32 %v1514, %v1664
      %v1737 = vadd.f32 %v1515, %v1665
      %v1738 = vadd.f32 %v1516, %v1666
      %v1739 = vadd.f32 %v1517, %v1667
      %v1740 = vadd.f32 %v1518, %v1668
      %v1741 = vadd.f32 %v1519, %v1669
      %v1742 = vadd.f32 %v1520, %v1670
      %s1743 = scalar_lea.vmem [#allocation2], 32
      %v1744 = vld [vmem:[%s1743] sm:$0xff]
      %v1745 = vld [vmem:[%s1743 + $0x8] sm:$0xff]
      %v1746 = vld [vmem:[%s1743 + $0x10] sm:$0xff]
      %v1747 = vld [vmem:[%s1743 + $0x20] sm:$0xff]
      %v1748 = vld [vmem:[%s1743 + $0x28] sm:$0xff]
      %v1749 = vld [vmem:[%s1743 + $0x30] sm:$0xff]
      %v1750 = vld [vmem:[%s1743 + $0x40] sm:$0xff]
      %v1751 = vld [vmem:[%s1743 + $0x48] sm:$0xff]
      %v1752 = vld [vmem:[%s1743 + $0x50] sm:$0xff]
      %v1753 = vld [vmem:[%s1743 + $0x60] sm:$0xff]
      %v1754 = vld [vmem:[%s1743 + $0x68] sm:$0xff]
      %v1755 = vld [vmem:[%s1743 + $0x70] sm:$0xff]
      %v1756 = vld [vmem:[%s1743 + $0x80] sm:$0xff]
      %v1757 = vld [vmem:[%s1743 + $0x88] sm:$0xff]
      %v1758 = vld [vmem:[%s1743 + $0x90] sm:$0xff]
      %v1759 = vld [vmem:[%s1743 + $0xa0] sm:$0xff]
      %v1760 = vld [vmem:[%s1743 + $0xa8] sm:$0xff]
      %v1761 = vld [vmem:[%s1743 + $0xb0] sm:$0xff]
      %v1762 = vld [vmem:[%s1743 + $0xc0] sm:$0xff]
      %v1763 = vld [vmem:[%s1743 + $0xc8] sm:$0xff]
      %v1764 = vld [vmem:[%s1743 + $0xd0] sm:$0xff]
      %v1765 = vld [vmem:[%s1743 + $0xe0] sm:$0xff]
      %v1766 = vld [vmem:[%s1743 + $0xe8] sm:$0xff]
      %v1767 = vld [vmem:[%s1743 + $0xf0] sm:$0xff]
      %v1768 = vld [vmem:[%s1743 + $0x100] sm:$0xff]
      %v1769 = vld [vmem:[%s1743 + $0x108] sm:$0xff]
      %v1770 = vld [vmem:[%s1743 + $0x110] sm:$0xff]
      %v1771 = vld [vmem:[%s1743 + $0x120] sm:$0xff]
      %v1772 = vld [vmem:[%s1743 + $0x128] sm:$0xff]
      %v1773 = vld [vmem:[%s1743 + $0x130] sm:$0xff]
      %v1774 = vld [vmem:[%s1743 + $0x140] sm:$0xff]
      %v1775 = vld [vmem:[%s1743 + $0x148] sm:$0xff]
      %v1776 = vld [vmem:[%s1743 + $0x150] sm:$0xff]
      %v1777 = vld [vmem:[%s1743 + $0x160] sm:$0xff]
      %v1778 = vld [vmem:[%s1743 + $0x168] sm:$0xff]
      %v1779 = vld [vmem:[%s1743 + $0x170] sm:$0xff]
      %v1780 = vld [vmem:[%s1743 + $0x180] sm:$0xff]
      %v1781 = vld [vmem:[%s1743 + $0x188] sm:$0xff]
      %v1782 = vld [vmem:[%s1743 + $0x190] sm:$0xff]
      %v1783 = vld [vmem:[%s1743 + $0x1a0] sm:$0xff]
      %v1784 = vld [vmem:[%s1743 + $0x1a8] sm:$0xff]
      %v1785 = vld [vmem:[%s1743 + $0x1b0] sm:$0xff]
      %v1786 = vld [vmem:[%s1743 + $0x1c0] sm:$0xff]
      %v1787 = vld [vmem:[%s1743 + $0x1c8] sm:$0xff]
      %v1788 = vld [vmem:[%s1743 + $0x1d0] sm:$0xff]
      %v1789 = vld [vmem:[%s1743 + $0x1e0] sm:$0xff]
      %v1790 = vld [vmem:[%s1743 + $0x1e8] sm:$0xff]
      %v1791 = vld [vmem:[%s1743 + $0x1f0] sm:$0xff]
      %v1792 = vld [vmem:[%s1743 + $0x200] sm:$0xff]
      %v1793 = vld [vmem:[%s1743 + $0x208] sm:$0xff]
      %v1794 = vld [vmem:[%s1743 + $0x210] sm:$0xff]
      %v1795 = vld [vmem:[%s1743 + $0x220] sm:$0xff]
      %v1796 = vld [vmem:[%s1743 + $0x228] sm:$0xff]
      %v1797 = vld [vmem:[%s1743 + $0x230] sm:$0xff]
      %v1798 = vld [vmem:[%s1743 + $0x240] sm:$0xff]
      %v1799 = vld [vmem:[%s1743 + $0x248] sm:$0xff]
      %v1800 = vld [vmem:[%s1743 + $0x250] sm:$0xff]
      %v1801 = vld [vmem:[%s1743 + $0x260] sm:$0xff]
      %v1802 = vld [vmem:[%s1743 + $0x268] sm:$0xff]
      %v1803 = vld [vmem:[%s1743 + $0x270] sm:$0xff]
      %v1804 = vld [vmem:[%s1743 + $0x280] sm:$0xff]
      %v1805 = vld [vmem:[%s1743 + $0x288] sm:$0xff]
      %v1806 = vld [vmem:[%s1743 + $0x290] sm:$0xff]
      %v1807 = vld [vmem:[%s1743 + $0x2a0] sm:$0xff]
      %v1808 = vld [vmem:[%s1743 + $0x2a8] sm:$0xff]
      %v1809 = vld [vmem:[%s1743 + $0x2b0] sm:$0xff]
      %v1810 = vld [vmem:[%s1743 + $0x2c0] sm:$0xff]
      %v1811 = vld [vmem:[%s1743 + $0x2c8] sm:$0xff]
      %v1812 = vld [vmem:[%s1743 + $0x2d0] sm:$0xff]
      %v1813 = vld [vmem:[%s1743 + $0x2e0] sm:$0xff]
      %v1814 = vld [vmem:[%s1743 + $0x2e8] sm:$0xff]
      %v1815 = vld [vmem:[%s1743 + $0x2f0] sm:$0xff]
      %v1817 = vlaneseq
      %v1818 = vshrl.u32 %v1817, 7
      %v1819 = vsub.s32 0, %v1818
      %v1820 = vrot.slane %v1071, %v1819
      %v1822 = vmul.f32 %v1744, %v1820
      %v1823 = vmul.f32 %v1745, %v1820
      %v1824 = vmul.f32 %v1746, %v1820
      %v1825 = vmul.f32 %v1747, %v1820
      %v1826 = vmul.f32 %v1748, %v1820
      %v1827 = vmul.f32 %v1749, %v1820
      %v1828 = vmul.f32 %v1750, %v1820
      %v1829 = vmul.f32 %v1751, %v1820
      %v1830 = vmul.f32 %v1752, %v1820
      %v1831 = vmul.f32 %v1753, %v1820
      %v1832 = vmul.f32 %v1754, %v1820
      %v1833 = vmul.f32 %v1755, %v1820
      %v1834 = vmul.f32 %v1756, %v1820
      %v1835 = vmul.f32 %v1757, %v1820
      %v1836 = vmul.f32 %v1758, %v1820
      %v1837 = vmul.f32 %v1759, %v1820
      %v1838 = vmul.f32 %v1760, %v1820
      %v1839 = vmul.f32 %v1761, %v1820
      %v1840 = vmul.f32 %v1762, %v1820
      %v1841 = vmul.f32 %v1763, %v1820
      %v1842 = vmul.f32 %v1764, %v1820
      %v1843 = vmul.f32 %v1765, %v1820
      %v1844 = vmul.f32 %v1766, %v1820
      %v1845 = vmul.f32 %v1767, %v1820
      %v1846 = vmul.f32 %v1768, %v1820
      %v1847 = vmul.f32 %v1769, %v1820
      %v1848 = vmul.f32 %v1770, %v1820
      %v1849 = vmul.f32 %v1771, %v1820
      %v1850 = vmul.f32 %v1772, %v1820
      %v1851 = vmul.f32 %v1773, %v1820
      %v1852 = vmul.f32 %v1774, %v1820
      %v1853 = vmul.f32 %v1775, %v1820
      %v1854 = vmul.f32 %v1776, %v1820
      %v1855 = vmul.f32 %v1777, %v1820
      %v1856 = vmul.f32 %v1778, %v1820
      %v1857 = vmul.f32 %v1779, %v1820
      %v1858 = vmul.f32 %v1780, %v1820
      %v1859 = vmul.f32 %v1781, %v1820
      %v1860 = vmul.f32 %v1782, %v1820
      %v1861 = vmul.f32 %v1783, %v1820
      %v1862 = vmul.f32 %v1784, %v1820
      %v1863 = vmul.f32 %v1785, %v1820
      %v1864 = vmul.f32 %v1786, %v1820
      %v1865 = vmul.f32 %v1787, %v1820
      %v1866 = vmul.f32 %v1788, %v1820
      %v1867 = vmul.f32 %v1789, %v1820
      %v1868 = vmul.f32 %v1790, %v1820
      %v1869 = vmul.f32 %v1791, %v1820
      %v1870 = vmul.f32 %v1792, %v1820
      %v1871 = vmul.f32 %v1793, %v1820
      %v1872 = vmul.f32 %v1794, %v1820
      %v1873 = vmul.f32 %v1795, %v1820
      %v1874 = vmul.f32 %v1796, %v1820
      %v1875 = vmul.f32 %v1797, %v1820
      %v1876 = vmul.f32 %v1798, %v1820
      %v1877 = vmul.f32 %v1799, %v1820
      %v1878 = vmul.f32 %v1800, %v1820
      %v1879 = vmul.f32 %v1801, %v1820
      %v1880 = vmul.f32 %v1802, %v1820
      %v1881 = vmul.f32 %v1803, %v1820
      %v1882 = vmul.f32 %v1804, %v1820
      %v1883 = vmul.f32 %v1805, %v1820
      %v1884 = vmul.f32 %v1806, %v1820
      %v1885 = vmul.f32 %v1807, %v1820
      %v1886 = vmul.f32 %v1808, %v1820
      %v1887 = vmul.f32 %v1809, %v1820
      %v1888 = vmul.f32 %v1810, %v1820
      %v1889 = vmul.f32 %v1811, %v1820
      %v1890 = vmul.f32 %v1812, %v1820
      %v1891 = vmul.f32 %v1813, %v1820
      %v1892 = vmul.f32 %v1814, %v1820
      %v1893 = vmul.f32 %v1815, %v1820
      %v1894 = vadd.f32 %v1671, %v1822
      %v1895 = vadd.f32 %v1672, %v1823
      %v1896 = vadd.f32 %v1673, %v1824
      %v1897 = vadd.f32 %v1674, %v1825
      %v1898 = vadd.f32 %v1675, %v1826
      %v1899 = vadd.f32 %v1676, %v1827
      %v1900 = vadd.f32 %v1677, %v1828
      %v1901 = vadd.f32 %v1678, %v1829
      %v1902 = vadd.f32 %v1679, %v1830
      %v1903 = vadd.f32 %v1680, %v1831
      %v1904 = vadd.f32 %v1681, %v1832
      %v1905 = vadd.f32 %v1682, %v1833
      %v1906 = vadd.f32 %v1683, %v1834
      %v1907 = vadd.f32 %v1684, %v1835
      %v1908 = vadd.f32 %v1685, %v1836
      %v1909 = vadd.f32 %v1686, %v1837
      %v1910 = vadd.f32 %v1687, %v1838
      %v1911 = vadd.f32 %v1688, %v1839
      %v1912 = vadd.f32 %v1689, %v1840
      %v1913 = vadd.f32 %v1690, %v1841
      %v1914 = vadd.f32 %v1691, %v1842
      %v1915 = vadd.f32 %v1692, %v1843
      %v1916 = vadd.f32 %v1693, %v1844
      %v1917 = vadd.f32 %v1694, %v1845
      %v1918 = vadd.f32 %v1695, %v1846
      %v1919 = vadd.f32 %v1696, %v1847
      %v1920 = vadd.f32 %v1697, %v1848
      %v1921 = vadd.f32 %v1698, %v1849
      %v1922 = vadd.f32 %v1699, %v1850
      %v1923 = vadd.f32 %v1700, %v1851
      %v1924 = vadd.f32 %v1701, %v1852
      %v1925 = vadd.f32 %v1702, %v1853
      %v1926 = vadd.f32 %v1703, %v1854
      %v1927 = vadd.f32 %v1704, %v1855
      %v1928 = vadd.f32 %v1705, %v1856
      %v1929 = vadd.f32 %v1706, %v1857
      %v1930 = vadd.f32 %v1707, %v1858
      %v1931 = vadd.f32 %v1708, %v1859
      %v1932 = vadd.f32 %v1709, %v1860
      %v1933 = vadd.f32 %v1710, %v1861
      %v1934 = vadd.f32 %v1711, %v1862
      %v1935 = vadd.f32 %v1712, %v1863
      %v1936 = vadd.f32 %v1713, %v1864
      %v1937 = vadd.f32 %v1714, %v1865
      %v1938 = vadd.f32 %v1715, %v1866
      %v1939 = vadd.f32 %v1716, %v1867
      %v1940 = vadd.f32 %v1717, %v1868
      %v1941 = vadd.f32 %v1718, %v1869
      %v1942 = vadd.f32 %v1719, %v1870
      %v1943 = vadd.f32 %v1720, %v1871
      %v1944 = vadd.f32 %v1721, %v1872
      %v1945 = vadd.f32 %v1722, %v1873
      %v1946 = vadd.f32 %v1723, %v1874
      %v1947 = vadd.f32 %v1724, %v1875
      %v1948 = vadd.f32 %v1725, %v1876
      %v1949 = vadd.f32 %v1726, %v1877
      %v1950 = vadd.f32 %v1727, %v1878
      %v1951 = vadd.f32 %v1728, %v1879
      %v1952 = vadd.f32 %v1729, %v1880
      %v1953 = vadd.f32 %v1730, %v1881
      %v1954 = vadd.f32 %v1731, %v1882
      %v1955 = vadd.f32 %v1732, %v1883
      %v1956 = vadd.f32 %v1733, %v1884
      %v1957 = vadd.f32 %v1734, %v1885
      %v1958 = vadd.f32 %v1735, %v1886
      %v1959 = vadd.f32 %v1736, %v1887
      %v1960 = vadd.f32 %v1737, %v1888
      %v1961 = vadd.f32 %v1738, %v1889
      %v1962 = vadd.f32 %v1739, %v1890
      %v1963 = vadd.f32 %v1740, %v1891
      %v1964 = vadd.f32 %v1741, %v1892
      %v1965 = vadd.f32 %v1742, %v1893
      %v1966 = vld [vmem:[%s1743 + $0x1] sm:$0xff]
      %v1967 = vld [vmem:[%s1743 + $0x9] sm:$0xff]
      %v1968 = vld [vmem:[%s1743 + $0x11] sm:$0xff]
      %v1969 = vld [vmem:[%s1743 + $0x21] sm:$0xff]
      %v1970 = vld [vmem:[%s1743 + $0x29] sm:$0xff]
      %v1971 = vld [vmem:[%s1743 + $0x31] sm:$0xff]
      %v1972 = vld [vmem:[%s1743 + $0x41] sm:$0xff]
      %v1973 = vld [vmem:[%s1743 + $0x49] sm:$0xff]
      %v1974 = vld [vmem:[%s1743 + $0x51] sm:$0xff]
      %v1975 = vld [vmem:[%s1743 + $0x61] sm:$0xff]
      %v1976 = vld [vmem:[%s1743 + $0x69] sm:$0xff]
      %v1977 = vld [vmem:[%s1743 + $0x71] sm:$0xff]
      %v1978 = vld [vmem:[%s1743 + $0x81] sm:$0xff]
      %v1979 = vld [vmem:[%s1743 + $0x89] sm:$0xff]
      %v1980 = vld [vmem:[%s1743 + $0x91] sm:$0xff]
      %v1981 = vld [vmem:[%s1743 + $0xa1] sm:$0xff]
      %v1982 = vld [vmem:[%s1743 + $0xa9] sm:$0xff]
      %v1983 = vld [vmem:[%s1743 + $0xb1] sm:$0xff]
      %v1984 = vld [vmem:[%s1743 + $0xc1] sm:$0xff]
      %v1985 = vld [vmem:[%s1743 + $0xc9] sm:$0xff]
      %v1986 = vld [vmem:[%s1743 + $0xd1] sm:$0xff]
      %v1987 = vld [vmem:[%s1743 + $0xe1] sm:$0xff]
      %v1988 = vld [vmem:[%s1743 + $0xe9] sm:$0xff]
      %v1989 = vld [vmem:[%s1743 + $0xf1] sm:$0xff]
      %v1990 = vld [vmem:[%s1743 + $0x101] sm:$0xff]
      %v1991 = vld [vmem:[%s1743 + $0x109] sm:$0xff]
      %v1992 = vld [vmem:[%s1743 + $0x111] sm:$0xff]
      %v1993 = vld [vmem:[%s1743 + $0x121] sm:$0xff]
      %v1994 = vld [vmem:[%s1743 + $0x129] sm:$0xff]
      %v1995 = vld [vmem:[%s1743 + $0x131] sm:$0xff]
      %v1996 = vld [vmem:[%s1743 + $0x141] sm:$0xff]
      %v1997 = vld [vmem:[%s1743 + $0x149] sm:$0xff]
      %v1998 = vld [vmem:[%s1743 + $0x151] sm:$0xff]
      %v1999 = vld [vmem:[%s1743 + $0x161] sm:$0xff]
      %v2000 = vld [vmem:[%s1743 + $0x169] sm:$0xff]
      %v2001 = vld [vmem:[%s1743 + $0x171] sm:$0xff]
      %v2002 = vld [vmem:[%s1743 + $0x181] sm:$0xff]
      %v2003 = vld [vmem:[%s1743 + $0x189] sm:$0xff]
      %v2004 = vld [vmem:[%s1743 + $0x191] sm:$0xff]
      %v2005 = vld [vmem:[%s1743 + $0x1a1] sm:$0xff]
      %v2006 = vld [vmem:[%s1743 + $0x1a9] sm:$0xff]
      %v2007 = vld [vmem:[%s1743 + $0x1b1] sm:$0xff]
      %v2008 = vld [vmem:[%s1743 + $0x1c1] sm:$0xff]
      %v2009 = vld [vmem:[%s1743 + $0x1c9] sm:$0xff]
      %v2010 = vld [vmem:[%s1743 + $0x1d1] sm:$0xff]
      %v2011 = vld [vmem:[%s1743 + $0x1e1] sm:$0xff]
      %v2012 = vld [vmem:[%s1743 + $0x1e9] sm:$0xff]
      %v2013 = vld [vmem:[%s1743 + $0x1f1] sm:$0xff]
      %v2014 = vld [vmem:[%s1743 + $0x201] sm:$0xff]
      %v2015 = vld [vmem:[%s1743 + $0x209] sm:$0xff]
      %v2016 = vld [vmem:[%s1743 + $0x211] sm:$0xff]
      %v2017 = vld [vmem:[%s1743 + $0x221] sm:$0xff]
      %v2018 = vld [vmem:[%s1743 + $0x229] sm:$0xff]
      %v2019 = vld [vmem:[%s1743 + $0x231] sm:$0xff]
      %v2020 = vld [vmem:[%s1743 + $0x241] sm:$0xff]
      %v2021 = vld [vmem:[%s1743 + $0x249] sm:$0xff]
      %v2022 = vld [vmem:[%s1743 + $0x251] sm:$0xff]
      %v2023 = vld [vmem:[%s1743 + $0x261] sm:$0xff]
      %v2024 = vld [vmem:[%s1743 + $0x269] sm:$0xff]
      %v2025 = vld [vmem:[%s1743 + $0x271] sm:$0xff]
      %v2026 = vld [vmem:[%s1743 + $0x281] sm:$0xff]
      %v2027 = vld [vmem:[%s1743 + $0x289] sm:$0xff]
      %v2028 = vld [vmem:[%s1743 + $0x291] sm:$0xff]
      %v2029 = vld [vmem:[%s1743 + $0x2a1] sm:$0xff]
      %v2030 = vld [vmem:[%s1743 + $0x2a9] sm:$0xff]
      %v2031 = vld [vmem:[%s1743 + $0x2b1] sm:$0xff]
      %v2032 = vld [vmem:[%s1743 + $0x2c1] sm:$0xff]
      %v2033 = vld [vmem:[%s1743 + $0x2c9] sm:$0xff]
      %v2034 = vld [vmem:[%s1743 + $0x2d1] sm:$0xff]
      %v2035 = vld [vmem:[%s1743 + $0x2e1] sm:$0xff]
      %v2036 = vld [vmem:[%s1743 + $0x2e9] sm:$0xff]
      %v2037 = vld [vmem:[%s1743 + $0x2f1] sm:$0xff]
      %v2039 = vlaneseq
      %v2040 = vshrl.u32 %v2039, 7
      %v2041 = vsub.s32 0, %v2040
      %v2042 = vrot.slane %v1072, %v2041
      %v2044 = vmul.f32 %v1966, %v2042
      %v2045 = vmul.f32 %v1967, %v2042
      %v2046 = vmul.f32 %v1968, %v2042
      %v2047 = vmul.f32 %v1969, %v2042
      %v2048 = vmul.f32 %v1970, %v2042
      %v2049 = vmul.f32 %v1971, %v2042
      %v2050 = vmul.f32 %v1972, %v2042
      %v2051 = vmul.f32 %v1973, %v2042
      %v2052 = vmul.f32 %v1974, %v2042
      %v2053 = vmul.f32 %v1975, %v2042
      %v2054 = vmul.f32 %v1976, %v2042
      %v2055 = vmul.f32 %v1977, %v2042
      %v2056 = vmul.f32 %v1978, %v2042
      %v2057 = vmul.f32 %v1979, %v2042
      %v2058 = vmul.f32 %v1980, %v2042
      %v2059 = vmul.f32 %v1981, %v2042
      %v2060 = vmul.f32 %v1982, %v2042
      %v2061 = vmul.f32 %v1983, %v2042
      %v2062 = vmul.f32 %v1984, %v2042
      %v2063 = vmul.f32 %v1985, %v2042
      %v2064 = vmul.f32 %v1986, %v2042
      %v2065 = vmul.f32 %v1987, %v2042
      %v2066 = vmul.f32 %v1988, %v2042
      %v2067 = vmul.f32 %v1989, %v2042
      %v2068 = vmul.f32 %v1990, %v2042
      %v2069 = vmul.f32 %v1991, %v2042
      %v2070 = vmul.f32 %v1992, %v2042
      %v2071 = vmul.f32 %v1993, %v2042
      %v2072 = vmul.f32 %v1994, %v2042
      %v2073 = vmul.f32 %v1995, %v2042
      %v2074 = vmul.f32 %v1996, %v2042
      %v2075 = vmul.f32 %v1997, %v2042
      %v2076 = vmul.f32 %v1998, %v2042
      %v2077 = vmul.f32 %v1999, %v2042
      %v2078 = vmul.f32 %v2000, %v2042
      %v2079 = vmul.f32 %v2001, %v2042
      %v2080 = vmul.f32 %v2002, %v2042
      %v2081 = vmul.f32 %v2003, %v2042
      %v2082 = vmul.f32 %v2004, %v2042
      %v2083 = vmul.f32 %v2005, %v2042
      %v2084 = vmul.f32 %v2006, %v2042
      %v2085 = vmul.f32 %v2007, %v2042
      %v2086 = vmul.f32 %v2008, %v2042
      %v2087 = vmul.f32 %v2009, %v2042
      %v2088 = vmul.f32 %v2010, %v2042
      %v2089 = vmul.f32 %v2011, %v2042
      %v2090 = vmul.f32 %v2012, %v2042
      %v2091 = vmul.f32 %v2013, %v2042
      %v2092 = vmul.f32 %v2014, %v2042
      %v2093 = vmul.f32 %v2015, %v2042
      %v2094 = vmul.f32 %v2016, %v2042
      %v2095 = vmul.f32 %v2017, %v2042
      %v2096 = vmul.f32 %v2018, %v2042
      %v2097 = vmul.f32 %v2019, %v2042
      %v2098 = vmul.f32 %v2020, %v2042
      %v2099 = vmul.f32 %v2021, %v2042
      %v2100 = vmul.f32 %v2022, %v2042
      %v2101 = vmul.f32 %v2023, %v2042
      %v2102 = vmul.f32 %v2024, %v2042
      %v2103 = vmul.f32 %v2025, %v2042
      %v2104 = vmul.f32 %v2026, %v2042
      %v2105 = vmul.f32 %v2027, %v2042
      %v2106 = vmul.f32 %v2028, %v2042
      %v2107 = vmul.f32 %v2029, %v2042
      %v2108 = vmul.f32 %v2030, %v2042
      %v2109 = vmul.f32 %v2031, %v2042
      %v2110 = vmul.f32 %v2032, %v2042
      %v2111 = vmul.f32 %v2033, %v2042
      %v2112 = vmul.f32 %v2034, %v2042
      %v2113 = vmul.f32 %v2035, %v2042
      %v2114 = vmul.f32 %v2036, %v2042
      %v2115 = vmul.f32 %v2037, %v2042
      %v2116 = vadd.f32 %v1894, %v2044
      %v2117 = vadd.f32 %v1895, %v2045
      %v2118 = vadd.f32 %v1896, %v2046
      %v2119 = vadd.f32 %v1897, %v2047
      %v2120 = vadd.f32 %v1898, %v2048
      %v2121 = vadd.f32 %v1899, %v2049
      %v2122 = vadd.f32 %v1900, %v2050
      %v2123 = vadd.f32 %v1901, %v2051
      %v2124 = vadd.f32 %v1902, %v2052
      %v2125 = vadd.f32 %v1903, %v2053
      %v2126 = vadd.f32 %v1904, %v2054
      %v2127 = vadd.f32 %v1905, %v2055
      %v2128 = vadd.f32 %v1906, %v2056
      %v2129 = vadd.f32 %v1907, %v2057
      %v2130 = vadd.f32 %v1908, %v2058
      %v2131 = vadd.f32 %v1909, %v2059
      %v2132 = vadd.f32 %v1910, %v2060
      %v2133 = vadd.f32 %v1911, %v2061
      %v2134 = vadd.f32 %v1912, %v2062
      %v2135 = vadd.f32 %v1913, %v2063
      %v2136 = vadd.f32 %v1914, %v2064
      %v2137 = vadd.f32 %v1915, %v2065
      %v2138 = vadd.f32 %v1916, %v2066
      %v2139 = vadd.f32 %v1917, %v2067
      %v2140 = vadd.f32 %v1918, %v2068
      %v2141 = vadd.f32 %v1919, %v2069
      %v2142 = vadd.f32 %v1920, %v2070
      %v2143 = vadd.f32 %v1921, %v2071
      %v2144 = vadd.f32 %v1922, %v2072
      %v2145 = vadd.f32 %v1923, %v2073
      %v2146 = vadd.f32 %v1924, %v2074
      %v2147 = vadd.f32 %v1925, %v2075
      %v2148 = vadd.f32 %v1926, %v2076
      %v2149 = vadd.f32 %v1927, %v2077
      %v2150 = vadd.f32 %v1928, %v2078
      %v2151 = vadd.f32 %v1929, %v2079
      %v2152 = vadd.f32 %v1930, %v2080
      %v2153 = vadd.f32 %v1931, %v2081
      %v2154 = vadd.f32 %v1932, %v2082
      %v2155 = vadd.f32 %v1933, %v2083
      %v2156 = vadd.f32 %v1934, %v2084
      %v2157 = vadd.f32 %v1935, %v2085
      %v2158 = vadd.f32 %v1936, %v2086
      %v2159 = vadd.f32 %v1937, %v2087
      %v2160 = vadd.f32 %v1938, %v2088
      %v2161 = vadd.f32 %v1939, %v2089
      %v2162 = vadd.f32 %v1940, %v2090
      %v2163 = vadd.f32 %v1941, %v2091
      %v2164 = vadd.f32 %v1942, %v2092
      %v2165 = vadd.f32 %v1943, %v2093
      %v2166 = vadd.f32 %v1944, %v2094
      %v2167 = vadd.f32 %v1945, %v2095
      %v2168 = vadd.f32 %v1946, %v2096
      %v2169 = vadd.f32 %v1947, %v2097
      %v2170 = vadd.f32 %v1948, %v2098
      %v2171 = vadd.f32 %v1949, %v2099
      %v2172 = vadd.f32 %v1950, %v2100
      %v2173 = vadd.f32 %v1951, %v2101
      %v2174 = vadd.f32 %v1952, %v2102
      %v2175 = vadd.f32 %v1953, %v2103
      %v2176 = vadd.f32 %v1954, %v2104
      %v2177 = vadd.f32 %v1955, %v2105
      %v2178 = vadd.f32 %v1956, %v2106
      %v2179 = vadd.f32 %v1957, %v2107
      %v2180 = vadd.f32 %v1958, %v2108
      %v2181 = vadd.f32 %v1959, %v2109
      %v2182 = vadd.f32 %v1960, %v2110
      %v2183 = vadd.f32 %v1961, %v2111
      %v2184 = vadd.f32 %v1962, %v2112
      %v2185 = vadd.f32 %v1963, %v2113
      %v2186 = vadd.f32 %v1964, %v2114
      %v2187 = vadd.f32 %v1965, %v2115
      %v2188 = vld [vmem:[%s1743 + $0x2] sm:$0xff]
      %v2189 = vld [vmem:[%s1743 + $0xa] sm:$0xff]
      %v2190 = vld [vmem:[%s1743 + $0x12] sm:$0xff]
      %v2191 = vld [vmem:[%s1743 + $0x22] sm:$0xff]
      %v2192 = vld [vmem:[%s1743 + $0x2a] sm:$0xff]
      %v2193 = vld [vmem:[%s1743 + $0x32] sm:$0xff]
      %v2194 = vld [vmem:[%s1743 + $0x42] sm:$0xff]
      %v2195 = vld [vmem:[%s1743 + $0x4a] sm:$0xff]
      %v2196 = vld [vmem:[%s1743 + $0x52] sm:$0xff]
      %v2197 = vld [vmem:[%s1743 + $0x62] sm:$0xff]
      %v2198 = vld [vmem:[%s1743 + $0x6a] sm:$0xff]
      %v2199 = vld [vmem:[%s1743 + $0x72] sm:$0xff]
      %v2200 = vld [vmem:[%s1743 + $0x82] sm:$0xff]
      %v2201 = vld [vmem:[%s1743 + $0x8a] sm:$0xff]
      %v2202 = vld [vmem:[%s1743 + $0x92] sm:$0xff]
      %v2203 = vld [vmem:[%s1743 + $0xa2] sm:$0xff]
      %v2204 = vld [vmem:[%s1743 + $0xaa] sm:$0xff]
      %v2205 = vld [vmem:[%s1743 + $0xb2] sm:$0xff]
      %v2206 = vld [vmem:[%s1743 + $0xc2] sm:$0xff]
      %v2207 = vld [vmem:[%s1743 + $0xca] sm:$0xff]
      %v2208 = vld [vmem:[%s1743 + $0xd2] sm:$0xff]
      %v2209 = vld [vmem:[%s1743 + $0xe2] sm:$0xff]
      %v2210 = vld [vmem:[%s1743 + $0xea] sm:$0xff]
      %v2211 = vld [vmem:[%s1743 + $0xf2] sm:$0xff]
      %v2212 = vld [vmem:[%s1743 + $0x102] sm:$0xff]
      %v2213 = vld [vmem:[%s1743 + $0x10a] sm:$0xff]
      %v2214 = vld [vmem:[%s1743 + $0x112] sm:$0xff]
      %v2215 = vld [vmem:[%s1743 + $0x122] sm:$0xff]
      %v2216 = vld [vmem:[%s1743 + $0x12a] sm:$0xff]
      %v2217 = vld [vmem:[%s1743 + $0x132] sm:$0xff]
      %v2218 = vld [vmem:[%s1743 + $0x142] sm:$0xff]
      %v2219 = vld [vmem:[%s1743 + $0x14a] sm:$0xff]
      %v2220 = vld [vmem:[%s1743 + $0x152] sm:$0xff]
      %v2221 = vld [vmem:[%s1743 + $0x162] sm:$0xff]
      %v2222 = vld [vmem:[%s1743 + $0x16a] sm:$0xff]
      %v2223 = vld [vmem:[%s1743 + $0x172] sm:$0xff]
      %v2224 = vld [vmem:[%s1743 + $0x182] sm:$0xff]
      %v2225 = vld [vmem:[%s1743 + $0x18a] sm:$0xff]
      %v2226 = vld [vmem:[%s1743 + $0x192] sm:$0xff]
      %v2227 = vld [vmem:[%s1743 + $0x1a2] sm:$0xff]
      %v2228 = vld [vmem:[%s1743 + $0x1aa] sm:$0xff]
      %v2229 = vld [vmem:[%s1743 + $0x1b2] sm:$0xff]
      %v2230 = vld [vmem:[%s1743 + $0x1c2] sm:$0xff]
      %v2231 = vld [vmem:[%s1743 + $0x1ca] sm:$0xff]
      %v2232 = vld [vmem:[%s1743 + $0x1d2] sm:$0xff]
      %v2233 = vld [vmem:[%s1743 + $0x1e2] sm:$0xff]
      %v2234 = vld [vmem:[%s1743 + $0x1ea] sm:$0xff]
      %v2235 = vld [vmem:[%s1743 + $0x1f2] sm:$0xff]
      %v2236 = vld [vmem:[%s1743 + $0x202] sm:$0xff]
      %v2237 = vld [vmem:[%s1743 + $0x20a] sm:$0xff]
      %v2238 = vld [vmem:[%s1743 + $0x212] sm:$0xff]
      %v2239 = vld [vmem:[%s1743 + $0x222] sm:$0xff]
      %v2240 = vld [vmem:[%s1743 + $0x22a] sm:$0xff]
      %v2241 = vld [vmem:[%s1743 + $0x232] sm:$0xff]
      %v2242 = vld [vmem:[%s1743 + $0x242] sm:$0xff]
      %v2243 = vld [vmem:[%s1743 + $0x24a] sm:$0xff]
      %v2244 = vld [vmem:[%s1743 + $0x252] sm:$0xff]
      %v2245 = vld [vmem:[%s1743 + $0x262] sm:$0xff]
      %v2246 = vld [vmem:[%s1743 + $0x26a] sm:$0xff]
      %v2247 = vld [vmem:[%s1743 + $0x272] sm:$0xff]
      %v2248 = vld [vmem:[%s1743 + $0x282] sm:$0xff]
      %v2249 = vld [vmem:[%s1743 + $0x28a] sm:$0xff]
      %v2250 = vld [vmem:[%s1743 + $0x292] sm:$0xff]
      %v2251 = vld [vmem:[%s1743 + $0x2a2] sm:$0xff]
      %v2252 = vld [vmem:[%s1743 + $0x2aa] sm:$0xff]
      %v2253 = vld [vmem:[%s1743 + $0x2b2] sm:$0xff]
      %v2254 = vld [vmem:[%s1743 + $0x2c2] sm:$0xff]
      %v2255 = vld [vmem:[%s1743 + $0x2ca] sm:$0xff]
      %v2256 = vld [vmem:[%s1743 + $0x2d2] sm:$0xff]
      %v2257 = vld [vmem:[%s1743 + $0x2e2] sm:$0xff]
      %v2258 = vld [vmem:[%s1743 + $0x2ea] sm:$0xff]
      %v2259 = vld [vmem:[%s1743 + $0x2f2] sm:$0xff]
      %v2261 = vlaneseq
      %v2262 = vshrl.u32 %v2261, 7
      %v2263 = vsub.s32 0, %v2262
      %v2264 = vrot.slane %v1073, %v2263
      %v2266 = vmul.f32 %v2188, %v2264
      %v2267 = vmul.f32 %v2189, %v2264
      %v2268 = vmul.f32 %v2190, %v2264
      %v2269 = vmul.f32 %v2191, %v2264
      %v2270 = vmul.f32 %v2192, %v2264
      %v2271 = vmul.f32 %v2193, %v2264
      %v2272 = vmul.f32 %v2194, %v2264
      %v2273 = vmul.f32 %v2195, %v2264
      %v2274 = vmul.f32 %v2196, %v2264
      %v2275 = vmul.f32 %v2197, %v2264
      %v2276 = vmul.f32 %v2198, %v2264
      %v2277 = vmul.f32 %v2199, %v2264
      %v2278 = vmul.f32 %v2200, %v2264
      %v2279 = vmul.f32 %v2201, %v2264
      %v2280 = vmul.f32 %v2202, %v2264
      %v2281 = vmul.f32 %v2203, %v2264
      %v2282 = vmul.f32 %v2204, %v2264
      %v2283 = vmul.f32 %v2205, %v2264
      %v2284 = vmul.f32 %v2206, %v2264
      %v2285 = vmul.f32 %v2207, %v2264
      %v2286 = vmul.f32 %v2208, %v2264
      %v2287 = vmul.f32 %v2209, %v2264
      %v2288 = vmul.f32 %v2210, %v2264
      %v2289 = vmul.f32 %v2211, %v2264
      %v2290 = vmul.f32 %v2212, %v2264
      %v2291 = vmul.f32 %v2213, %v2264
      %v2292 = vmul.f32 %v2214, %v2264
      %v2293 = vmul.f32 %v2215, %v2264
      %v2294 = vmul.f32 %v2216, %v2264
      %v2295 = vmul.f32 %v2217, %v2264
      %v2296 = vmul.f32 %v2218, %v2264
      %v2297 = vmul.f32 %v2219, %v2264
      %v2298 = vmul.f32 %v2220, %v2264
      %v2299 = vmul.f32 %v2221, %v2264
      %v2300 = vmul.f32 %v2222, %v2264
      %v2301 = vmul.f32 %v2223, %v2264
      %v2302 = vmul.f32 %v2224, %v2264
      %v2303 = vmul.f32 %v2225, %v2264
      %v2304 = vmul.f32 %v2226, %v2264
      %v2305 = vmul.f32 %v2227, %v2264
      %v2306 = vmul.f32 %v2228, %v2264
      %v2307 = vmul.f32 %v2229, %v2264
      %v2308 = vmul.f32 %v2230, %v2264
      %v2309 = vmul.f32 %v2231, %v2264
      %v2310 = vmul.f32 %v2232, %v2264
      %v2311 = vmul.f32 %v2233, %v2264
      %v2312 = vmul.f32 %v2234, %v2264
      %v2313 = vmul.f32 %v2235, %v2264
      %v2314 = vmul.f32 %v2236, %v2264
      %v2315 = vmul.f32 %v2237, %v2264
      %v2316 = vmul.f32 %v2238, %v2264
      %v2317 = vmul.f32 %v2239, %v2264
      %v2318 = vmul.f32 %v2240, %v2264
      %v2319 = vmul.f32 %v2241, %v2264
      %v2320 = vmul.f32 %v2242, %v2264
      %v2321 = vmul.f32 %v2243, %v2264
      %v2322 = vmul.f32 %v2244, %v2264
      %v2323 = vmul.f32 %v2245, %v2264
      %v2324 = vmul.f32 %v2246, %v2264
      %v2325 = vmul.f32 %v2247, %v2264
      %v2326 = vmul.f32 %v2248, %v2264
      %v2327 = vmul.f32 %v2249, %v2264
      %v2328 = vmul.f32 %v2250, %v2264
      %v2329 = vmul.f32 %v2251, %v2264
      %v2330 = vmul.f32 %v2252, %v2264
      %v2331 = vmul.f32 %v2253, %v2264
      %v2332 = vmul.f32 %v2254, %v2264
      %v2333 = vmul.f32 %v2255, %v2264
      %v2334 = vmul.f32 %v2256, %v2264
      %v2335 = vmul.f32 %v2257, %v2264
      %v2336 = vmul.f32 %v2258, %v2264
      %v2337 = vmul.f32 %v2259, %v2264
      %v2338 = vadd.f32 %v2116, %v2266
      %v2339 = vadd.f32 %v2117, %v2267
      %v2340 = vadd.f32 %v2118, %v2268
      %v2341 = vadd.f32 %v2119, %v2269
      %v2342 = vadd.f32 %v2120, %v2270
      %v2343 = vadd.f32 %v2121, %v2271
      %v2344 = vadd.f32 %v2122, %v2272
      %v2345 = vadd.f32 %v2123, %v2273
      %v2346 = vadd.f32 %v2124, %v2274
      %v2347 = vadd.f32 %v2125, %v2275
      %v2348 = vadd.f32 %v2126, %v2276
      %v2349 = vadd.f32 %v2127, %v2277
      %v2350 = vadd.f32 %v2128, %v2278
      %v2351 = vadd.f32 %v2129, %v2279
      %v2352 = vadd.f32 %v2130, %v2280
      %v2353 = vadd.f32 %v2131, %v2281
      %v2354 = vadd.f32 %v2132, %v2282
      %v2355 = vadd.f32 %v2133, %v2283
      %v2356 = vadd.f32 %v2134, %v2284
      %v2357 = vadd.f32 %v2135, %v2285
      %v2358 = vadd.f32 %v2136, %v2286
      %v2359 = vadd.f32 %v2137, %v2287
      %v2360 = vadd.f32 %v2138, %v2288
      %v2361 = vadd.f32 %v2139, %v2289
      %v2362 = vadd.f32 %v2140, %v2290
      %v2363 = vadd.f32 %v2141, %v2291
      %v2364 = vadd.f32 %v2142, %v2292
      %v2365 = vadd.f32 %v2143, %v2293
      %v2366 = vadd.f32 %v2144, %v2294
      %v2367 = vadd.f32 %v2145, %v2295
      %v2368 = vadd.f32 %v2146, %v2296
      %v2369 = vadd.f32 %v2147, %v2297
      %v2370 = vadd.f32 %v2148, %v2298
      %v2371 = vadd.f32 %v2149, %v2299
      %v2372 = vadd.f32 %v2150, %v2300
      %v2373 = vadd.f32 %v2151, %v2301
      %v2374 = vadd.f32 %v2152, %v2302
      %v2375 = vadd.f32 %v2153, %v2303
      %v2376 = vadd.f32 %v2154, %v2304
      %v2377 = vadd.f32 %v2155, %v2305
      %v2378 = vadd.f32 %v2156, %v2306
      %v2379 = vadd.f32 %v2157, %v2307
      %v2380 = vadd.f32 %v2158, %v2308
      %v2381 = vadd.f32 %v2159, %v2309
      %v2382 = vadd.f32 %v2160, %v2310
      %v2383 = vadd.f32 %v2161, %v2311
      %v2384 = vadd.f32 %v2162, %v2312
      %v2385 = vadd.f32 %v2163, %v2313
      %v2386 = vadd.f32 %v2164, %v2314
      %v2387 = vadd.f32 %v2165, %v2315
      %v2388 = vadd.f32 %v2166, %v2316
      %v2389 = vadd.f32 %v2167, %v2317
      %v2390 = vadd.f32 %v2168, %v2318
      %v2391 = vadd.f32 %v2169, %v2319
      %v2392 = vadd.f32 %v2170, %v2320
      %v2393 = vadd.f32 %v2171, %v2321
      %v2394 = vadd.f32 %v2172, %v2322
      %v2395 = vadd.f32 %v2173, %v2323
      %v2396 = vadd.f32 %v2174, %v2324
      %v2397 = vadd.f32 %v2175, %v2325
      %v2398 = vadd.f32 %v2176, %v2326
      %v2399 = vadd.f32 %v2177, %v2327
      %v2400 = vadd.f32 %v2178, %v2328
      %v2401 = vadd.f32 %v2179, %v2329
      %v2402 = vadd.f32 %v2180, %v2330
      %v2403 = vadd.f32 %v2181, %v2331
      %v2404 = vadd.f32 %v2182, %v2332
      %v2405 = vadd.f32 %v2183, %v2333
      %v2406 = vadd.f32 %v2184, %v2334
      %v2407 = vadd.f32 %v2185, %v2335
      %v2408 = vadd.f32 %v2186, %v2336
      %v2409 = vadd.f32 %v2187, %v2337
      %s2410 = scalar_lea.vmem [#allocation2], 64
      %v2411 = vld [vmem:[%s2410] sm:$0xff]
      %v2412 = vld [vmem:[%s2410 + $0x8] sm:$0xff]
      %v2413 = vld [vmem:[%s2410 + $0x10] sm:$0xff]
      %v2414 = vld [vmem:[%s2410 + $0x20] sm:$0xff]
      %v2415 = vld [vmem:[%s2410 + $0x28] sm:$0xff]
      %v2416 = vld [vmem:[%s2410 + $0x30] sm:$0xff]
      %v2417 = vld [vmem:[%s2410 + $0x40] sm:$0xff]
      %v2418 = vld [vmem:[%s2410 + $0x48] sm:$0xff]
      %v2419 = vld [vmem:[%s2410 + $0x50] sm:$0xff]
      %v2420 = vld [vmem:[%s2410 + $0x60] sm:$0xff]
      %v2421 = vld [vmem:[%s2410 + $0x68] sm:$0xff]
      %v2422 = vld [vmem:[%s2410 + $0x70] sm:$0xff]
      %v2423 = vld [vmem:[%s2410 + $0x80] sm:$0xff]
      %v2424 = vld [vmem:[%s2410 + $0x88] sm:$0xff]
      %v2425 = vld [vmem:[%s2410 + $0x90] sm:$0xff]
      %v2426 = vld [vmem:[%s2410 + $0xa0] sm:$0xff]
      %v2427 = vld [vmem:[%s2410 + $0xa8] sm:$0xff]
      %v2428 = vld [vmem:[%s2410 + $0xb0] sm:$0xff]
      %v2429 = vld [vmem:[%s2410 + $0xc0] sm:$0xff]
      %v2430 = vld [vmem:[%s2410 + $0xc8] sm:$0xff]
      %v2431 = vld [vmem:[%s2410 + $0xd0] sm:$0xff]
      %v2432 = vld [vmem:[%s2410 + $0xe0] sm:$0xff]
      %v2433 = vld [vmem:[%s2410 + $0xe8] sm:$0xff]
      %v2434 = vld [vmem:[%s2410 + $0xf0] sm:$0xff]
      %v2435 = vld [vmem:[%s2410 + $0x100] sm:$0xff]
      %v2436 = vld [vmem:[%s2410 + $0x108] sm:$0xff]
      %v2437 = vld [vmem:[%s2410 + $0x110] sm:$0xff]
      %v2438 = vld [vmem:[%s2410 + $0x120] sm:$0xff]
      %v2439 = vld [vmem:[%s2410 + $0x128] sm:$0xff]
      %v2440 = vld [vmem:[%s2410 + $0x130] sm:$0xff]
      %v2441 = vld [vmem:[%s2410 + $0x140] sm:$0xff]
      %v2442 = vld [vmem:[%s2410 + $0x148] sm:$0xff]
      %v2443 = vld [vmem:[%s2410 + $0x150] sm:$0xff]
      %v2444 = vld [vmem:[%s2410 + $0x160] sm:$0xff]
      %v2445 = vld [vmem:[%s2410 + $0x168] sm:$0xff]
      %v2446 = vld [vmem:[%s2410 + $0x170] sm:$0xff]
      %v2447 = vld [vmem:[%s2410 + $0x180] sm:$0xff]
      %v2448 = vld [vmem:[%s2410 + $0x188] sm:$0xff]
      %v2449 = vld [vmem:[%s2410 + $0x190] sm:$0xff]
      %v2450 = vld [vmem:[%s2410 + $0x1a0] sm:$0xff]
      %v2451 = vld [vmem:[%s2410 + $0x1a8] sm:$0xff]
      %v2452 = vld [vmem:[%s2410 + $0x1b0] sm:$0xff]
      %v2453 = vld [vmem:[%s2410 + $0x1c0] sm:$0xff]
      %v2454 = vld [vmem:[%s2410 + $0x1c8] sm:$0xff]
      %v2455 = vld [vmem:[%s2410 + $0x1d0] sm:$0xff]
      %v2456 = vld [vmem:[%s2410 + $0x1e0] sm:$0xff]
      %v2457 = vld [vmem:[%s2410 + $0x1e8] sm:$0xff]
      %v2458 = vld [vmem:[%s2410 + $0x1f0] sm:$0xff]
      %v2459 = vld [vmem:[%s2410 + $0x200] sm:$0xff]
      %v2460 = vld [vmem:[%s2410 + $0x208] sm:$0xff]
      %v2461 = vld [vmem:[%s2410 + $0x210] sm:$0xff]
      %v2462 = vld [vmem:[%s2410 + $0x220] sm:$0xff]
      %v2463 = vld [vmem:[%s2410 + $0x228] sm:$0xff]
      %v2464 = vld [vmem:[%s2410 + $0x230] sm:$0xff]
      %v2465 = vld [vmem:[%s2410 + $0x240] sm:$0xff]
      %v2466 = vld [vmem:[%s2410 + $0x248] sm:$0xff]
      %v2467 = vld [vmem:[%s2410 + $0x250] sm:$0xff]
      %v2468 = vld [vmem:[%s2410 + $0x260] sm:$0xff]
      %v2469 = vld [vmem:[%s2410 + $0x268] sm:$0xff]
      %v2470 = vld [vmem:[%s2410 + $0x270] sm:$0xff]
      %v2471 = vld [vmem:[%s2410 + $0x280] sm:$0xff]
      %v2472 = vld [vmem:[%s2410 + $0x288] sm:$0xff]
      %v2473 = vld [vmem:[%s2410 + $0x290] sm:$0xff]
      %v2474 = vld [vmem:[%s2410 + $0x2a0] sm:$0xff]
      %v2475 = vld [vmem:[%s2410 + $0x2a8] sm:$0xff]
      %v2476 = vld [vmem:[%s2410 + $0x2b0] sm:$0xff]
      %v2477 = vld [vmem:[%s2410 + $0x2c0] sm:$0xff]
      %v2478 = vld [vmem:[%s2410 + $0x2c8] sm:$0xff]
      %v2479 = vld [vmem:[%s2410 + $0x2d0] sm:$0xff]
      %v2480 = vld [vmem:[%s2410 + $0x2e0] sm:$0xff]
      %v2481 = vld [vmem:[%s2410 + $0x2e8] sm:$0xff]
      %v2482 = vld [vmem:[%s2410 + $0x2f0] sm:$0xff]
      %v2484 = vlaneseq
      %v2485 = vshrl.u32 %v2484, 7
      %v2486 = vsub.s32 0, %v2485
      %v2487 = vrot.slane %v1074, %v2486
      %v2489 = vmul.f32 %v2411, %v2487
      %v2490 = vmul.f32 %v2412, %v2487
      %v2491 = vmul.f32 %v2413, %v2487
      %v2492 = vmul.f32 %v2414, %v2487
      %v2493 = vmul.f32 %v2415, %v2487
      %v2494 = vmul.f32 %v2416, %v2487
      %v2495 = vmul.f32 %v2417, %v2487
      %v2496 = vmul.f32 %v2418, %v2487
      %v2497 = vmul.f32 %v2419, %v2487
      %v2498 = vmul.f32 %v2420, %v2487
      %v2499 = vmul.f32 %v2421, %v2487
      %v2500 = vmul.f32 %v2422, %v2487
      %v2501 = vmul.f32 %v2423, %v2487
      %v2502 = vmul.f32 %v2424, %v2487
      %v2503 = vmul.f32 %v2425, %v2487
      %v2504 = vmul.f32 %v2426, %v2487
      %v2505 = vmul.f32 %v2427, %v2487
      %v2506 = vmul.f32 %v2428, %v2487
      %v2507 = vmul.f32 %v2429, %v2487
      %v2508 = vmul.f32 %v2430, %v2487
      %v2509 = vmul.f32 %v2431, %v2487
      %v2510 = vmul.f32 %v2432, %v2487
      %v2511 = vmul.f32 %v2433, %v2487
      %v2512 = vmul.f32 %v2434, %v2487
      %v2513 = vmul.f32 %v2435, %v2487
      %v2514 = vmul.f32 %v2436, %v2487
      %v2515 = vmul.f32 %v2437, %v2487
      %v2516 = vmul.f32 %v2438, %v2487
      %v2517 = vmul.f32 %v2439, %v2487
      %v2518 = vmul.f32 %v2440, %v2487
      %v2519 = vmul.f32 %v2441, %v2487
      %v2520 = vmul.f32 %v2442, %v2487
      %v2521 = vmul.f32 %v2443, %v2487
      %v2522 = vmul.f32 %v2444, %v2487
      %v2523 = vmul.f32 %v2445, %v2487
      %v2524 = vmul.f32 %v2446, %v2487
      %v2525 = vmul.f32 %v2447, %v2487
      %v2526 = vmul.f32 %v2448, %v2487
      %v2527 = vmul.f32 %v2449, %v2487
      %v2528 = vmul.f32 %v2450, %v2487
      %v2529 = vmul.f32 %v2451, %v2487
      %v2530 = vmul.f32 %v2452, %v2487
      %v2531 = vmul.f32 %v2453, %v2487
      %v2532 = vmul.f32 %v2454, %v2487
      %v2533 = vmul.f32 %v2455, %v2487
      %v2534 = vmul.f32 %v2456, %v2487
      %v2535 = vmul.f32 %v2457, %v2487
      %v2536 = vmul.f32 %v2458, %v2487
      %v2537 = vmul.f32 %v2459, %v2487
      %v2538 = vmul.f32 %v2460, %v2487
      %v2539 = vmul.f32 %v2461, %v2487
      %v2540 = vmul.f32 %v2462, %v2487
      %v2541 = vmul.f32 %v2463, %v2487
      %v2542 = vmul.f32 %v2464, %v2487
      %v2543 = vmul.f32 %v2465, %v2487
      %v2544 = vmul.f32 %v2466, %v2487
      %v2545 = vmul.f32 %v2467, %v2487
      %v2546 = vmul.f32 %v2468, %v2487
      %v2547 = vmul.f32 %v2469, %v2487
      %v2548 = vmul.f32 %v2470, %v2487
      %v2549 = vmul.f32 %v2471, %v2487
      %v2550 = vmul.f32 %v2472, %v2487
      %v2551 = vmul.f32 %v2473, %v2487
      %v2552 = vmul.f32 %v2474, %v2487
      %v2553 = vmul.f32 %v2475, %v2487
      %v2554 = vmul.f32 %v2476, %v2487
      %v2555 = vmul.f32 %v2477, %v2487
      %v2556 = vmul.f32 %v2478, %v2487
      %v2557 = vmul.f32 %v2479, %v2487
      %v2558 = vmul.f32 %v2480, %v2487
      %v2559 = vmul.f32 %v2481, %v2487
      %v2560 = vmul.f32 %v2482, %v2487
      %v2561 = vadd.f32 %v2338, %v2489
      %v2562 = vadd.f32 %v2339, %v2490
      %v2563 = vadd.f32 %v2340, %v2491
      %v2564 = vadd.f32 %v2341, %v2492
      %v2565 = vadd.f32 %v2342, %v2493
      %v2566 = vadd.f32 %v2343, %v2494
      %v2567 = vadd.f32 %v2344, %v2495
      %v2568 = vadd.f32 %v2345, %v2496
      %v2569 = vadd.f32 %v2346, %v2497
      %v2570 = vadd.f32 %v2347, %v2498
      %v2571 = vadd.f32 %v2348, %v2499
      %v2572 = vadd.f32 %v2349, %v2500
      %v2573 = vadd.f32 %v2350, %v2501
      %v2574 = vadd.f32 %v2351, %v2502
      %v2575 = vadd.f32 %v2352, %v2503
      %v2576 = vadd.f32 %v2353, %v2504
      %v2577 = vadd.f32 %v2354, %v2505
      %v2578 = vadd.f32 %v2355, %v2506
      %v2579 = vadd.f32 %v2356, %v2507
      %v2580 = vadd.f32 %v2357, %v2508
      %v2581 = vadd.f32 %v2358, %v2509
      %v2582 = vadd.f32 %v2359, %v2510
      %v2583 = vadd.f32 %v2360, %v2511
      %v2584 = vadd.f32 %v2361, %v2512
      %v2585 = vadd.f32 %v2362, %v2513
      %v2586 = vadd.f32 %v2363, %v2514
      %v2587 = vadd.f32 %v2364, %v2515
      %v2588 = vadd.f32 %v2365, %v2516
      %v2589 = vadd.f32 %v2366, %v2517
      %v2590 = vadd.f32 %v2367, %v2518
      %v2591 = vadd.f32 %v2368, %v2519
      %v2592 = vadd.f32 %v2369, %v2520
      %v2593 = vadd.f32 %v2370, %v2521
      %v2594 = vadd.f32 %v2371, %v2522
      %v2595 = vadd.f32 %v2372, %v2523
      %v2596 = vadd.f32 %v2373, %v2524
      %v2597 = vadd.f32 %v2374, %v2525
      %v2598 = vadd.f32 %v2375, %v2526
      %v2599 = vadd.f32 %v2376, %v2527
      %v2600 = vadd.f32 %v2377, %v2528
      %v2601 = vadd.f32 %v2378, %v2529
      %v2602 = vadd.f32 %v2379, %v2530
      %v2603 = vadd.f32 %v2380, %v2531
      %v2604 = vadd.f32 %v2381, %v2532
      %v2605 = vadd.f32 %v2382, %v2533
      %v2606 = vadd.f32 %v2383, %v2534
      %v2607 = vadd.f32 %v2384, %v2535
      %v2608 = vadd.f32 %v2385, %v2536
      %v2609 = vadd.f32 %v2386, %v2537
      %v2610 = vadd.f32 %v2387, %v2538
      %v2611 = vadd.f32 %v2388, %v2539
      %v2612 = vadd.f32 %v2389, %v2540
      %v2613 = vadd.f32 %v2390, %v2541
      %v2614 = vadd.f32 %v2391, %v2542
      %v2615 = vadd.f32 %v2392, %v2543
      %v2616 = vadd.f32 %v2393, %v2544
      %v2617 = vadd.f32 %v2394, %v2545
      %v2618 = vadd.f32 %v2395, %v2546
      %v2619 = vadd.f32 %v2396, %v2547
      %v2620 = vadd.f32 %v2397, %v2548
      %v2621 = vadd.f32 %v2398, %v2549
      %v2622 = vadd.f32 %v2399, %v2550
      %v2623 = vadd.f32 %v2400, %v2551
      %v2624 = vadd.f32 %v2401, %v2552
      %v2625 = vadd.f32 %v2402, %v2553
      %v2626 = vadd.f32 %v2403, %v2554
      %v2627 = vadd.f32 %v2404, %v2555
      %v2628 = vadd.f32 %v2405, %v2556
      %v2629 = vadd.f32 %v2406, %v2557
      %v2630 = vadd.f32 %v2407, %v2558
      %v2631 = vadd.f32 %v2408, %v2559
      %v2632 = vadd.f32 %v2409, %v2560
      %v2633 = vld [vmem:[%s2410 + $0x1] sm:$0xff]
      %v2634 = vld [vmem:[%s2410 + $0x9] sm:$0xff]
      %v2635 = vld [vmem:[%s2410 + $0x11] sm:$0xff]
      %v2636 = vld [vmem:[%s2410 + $0x21] sm:$0xff]
      %v2637 = vld [vmem:[%s2410 + $0x29] sm:$0xff]
      %v2638 = vld [vmem:[%s2410 + $0x31] sm:$0xff]
      %v2639 = vld [vmem:[%s2410 + $0x41] sm:$0xff]
      %v2640 = vld [vmem:[%s2410 + $0x49] sm:$0xff]
      %v2641 = vld [vmem:[%s2410 + $0x51] sm:$0xff]
      %v2642 = vld [vmem:[%s2410 + $0x61] sm:$0xff]
      %v2643 = vld [vmem:[%s2410 + $0x69] sm:$0xff]
      %v2644 = vld [vmem:[%s2410 + $0x71] sm:$0xff]
      %v2645 = vld [vmem:[%s2410 + $0x81] sm:$0xff]
      %v2646 = vld [vmem:[%s2410 + $0x89] sm:$0xff]
      %v2647 = vld [vmem:[%s2410 + $0x91] sm:$0xff]
      %v2648 = vld [vmem:[%s2410 + $0xa1] sm:$0xff]
      %v2649 = vld [vmem:[%s2410 + $0xa9] sm:$0xff]
      %v2650 = vld [vmem:[%s2410 + $0xb1] sm:$0xff]
      %v2651 = vld [vmem:[%s2410 + $0xc1] sm:$0xff]
      %v2652 = vld [vmem:[%s2410 + $0xc9] sm:$0xff]
      %v2653 = vld [vmem:[%s2410 + $0xd1] sm:$0xff]
      %v2654 = vld [vmem:[%s2410 + $0xe1] sm:$0xff]
      %v2655 = vld [vmem:[%s2410 + $0xe9] sm:$0xff]
      %v2656 = vld [vmem:[%s2410 + $0xf1] sm:$0xff]
      %v2657 = vld [vmem:[%s2410 + $0x101] sm:$0xff]
      %v2658 = vld [vmem:[%s2410 + $0x109] sm:$0xff]
      %v2659 = vld [vmem:[%s2410 + $0x111] sm:$0xff]
      %v2660 = vld [vmem:[%s2410 + $0x121] sm:$0xff]
      %v2661 = vld [vmem:[%s2410 + $0x129] sm:$0xff]
      %v2662 = vld [vmem:[%s2410 + $0x131] sm:$0xff]
      %v2663 = vld [vmem:[%s2410 + $0x141] sm:$0xff]
      %v2664 = vld [vmem:[%s2410 + $0x149] sm:$0xff]
      %v2665 = vld [vmem:[%s2410 + $0x151] sm:$0xff]
      %v2666 = vld [vmem:[%s2410 + $0x161] sm:$0xff]
      %v2667 = vld [vmem:[%s2410 + $0x169] sm:$0xff]
      %v2668 = vld [vmem:[%s2410 + $0x171] sm:$0xff]
      %v2669 = vld [vmem:[%s2410 + $0x181] sm:$0xff]
      %v2670 = vld [vmem:[%s2410 + $0x189] sm:$0xff]
      %v2671 = vld [vmem:[%s2410 + $0x191] sm:$0xff]
      %v2672 = vld [vmem:[%s2410 + $0x1a1] sm:$0xff]
      %v2673 = vld [vmem:[%s2410 + $0x1a9] sm:$0xff]
      %v2674 = vld [vmem:[%s2410 + $0x1b1] sm:$0xff]
      %v2675 = vld [vmem:[%s2410 + $0x1c1] sm:$0xff]
      %v2676 = vld [vmem:[%s2410 + $0x1c9] sm:$0xff]
      %v2677 = vld [vmem:[%s2410 + $0x1d1] sm:$0xff]
      %v2678 = vld [vmem:[%s2410 + $0x1e1] sm:$0xff]
      %v2679 = vld [vmem:[%s2410 + $0x1e9] sm:$0xff]
      %v2680 = vld [vmem:[%s2410 + $0x1f1] sm:$0xff]
      %v2681 = vld [vmem:[%s2410 + $0x201] sm:$0xff]
      %v2682 = vld [vmem:[%s2410 + $0x209] sm:$0xff]
      %v2683 = vld [vmem:[%s2410 + $0x211] sm:$0xff]
      %v2684 = vld [vmem:[%s2410 + $0x221] sm:$0xff]
      %v2685 = vld [vmem:[%s2410 + $0x229] sm:$0xff]
      %v2686 = vld [vmem:[%s2410 + $0x231] sm:$0xff]
      %v2687 = vld [vmem:[%s2410 + $0x241] sm:$0xff]
      %v2688 = vld [vmem:[%s2410 + $0x249] sm:$0xff]
      %v2689 = vld [vmem:[%s2410 + $0x251] sm:$0xff]
      %v2690 = vld [vmem:[%s2410 + $0x261] sm:$0xff]
      %v2691 = vld [vmem:[%s2410 + $0x269] sm:$0xff]
      %v2692 = vld [vmem:[%s2410 + $0x271] sm:$0xff]
      %v2693 = vld [vmem:[%s2410 + $0x281] sm:$0xff]
      %v2694 = vld [vmem:[%s2410 + $0x289] sm:$0xff]
      %v2695 = vld [vmem:[%s2410 + $0x291] sm:$0xff]
      %v2696 = vld [vmem:[%s2410 + $0x2a1] sm:$0xff]
      %v2697 = vld [vmem:[%s2410 + $0x2a9] sm:$0xff]
      %v2698 = vld [vmem:[%s2410 + $0x2b1] sm:$0xff]
      %v2699 = vld [vmem:[%s2410 + $0x2c1] sm:$0xff]
      %v2700 = vld [vmem:[%s2410 + $0x2c9] sm:$0xff]
      %v2701 = vld [vmem:[%s2410 + $0x2d1] sm:$0xff]
      %v2702 = vld [vmem:[%s2410 + $0x2e1] sm:$0xff]
      %v2703 = vld [vmem:[%s2410 + $0x2e9] sm:$0xff]
      %v2704 = vld [vmem:[%s2410 + $0x2f1] sm:$0xff]
      %v2706 = vlaneseq
      %v2707 = vshrl.u32 %v2706, 7
      %v2708 = vsub.s32 0, %v2707
      %v2709 = vrot.slane %v1075, %v2708
      %v2711 = vmul.f32 %v2633, %v2709
      %v2712 = vmul.f32 %v2634, %v2709
      %v2713 = vmul.f32 %v2635, %v2709
      %v2714 = vmul.f32 %v2636, %v2709
      %v2715 = vmul.f32 %v2637, %v2709
      %v2716 = vmul.f32 %v2638, %v2709
      %v2717 = vmul.f32 %v2639, %v2709
      %v2718 = vmul.f32 %v2640, %v2709
      %v2719 = vmul.f32 %v2641, %v2709
      %v2720 = vmul.f32 %v2642, %v2709
      %v2721 = vmul.f32 %v2643, %v2709
      %v2722 = vmul.f32 %v2644, %v2709
      %v2723 = vmul.f32 %v2645, %v2709
      %v2724 = vmul.f32 %v2646, %v2709
      %v2725 = vmul.f32 %v2647, %v2709
      %v2726 = vmul.f32 %v2648, %v2709
      %v2727 = vmul.f32 %v2649, %v2709
      %v2728 = vmul.f32 %v2650, %v2709
      %v2729 = vmul.f32 %v2651, %v2709
      %v2730 = vmul.f32 %v2652, %v2709
      %v2731 = vmul.f32 %v2653, %v2709
      %v2732 = vmul.f32 %v2654, %v2709
      %v2733 = vmul.f32 %v2655, %v2709
      %v2734 = vmul.f32 %v2656, %v2709
      %v2735 = vmul.f32 %v2657, %v2709
      %v2736 = vmul.f32 %v2658, %v2709
      %v2737 = vmul.f32 %v2659, %v2709
      %v2738 = vmul.f32 %v2660, %v2709
      %v2739 = vmul.f32 %v2661, %v2709
      %v2740 = vmul.f32 %v2662, %v2709
      %v2741 = vmul.f32 %v2663, %v2709
      %v2742 = vmul.f32 %v2664, %v2709
      %v2743 = vmul.f32 %v2665, %v2709
      %v2744 = vmul.f32 %v2666, %v2709
      %v2745 = vmul.f32 %v2667, %v2709
      %v2746 = vmul.f32 %v2668, %v2709
      %v2747 = vmul.f32 %v2669, %v2709
      %v2748 = vmul.f32 %v2670, %v2709
      %v2749 = vmul.f32 %v2671, %v2709
      %v2750 = vmul.f32 %v2672, %v2709
      %v2751 = vmul.f32 %v2673, %v2709
      %v2752 = vmul.f32 %v2674, %v2709
      %v2753 = vmul.f32 %v2675, %v2709
      %v2754 = vmul.f32 %v2676, %v2709
      %v2755 = vmul.f32 %v2677, %v2709
      %v2756 = vmul.f32 %v2678, %v2709
      %v2757 = vmul.f32 %v2679, %v2709
      %v2758 = vmul.f32 %v2680, %v2709
      %v2759 = vmul.f32 %v2681, %v2709
      %v2760 = vmul.f32 %v2682, %v2709
      %v2761 = vmul.f32 %v2683, %v2709
      %v2762 = vmul.f32 %v2684, %v2709
      %v2763 = vmul.f32 %v2685, %v2709
      %v2764 = vmul.f32 %v2686, %v2709
      %v2765 = vmul.f32 %v2687, %v2709
      %v2766 = vmul.f32 %v2688, %v2709
      %v2767 = vmul.f32 %v2689, %v2709
      %v2768 = vmul.f32 %v2690, %v2709
      %v2769 = vmul.f32 %v2691, %v2709
      %v2770 = vmul.f32 %v2692, %v2709
      %v2771 = vmul.f32 %v2693, %v2709
      %v2772 = vmul.f32 %v2694, %v2709
      %v2773 = vmul.f32 %v2695, %v2709
      %v2774 = vmul.f32 %v2696, %v2709
      %v2775 = vmul.f32 %v2697, %v2709
      %v2776 = vmul.f32 %v2698, %v2709
      %v2777 = vmul.f32 %v2699, %v2709
      %v2778 = vmul.f32 %v2700, %v2709
      %v2779 = vmul.f32 %v2701, %v2709
      %v2780 = vmul.f32 %v2702, %v2709
      %v2781 = vmul.f32 %v2703, %v2709
      %v2782 = vmul.f32 %v2704, %v2709
      %v2783 = vadd.f32 %v2561, %v2711
      %v2784 = vadd.f32 %v2562, %v2712
      %v2785 = vadd.f32 %v2563, %v2713
      %v2786 = vadd.f32 %v2564, %v2714
      %v2787 = vadd.f32 %v2565, %v2715
      %v2788 = vadd.f32 %v2566, %v2716
      %v2789 = vadd.f32 %v2567, %v2717
      %v2790 = vadd.f32 %v2568, %v2718
      %v2791 = vadd.f32 %v2569, %v2719
      %v2792 = vadd.f32 %v2570, %v2720
      %v2793 = vadd.f32 %v2571, %v2721
      %v2794 = vadd.f32 %v2572, %v2722
      %v2795 = vadd.f32 %v2573, %v2723
      %v2796 = vadd.f32 %v2574, %v2724
      %v2797 = vadd.f32 %v2575, %v2725
      %v2798 = vadd.f32 %v2576, %v2726
      %v2799 = vadd.f32 %v2577, %v2727
      %v2800 = vadd.f32 %v2578, %v2728
      %v2801 = vadd.f32 %v2579, %v2729
      %v2802 = vadd.f32 %v2580, %v2730
      %v2803 = vadd.f32 %v2581, %v2731
      %v2804 = vadd.f32 %v2582, %v2732
      %v2805 = vadd.f32 %v2583, %v2733
      %v2806 = vadd.f32 %v2584, %v2734
      %v2807 = vadd.f32 %v2585, %v2735
      %v2808 = vadd.f32 %v2586, %v2736
      %v2809 = vadd.f32 %v2587, %v2737
      %v2810 = vadd.f32 %v2588, %v2738
      %v2811 = vadd.f32 %v2589, %v2739
      %v2812 = vadd.f32 %v2590, %v2740
      %v2813 = vadd.f32 %v2591, %v2741
      %v2814 = vadd.f32 %v2592, %v2742
      %v2815 = vadd.f32 %v2593, %v2743
      %v2816 = vadd.f32 %v2594, %v2744
      %v2817 = vadd.f32 %v2595, %v2745
      %v2818 = vadd.f32 %v2596, %v2746
      %v2819 = vadd.f32 %v2597, %v2747
      %v2820 = vadd.f32 %v2598, %v2748
      %v2821 = vadd.f32 %v2599, %v2749
      %v2822 = vadd.f32 %v2600, %v2750
      %v2823 = vadd.f32 %v2601, %v2751
      %v2824 = vadd.f32 %v2602, %v2752
      %v2825 = vadd.f32 %v2603, %v2753
      %v2826 = vadd.f32 %v2604, %v2754
      %v2827 = vadd.f32 %v2605, %v2755
      %v2828 = vadd.f32 %v2606, %v2756
      %v2829 = vadd.f32 %v2607, %v2757
      %v2830 = vadd.f32 %v2608, %v2758
      %v2831 = vadd.f32 %v2609, %v2759
      %v2832 = vadd.f32 %v2610, %v2760
      %v2833 = vadd.f32 %v2611, %v2761
      %v2834 = vadd.f32 %v2612, %v2762
      %v2835 = vadd.f32 %v2613, %v2763
      %v2836 = vadd.f32 %v2614, %v2764
      %v2837 = vadd.f32 %v2615, %v2765
      %v2838 = vadd.f32 %v2616, %v2766
      %v2839 = vadd.f32 %v2617, %v2767
      %v2840 = vadd.f32 %v2618, %v2768
      %v2841 = vadd.f32 %v2619, %v2769
      %v2842 = vadd.f32 %v2620, %v2770
      %v2843 = vadd.f32 %v2621, %v2771
      %v2844 = vadd.f32 %v2622, %v2772
      %v2845 = vadd.f32 %v2623, %v2773
      %v2846 = vadd.f32 %v2624, %v2774
      %v2847 = vadd.f32 %v2625, %v2775
      %v2848 = vadd.f32 %v2626, %v2776
      %v2849 = vadd.f32 %v2627, %v2777
      %v2850 = vadd.f32 %v2628, %v2778
      %v2851 = vadd.f32 %v2629, %v2779
      %v2852 = vadd.f32 %v2630, %v2780
      %v2853 = vadd.f32 %v2631, %v2781
      %v2854 = vadd.f32 %v2632, %v2782
      %v2855 = vld [vmem:[%s2410 + $0x2] sm:$0xff]
      %v2856 = vld [vmem:[%s2410 + $0xa] sm:$0xff]
      %v2857 = vld [vmem:[%s2410 + $0x12] sm:$0xff]
      %v2858 = vld [vmem:[%s2410 + $0x22] sm:$0xff]
      %v2859 = vld [vmem:[%s2410 + $0x2a] sm:$0xff]
      %v2860 = vld [vmem:[%s2410 + $0x32] sm:$0xff]
      %v2861 = vld [vmem:[%s2410 + $0x42] sm:$0xff]
      %v2862 = vld [vmem:[%s2410 + $0x4a] sm:$0xff]
      %v2863 = vld [vmem:[%s2410 + $0x52] sm:$0xff]
      %v2864 = vld [vmem:[%s2410 + $0x62] sm:$0xff]
      %v2865 = vld [vmem:[%s2410 + $0x6a] sm:$0xff]
      %v2866 = vld [vmem:[%s2410 + $0x72] sm:$0xff]
      %v2867 = vld [vmem:[%s2410 + $0x82] sm:$0xff]
      %v2868 = vld [vmem:[%s2410 + $0x8a] sm:$0xff]
      %v2869 = vld [vmem:[%s2410 + $0x92] sm:$0xff]
      %v2870 = vld [vmem:[%s2410 + $0xa2] sm:$0xff]
      %v2871 = vld [vmem:[%s2410 + $0xaa] sm:$0xff]
      %v2872 = vld [vmem:[%s2410 + $0xb2] sm:$0xff]
      %v2873 = vld [vmem:[%s2410 + $0xc2] sm:$0xff]
      %v2874 = vld [vmem:[%s2410 + $0xca] sm:$0xff]
      %v2875 = vld [vmem:[%s2410 + $0xd2] sm:$0xff]
      %v2876 = vld [vmem:[%s2410 + $0xe2] sm:$0xff]
      %v2877 = vld [vmem:[%s2410 + $0xea] sm:$0xff]
      %v2878 = vld [vmem:[%s2410 + $0xf2] sm:$0xff]
      %v2879 = vld [vmem:[%s2410 + $0x102] sm:$0xff]
      %v2880 = vld [vmem:[%s2410 + $0x10a] sm:$0xff]
      %v2881 = vld [vmem:[%s2410 + $0x112] sm:$0xff]
      %v2882 = vld [vmem:[%s2410 + $0x122] sm:$0xff]
      %v2883 = vld [vmem:[%s2410 + $0x12a] sm:$0xff]
      %v2884 = vld [vmem:[%s2410 + $0x132] sm:$0xff]
      %v2885 = vld [vmem:[%s2410 + $0x142] sm:$0xff]
      %v2886 = vld [vmem:[%s2410 + $0x14a] sm:$0xff]
      %v2887 = vld [vmem:[%s2410 + $0x152] sm:$0xff]
      %v2888 = vld [vmem:[%s2410 + $0x162] sm:$0xff]
      %v2889 = vld [vmem:[%s2410 + $0x16a] sm:$0xff]
      %v2890 = vld [vmem:[%s2410 + $0x172] sm:$0xff]
      %v2891 = vld [vmem:[%s2410 + $0x182] sm:$0xff]
      %v2892 = vld [vmem:[%s2410 + $0x18a] sm:$0xff]
      %v2893 = vld [vmem:[%s2410 + $0x192] sm:$0xff]
      %v2894 = vld [vmem:[%s2410 + $0x1a2] sm:$0xff]
      %v2895 = vld [vmem:[%s2410 + $0x1aa] sm:$0xff]
      %v2896 = vld [vmem:[%s2410 + $0x1b2] sm:$0xff]
      %v2897 = vld [vmem:[%s2410 + $0x1c2] sm:$0xff]
      %v2898 = vld [vmem:[%s2410 + $0x1ca] sm:$0xff]
      %v2899 = vld [vmem:[%s2410 + $0x1d2] sm:$0xff]
      %v2900 = vld [vmem:[%s2410 + $0x1e2] sm:$0xff]
      %v2901 = vld [vmem:[%s2410 + $0x1ea] sm:$0xff]
      %v2902 = vld [vmem:[%s2410 + $0x1f2] sm:$0xff]
      %v2903 = vld [vmem:[%s2410 + $0x202] sm:$0xff]
      %v2904 = vld [vmem:[%s2410 + $0x20a] sm:$0xff]
      %v2905 = vld [vmem:[%s2410 + $0x212] sm:$0xff]
      %v2906 = vld [vmem:[%s2410 + $0x222] sm:$0xff]
      %v2907 = vld [vmem:[%s2410 + $0x22a] sm:$0xff]
      %v2908 = vld [vmem:[%s2410 + $0x232] sm:$0xff]
      %v2909 = vld [vmem:[%s2410 + $0x242] sm:$0xff]
      %v2910 = vld [vmem:[%s2410 + $0x24a] sm:$0xff]
      %v2911 = vld [vmem:[%s2410 + $0x252] sm:$0xff]
      %v2912 = vld [vmem:[%s2410 + $0x262] sm:$0xff]
      %v2913 = vld [vmem:[%s2410 + $0x26a] sm:$0xff]
      %v2914 = vld [vmem:[%s2410 + $0x272] sm:$0xff]
      %v2915 = vld [vmem:[%s2410 + $0x282] sm:$0xff]
      %v2916 = vld [vmem:[%s2410 + $0x28a] sm:$0xff]
      %v2917 = vld [vmem:[%s2410 + $0x292] sm:$0xff]
      %v2918 = vld [vmem:[%s2410 + $0x2a2] sm:$0xff]
      %v2919 = vld [vmem:[%s2410 + $0x2aa] sm:$0xff]
      %v2920 = vld [vmem:[%s2410 + $0x2b2] sm:$0xff]
      %v2921 = vld [vmem:[%s2410 + $0x2c2] sm:$0xff]
      %v2922 = vld [vmem:[%s2410 + $0x2ca] sm:$0xff]
      %v2923 = vld [vmem:[%s2410 + $0x2d2] sm:$0xff]
      %v2924 = vld [vmem:[%s2410 + $0x2e2] sm:$0xff]
      %v2925 = vld [vmem:[%s2410 + $0x2ea] sm:$0xff]
      %v2926 = vld [vmem:[%s2410 + $0x2f2] sm:$0xff]
      %v2928 = vlaneseq
      %v2929 = vshrl.u32 %v2928, 7
      %v2930 = vsub.s32 0, %v2929
      %v2931 = vrot.slane %v1076, %v2930
      %v2933 = vmul.f32 %v2855, %v2931
      %v2934 = vmul.f32 %v2856, %v2931
      %v2935 = vmul.f32 %v2857, %v2931
      %v2936 = vmul.f32 %v2858, %v2931
      %v2937 = vmul.f32 %v2859, %v2931
      %v2938 = vmul.f32 %v2860, %v2931
      %v2939 = vmul.f32 %v2861, %v2931
      %v2940 = vmul.f32 %v2862, %v2931
      %v2941 = vmul.f32 %v2863, %v2931
      %v2942 = vmul.f32 %v2864, %v2931
      %v2943 = vmul.f32 %v2865, %v2931
      %v2944 = vmul.f32 %v2866, %v2931
      %v2945 = vmul.f32 %v2867, %v2931
      %v2946 = vmul.f32 %v2868, %v2931
      %v2947 = vmul.f32 %v2869, %v2931
      %v2948 = vmul.f32 %v2870, %v2931
      %v2949 = vmul.f32 %v2871, %v2931
      %v2950 = vmul.f32 %v2872, %v2931
      %v2951 = vmul.f32 %v2873, %v2931
      %v2952 = vmul.f32 %v2874, %v2931
      %v2953 = vmul.f32 %v2875, %v2931
      %v2954 = vmul.f32 %v2876, %v2931
      %v2955 = vmul.f32 %v2877, %v2931
      %v2956 = vmul.f32 %v2878, %v2931
      %v2957 = vmul.f32 %v2879, %v2931
      %v2958 = vmul.f32 %v2880, %v2931
      %v2959 = vmul.f32 %v2881, %v2931
      %v2960 = vmul.f32 %v2882, %v2931
      %v2961 = vmul.f32 %v2883, %v2931
      %v2962 = vmul.f32 %v2884, %v2931
      %v2963 = vmul.f32 %v2885, %v2931
      %v2964 = vmul.f32 %v2886, %v2931
      %v2965 = vmul.f32 %v2887, %v2931
      %v2966 = vmul.f32 %v2888, %v2931
      %v2967 = vmul.f32 %v2889, %v2931
      %v2968 = vmul.f32 %v2890, %v2931
      %v2969 = vmul.f32 %v2891, %v2931
      %v2970 = vmul.f32 %v2892, %v2931
      %v2971 = vmul.f32 %v2893, %v2931
      %v2972 = vmul.f32 %v2894, %v2931
      %v2973 = vmul.f32 %v2895, %v2931
      %v2974 = vmul.f32 %v2896, %v2931
      %v2975 = vmul.f32 %v2897, %v2931
      %v2976 = vmul.f32 %v2898, %v2931
      %v2977 = vmul.f32 %v2899, %v2931
      %v2978 = vmul.f32 %v2900, %v2931
      %v2979 = vmul.f32 %v2901, %v2931
      %v2980 = vmul.f32 %v2902, %v2931
      %v2981 = vmul.f32 %v2903, %v2931
      %v2982 = vmul.f32 %v2904, %v2931
      %v2983 = vmul.f32 %v2905, %v2931
      %v2984 = vmul.f32 %v2906, %v2931
      %v2985 = vmul.f32 %v2907, %v2931
      %v2986 = vmul.f32 %v2908, %v2931
      %v2987 = vmul.f32 %v2909, %v2931
      %v2988 = vmul.f32 %v2910, %v2931
      %v2989 = vmul.f32 %v2911, %v2931
      %v2990 = vmul.f32 %v2912, %v2931
      %v2991 = vmul.f32 %v2913, %v2931
      %v2992 = vmul.f32 %v2914, %v2931
      %v2993 = vmul.f32 %v2915, %v2931
      %v2994 = vmul.f32 %v2916, %v2931
      %v2995 = vmul.f32 %v2917, %v2931
      %v2996 = vmul.f32 %v2918, %v2931
      %v2997 = vmul.f32 %v2919, %v2931
      %v2998 = vmul.f32 %v2920, %v2931
      %v2999 = vmul.f32 %v2921, %v2931
      %v3000 = vmul.f32 %v2922, %v2931
      %v3001 = vmul.f32 %v2923, %v2931
      %v3002 = vmul.f32 %v2924, %v2931
      %v3003 = vmul.f32 %v2925, %v2931
      %v3004 = vmul.f32 %v2926, %v2931
      %v3005 = vadd.f32 %v2783, %v2933
      %v3006 = vadd.f32 %v2784, %v2934
      %v3007 = vadd.f32 %v2785, %v2935
      %v3008 = vadd.f32 %v2786, %v2936
      %v3009 = vadd.f32 %v2787, %v2937
      %v3010 = vadd.f32 %v2788, %v2938
      %v3011 = vadd.f32 %v2789, %v2939
      %v3012 = vadd.f32 %v2790, %v2940
      %v3013 = vadd.f32 %v2791, %v2941
      %v3014 = vadd.f32 %v2792, %v2942
      %v3015 = vadd.f32 %v2793, %v2943
      %v3016 = vadd.f32 %v2794, %v2944
      %v3017 = vadd.f32 %v2795, %v2945
      %v3018 = vadd.f32 %v2796, %v2946
      %v3019 = vadd.f32 %v2797, %v2947
      %v3020 = vadd.f32 %v2798, %v2948
      %v3021 = vadd.f32 %v2799, %v2949
      %v3022 = vadd.f32 %v2800, %v2950
      %v3023 = vadd.f32 %v2801, %v2951
      %v3024 = vadd.f32 %v2802, %v2952
      %v3025 = vadd.f32 %v2803, %v2953
      %v3026 = vadd.f32 %v2804, %v2954
      %v3027 = vadd.f32 %v2805, %v2955
      %v3028 = vadd.f32 %v2806, %v2956
      %v3029 = vadd.f32 %v2807, %v2957
      %v3030 = vadd.f32 %v2808, %v2958
      %v3031 = vadd.f32 %v2809, %v2959
      %v3032 = vadd.f32 %v2810, %v2960
      %v3033 = vadd.f32 %v2811, %v2961
      %v3034 = vadd.f32 %v2812, %v2962
      %v3035 = vadd.f32 %v2813, %v2963
      %v3036 = vadd.f32 %v2814, %v2964
      %v3037 = vadd.f32 %v2815, %v2965
      %v3038 = vadd.f32 %v2816, %v2966
      %v3039 = vadd.f32 %v2817, %v2967
      %v3040 = vadd.f32 %v2818, %v2968
      %v3041 = vadd.f32 %v2819, %v2969
      %v3042 = vadd.f32 %v2820, %v2970
      %v3043 = vadd.f32 %v2821, %v2971
      %v3044 = vadd.f32 %v2822, %v2972
      %v3045 = vadd.f32 %v2823, %v2973
      %v3046 = vadd.f32 %v2824, %v2974
      %v3047 = vadd.f32 %v2825, %v2975
      %v3048 = vadd.f32 %v2826, %v2976
      %v3049 = vadd.f32 %v2827, %v2977
      %v3050 = vadd.f32 %v2828, %v2978
      %v3051 = vadd.f32 %v2829, %v2979
      %v3052 = vadd.f32 %v2830, %v2980
      %v3053 = vadd.f32 %v2831, %v2981
      %v3054 = vadd.f32 %v2832, %v2982
      %v3055 = vadd.f32 %v2833, %v2983
      %v3056 = vadd.f32 %v2834, %v2984
      %v3057 = vadd.f32 %v2835, %v2985
      %v3058 = vadd.f32 %v2836, %v2986
      %v3059 = vadd.f32 %v2837, %v2987
      %v3060 = vadd.f32 %v2838, %v2988
      %v3061 = vadd.f32 %v2839, %v2989
      %v3062 = vadd.f32 %v2840, %v2990
      %v3063 = vadd.f32 %v2841, %v2991
      %v3064 = vadd.f32 %v2842, %v2992
      %v3065 = vadd.f32 %v2843, %v2993
      %v3066 = vadd.f32 %v2844, %v2994
      %v3067 = vadd.f32 %v2845, %v2995
      %v3068 = vadd.f32 %v2846, %v2996
      %v3069 = vadd.f32 %v2847, %v2997
      %v3070 = vadd.f32 %v2848, %v2998
      %v3071 = vadd.f32 %v2849, %v2999
      %v3072 = vadd.f32 %v2850, %v3000
      %v3073 = vadd.f32 %v2851, %v3001
      %v3074 = vadd.f32 %v2852, %v3002
      %v3075 = vadd.f32 %v2853, %v3003
      %v3076 = vadd.f32 %v2854, %v3004
      %v3077 = vld [vmem:[%s4] sm:$0x7]
      %v3078 = vld [vmem:[%s5] sm:$0x7]
      %3080 = vset.pattern.permute.xlu0 0
      %3081 = vperm.xlu0 %3080, %v3078
      %v3082 = vpop.permute.xlu0 %3081
      %v3085 = vsel %vm953, %v3077, 0
      %v3088 = vsel %vm953, %v3005, 0
      %v3091 = vsel %vm953, %v3006, 0
      %v3094 = vsel %vm953, %v3007, 0
      %v3097 = vsel %vm953, %v3008, 0
      %v3100 = vsel %vm953, %v3009, 0
      %v3103 = vsel %vm953, %v3010, 0
      %v3106 = vsel %vm953, %v3011, 0
      %v3109 = vsel %vm953, %v3012, 0
      %v3112 = vsel %vm953, %v3013, 0
      %v3115 = vsel %vm953, %v3014, 0
      %v3118 = vsel %vm953, %v3015, 0
      %v3121 = vsel %vm953, %v3016, 0
      %v3124 = vsel %vm953, %v3017, 0
      %v3127 = vsel %vm953, %v3018, 0
      %v3130 = vsel %vm953, %v3019, 0
      %v3133 = vsel %vm953, %v3020, 0
      %v3136 = vsel %vm953, %v3021, 0
      %v3139 = vsel %vm953, %v3022, 0
      %v3142 = vsel %vm953, %v3023, 0
      %v3145 = vsel %vm953, %v3024, 0
      %v3148 = vsel %vm953, %v3025, 0
      %v3151 = vsel %vm953, %v3026, 0
      %v3154 = vsel %vm953, %v3027, 0
      %v3157 = vsel %vm953, %v3028, 0
      %v3160 = vsel %vm953, %v3029, 0
      %v3163 = vsel %vm953, %v3030, 0
      %v3166 = vsel %vm953, %v3031, 0
      %v3169 = vsel %vm953, %v3032, 0
      %v3172 = vsel %vm953, %v3033, 0
      %v3175 = vsel %vm953, %v3034, 0
      %v3178 = vsel %vm953, %v3035, 0
      %v3181 = vsel %vm953, %v3036, 0
      %v3184 = vsel %vm953, %v3037, 0
      %v3187 = vsel %vm953, %v3038, 0
      %v3190 = vsel %vm953, %v3039, 0
      %v3193 = vsel %vm953, %v3040, 0
      %v3196 = vsel %vm953, %v3041, 0
      %v3199 = vsel %vm953, %v3042, 0
      %v3202 = vsel %vm953, %v3043, 0
      %v3205 = vsel %vm953, %v3044, 0
      %v3208 = vsel %vm953, %v3045, 0
      %v3211 = vsel %vm953, %v3046, 0
      %v3214 = vsel %vm953, %v3047, 0
      %v3217 = vsel %vm953, %v3048, 0
      %v3220 = vsel %vm953, %v3049, 0
      %v3223 = vsel %vm953, %v3050, 0
      %v3226 = vsel %vm953, %v3051, 0
      %v3229 = vsel %vm953, %v3052, 0
      %v3232 = vsel %vm953, %v3053, 0
      %v3235 = vsel %vm953, %v3054, 0
      %v3238 = vsel %vm953, %v3055, 0
      %v3241 = vsel %vm953, %v3056, 0
      %v3244 = vsel %vm953, %v3057, 0
      %v3247 = vsel %vm953, %v3058, 0
      %v3250 = vsel %vm953, %v3059, 0
      %v3253 = vsel %vm953, %v3060, 0
      %v3256 = vsel %vm953, %v3061, 0
      %v3259 = vsel %vm953, %v3062, 0
      %v3262 = vsel %vm953, %v3063, 0
      %v3265 = vsel %vm953, %v3064, 0
      %v3268 = vsel %vm953, %v3065, 0
      %v3271 = vsel %vm953, %v3066, 0
      %v3274 = vsel %vm953, %v3067, 0
      %v3277 = vsel %vm953, %v3068, 0
      %v3280 = vsel %vm953, %v3069, 0
      %v3283 = vsel %vm953, %v3070, 0
      %v3286 = vsel %vm953, %v3071, 0
      %v3289 = vsel %vm953, %v3072, 0
      %v3292 = vsel %vm953, %v3073, 0
      %v3295 = vsel %vm953, %v3074, 0
      %v3298 = vsel %vm953, %v3075, 0
      %v3301 = vsel %vm953, %v3076, 0
      %3303 = vmatprep.subr.mxu0 0.0
      %3304 = vmatpush1.xpose.msra.mxu0 %v3088
      %3305 = vmatprep.subr.mxu0 0.0
      %3306 = vmatpush1.xpose.msra.mxu0 %v3091
      %3307 = vmatprep.subr.mxu0 0.0
      %3308 = vmatpush1.xpose.msra.mxu0 %v3094
      %3309 = vmatprep.subr.mxu0 0.0
      %3310 = vmatpush1.xpose.msra.mxu0 %v3097
      %3311 = vmatprep.subr.mxu0 0.0
      %3312 = vmatpush1.xpose.msra.mxu0 %v3100
      %3313 = vmatprep.subr.mxu0 0.0
      %3314 = vmatpush1.xpose.msra.mxu0 %v3103
      %3315 = vmatprep.subr.mxu0 0.0
      %3316 = vmatpush1.xpose.msra.mxu0 %v3106
      %3317 = vmatprep.subr.mxu0 0.0
      %3318 = vmatpush1.xpose.msra.mxu0 %v3109
      %3319 = vmatprep.subr.mxu0 0.0
      %3320 = vmatpush1.xpose.msra.mxu0 %v3112
      %3321 = vmatprep.subr.mxu0 0.0
      %3322 = vmatpush1.xpose.msra.mxu0 %v3115
      %3323 = vmatprep.subr.mxu0 0.0
      %3324 = vmatpush1.xpose.msra.mxu0 %v3118
      %3325 = vmatprep.subr.mxu0 0.0
      %3326 = vmatpush1.xpose.msra.mxu0 %v3121
      %3327 = vmatprep.subr.mxu0 0.0
      %3328 = vmatpush1.xpose.msra.mxu0 %v3124
      %3329 = vmatprep.subr.mxu0 0.0
      %3330 = vmatpush1.xpose.msra.mxu0 %v3127
      %3331 = vmatprep.subr.mxu0 0.0
      %3332 = vmatpush1.xpose.msra.mxu0 %v3130
      %3333 = vmatprep.subr.mxu0 0.0
      %3334 = vmatpush1.xpose.msra.mxu0 %v3133
      %3335 = vmatprep.subr.mxu0 0.0
      %3336 = vmatpush1.xpose.msra.mxu0 %v3136
      %3337 = vmatprep.subr.mxu0 0.0
      %3338 = vmatpush1.xpose.msra.mxu0 %v3139
      %3339 = vmatprep.subr.mxu0 0.0
      %3340 = vmatpush1.xpose.msra.mxu0 %v3142
      %3341 = vmatprep.subr.mxu0 0.0
      %3342 = vmatpush1.xpose.msra.mxu0 %v3145
      %3343 = vmatprep.subr.mxu0 0.0
      %3344 = vmatpush1.xpose.msra.mxu0 %v3148
      %3345 = vmatprep.subr.mxu0 0.0
      %3346 = vmatpush1.xpose.msra.mxu0 %v3151
      %3347 = vmatprep.subr.mxu0 0.0
      %3348 = vmatpush1.xpose.msra.mxu0 %v3154
      %3349 = vmatprep.subr.mxu0 0.0
      %3350 = vmatpush1.xpose.msra.mxu0 %v3157
      %3351 = vmatprep.subr.mxu0 0.0
      %3352 = vmatpush1.xpose.msra.mxu0 %v3160
      %3353 = vmatprep.subr.mxu0 0.0
      %3354 = vmatpush1.xpose.msra.mxu0 %v3163
      %3355 = vmatprep.subr.mxu0 0.0
      %3356 = vmatpush1.xpose.msra.mxu0 %v3166
      %3357 = vmatprep.subr.mxu0 0.0
      %3358 = vmatpush1.xpose.msra.mxu0 %v3169
      %3359 = vmatprep.subr.mxu0 0.0
      %3360 = vmatpush1.xpose.msra.mxu0 %v3172
      %3361 = vmatprep.subr.mxu0 0.0
      %3362 = vmatpush1.xpose.msra.mxu0 %v3175
      %3363 = vmatprep.subr.mxu0 0.0
      %3364 = vmatpush1.xpose.msra.mxu0 %v3178
      %3365 = vmatprep.subr.mxu0 0.0
      %3366 = vmatpush1.xpose.msra.mxu0 %v3181
      %3367 = vmatprep.mubr.f32.mxu0 0.0
      %3368 = vmatmul.mubr.f32.gmra.mrb[0].mxu0 %v3085
      %v3369 = vpop.f32.mrb[0].mxu0
      %v3370 = vadd.f32 %v3082, %v3369
      %v3371 = vpop.f32.mrb[0].mxu0
      %v3372 = vadd.f32 %v3082, %v3371
      %3373 = vdwg.mxu0
      %3374 = vmatprep.subr.mxu0 0.0
      %3375 = vmatpush1.xpose.msra.mxu0 %v3184
      %3376 = vmatprep.subr.mxu0 0.0
      %3377 = vmatpush1.xpose.msra.mxu0 %v3187
      %3378 = vmatprep.subr.mxu0 0.0
      %3379 = vmatpush1.xpose.msra.mxu0 %v3190
      %3380 = vmatprep.subr.mxu0 0.0
      %3381 = vmatpush1.xpose.msra.mxu0 %v3193
      %3382 = vmatprep.subr.mxu0 0.0
      %3383 = vmatpush1.xpose.msra.mxu0 %v3196
      %3384 = vmatprep.subr.mxu0 0.0
      %3385 = vmatpush1.xpose.msra.mxu0 %v3199
      %3386 = vmatprep.subr.mxu0 0.0
      %3387 = vmatpush1.xpose.msra.mxu0 %v3202
      %3388 = vmatprep.subr.mxu0 0.0
      %3389 = vmatpush1.xpose.msra.mxu0 %v3205
      %3390 = vmatprep.subr.mxu0 0.0
      %3391 = vmatpush1.xpose.msra.mxu0 %v3208
      %3392 = vmatprep.subr.mxu0 0.0
      %3393 = vmatpush1.xpose.msra.mxu0 %v3211
      %3394 = vmatprep.subr.mxu0 0.0
      %3395 = vmatpush1.xpose.msra.mxu0 %v3214
      %3396 = vmatprep.subr.mxu0 0.0
      %3397 = vmatpush1.xpose.msra.mxu0 %v3217
      %3398 = vmatprep.subr.mxu0 0.0
      %3399 = vmatpush1.xpose.msra.mxu0 %v3220
      %3400 = vmatprep.subr.mxu0 0.0
      %3401 = vmatpush1.xpose.msra.mxu0 %v3223
      %3402 = vmatprep.subr.mxu0 0.0
      %3403 = vmatpush1.xpose.msra.mxu0 %v3226
      %3404 = vmatprep.subr.mxu0 0.0
      %3405 = vmatpush1.xpose.msra.mxu0 %v3229
      %3406 = vmatprep.subr.mxu0 0.0
      %3407 = vmatpush1.xpose.msra.mxu0 %v3232
      %3408 = vmatprep.subr.mxu0 0.0
      %3409 = vmatpush1.xpose.msra.mxu0 %v3235
      %3410 = vmatprep.subr.mxu0 0.0
      %3411 = vmatpush1.xpose.msra.mxu0 %v3238
      %3412 = vmatprep.subr.mxu0 0.0
      %3413 = vmatpush1.xpose.msra.mxu0 %v3241
      %3414 = vmatprep.subr.mxu0 0.0
      %3415 = vmatpush1.xpose.msra.mxu0 %v3244
      %3416 = vmatprep.subr.mxu0 0.0
      %3417 = vmatpush1.xpose.msra.mxu0 %v3247
      %3418 = vmatprep.subr.mxu0 0.0
      %3419 = vmatpush1.xpose.msra.mxu0 %v3250
      %3420 = vmatprep.subr.mxu0 0.0
      %3421 = vmatpush1.xpose.msra.mxu0 %v3253
      %3422 = vmatprep.subr.mxu0 0.0
      %3423 = vmatpush1.xpose.msra.mxu0 %v3256
      %3424 = vmatprep.subr.mxu0 0.0
      %3425 = vmatpush1.xpose.msra.mxu0 %v3259
      %3426 = vmatprep.subr.mxu0 0.0
      %3427 = vmatpush1.xpose.msra.mxu0 %v3262
      %3428 = vmatprep.subr.mxu0 0.0
      %3429 = vmatpush1.xpose.msra.mxu0 %v3265
      %3430 = vmatprep.subr.mxu0 0.0
      %3431 = vmatpush1.xpose.msra.mxu0 %v3268
      %3432 = vmatprep.subr.mxu0 0.0
      %3433 = vmatpush1.xpose.msra.mxu0 %v3271
      %3434 = vmatprep.subr.mxu0 0.0
      %3435 = vmatpush1.xpose.msra.mxu0 %v3274
      %3436 = vmatprep.subr.mxu0 0.0
      %3437 = vmatpush1.xpose.msra.mxu0 %v3277
      %3438 = vmatprep.mubr.f32.mxu0 0.0
      %3439 = vmatmul.mubr.f32.gmra.mrb[0].mxu0 %v3085
      %v3440 = vpop.f32.mrb[0].mxu0
      %v3441 = vadd.f32 %v3082, %v3440
      %v3442 = vpop.f32.mrb[0].mxu0
      %v3443 = vadd.f32 %v3082, %v3442
      %3444 = vdwg.mxu0
      %3445 = vmatprep.subr.mxu0 0.0
      %3446 = vmatpush1.xpose.msra.mxu0 %v3280
      %3447 = vmatprep.subr.mxu0 0.0
      %3448 = vmatpush1.xpose.msra.mxu0 %v3283
      %3449 = vmatprep.subr.mxu0 0.0
      %3450 = vmatpush1.xpose.msra.mxu0 %v3286
      %3451 = vmatprep.subr.mxu0 0.0
      %3452 = vmatpush1.xpose.msra.mxu0 %v3289
      %3453 = vmatprep.subr.mxu0 0.0
      %3454 = vmatpush1.xpose.msra.mxu0 %v3292
      %3455 = vmatprep.subr.mxu0 0.0
      %3456 = vmatpush1.xpose.msra.mxu0 %v3295
      %3457 = vmatprep.subr.mxu0 0.0
      %3458 = vmatpush1.xpose.msra.mxu0 %v3298
      %3459 = vmatprep.subr.mxu0 0.0
      %3460 = vmatpush1.xpose.msra.mxu0 %v3301
      %3461 = vmatprep.subr.mxu0 0.0
      %3462 = vmatpush1.xpose.msra.mxu0 0.0
      %3463 = vmatprep.subr.mxu0 0.0
      %3464 = vmatpush1.xpose.msra.mxu0 0.0
      %3465 = vmatprep.subr.mxu0 0.0
      %3466 = vmatpush1.xpose.msra.mxu0 0.0
      %3467 = vmatprep.subr.mxu0 0.0
      %3468 = vmatpush1.xpose.msra.mxu0 0.0
      %3469 = vmatprep.subr.mxu0 0.0
      %3470 = vmatpush1.xpose.msra.mxu0 0.0
      %3471 = vmatprep.subr.mxu0 0.0
      %3472 = vmatpush1.xpose.msra.mxu0 0.0
      %3473 = vmatprep.subr.mxu0 0.0
      %3474 = vmatpush1.xpose.msra.mxu0 0.0
      %3475 = vmatprep.subr.mxu0 0.0
      %3476 = vmatpush1.xpose.msra.mxu0 0.0
      %3477 = vmatprep.subr.mxu0 0.0
      %3478 = vmatpush1.xpose.msra.mxu0 0.0
      %3479 = vmatprep.subr.mxu0 0.0
      %3480 = vmatpush1.xpose.msra.mxu0 0.0
      %3481 = vmatprep.subr.mxu0 0.0
      %3482 = vmatpush1.xpose.msra.mxu0 0.0
      %3483 = vmatprep.subr.mxu0 0.0
      %3484 = vmatpush1.xpose.msra.mxu0 0.0
      %3485 = vmatprep.subr.mxu0 0.0
      %3486 = vmatpush1.xpose.msra.mxu0 0.0
      %3487 = vmatprep.subr.mxu0 0.0
      %3488 = vmatpush1.xpose.msra.mxu0 0.0
      %3489 = vmatprep.subr.mxu0 0.0
      %3490 = vmatpush1.xpose.msra.mxu0 0.0
      %3491 = vmatprep.subr.mxu0 0.0
      %3492 = vmatpush1.xpose.msra.mxu0 0.0
      %3493 = vmatprep.subr.mxu0 0.0
      %3494 = vmatpush1.xpose.msra.mxu0 0.0
      %3495 = vmatprep.subr.mxu0 0.0
      %3496 = vmatpush1.xpose.msra.mxu0 0.0
      %3497 = vmatprep.subr.mxu0 0.0
      %3498 = vmatpush1.xpose.msra.mxu0 0.0
      %3499 = vmatprep.subr.mxu0 0.0
      %3500 = vmatpush1.xpose.msra.mxu0 0.0
      %3501 = vmatprep.subr.mxu0 0.0
      %3502 = vmatpush1.xpose.msra.mxu0 0.0
      %3503 = vmatprep.subr.mxu0 0.0
      %3504 = vmatpush1.xpose.msra.mxu0 0.0
      %3505 = vmatprep.subr.mxu0 0.0
      %3506 = vmatpush1.xpose.msra.mxu0 0.0
      %3507 = vmatprep.subr.mxu0 0.0
      %3508 = vmatpush1.xpose.msra.mxu0 0.0
      %3509 = vmatprep.mubr.f32.mxu0 0.0
      %3510 = vmatmul.mubr.f32.gmra.mrb[0].mxu0 %v3085
      %v3511 = vpop.f32.mrb[0].mxu0
      %v3512 = vadd.f32 %v3082, %v3511
      %v3513 = vpop.f32.mrb[0].mxu0
      %3514 = vdwg.mxu0
      %vm3515 = vcmp.gt.f32.partialorder %v3370, 20.0
      %vm3516 = vcmp.gt.f32.partialorder %v3372, 20.0
      %vm3517 = vcmp.gt.f32.partialorder %v3441, 20.0
      %vm3518 = vcmp.gt.f32.partialorder %v3443, 20.0
      %vm3519 = vcmp.gt.f32.partialorder %v3512, 20.0
      %v3520 = vmin.f32 %v3370, 20.0
      %v3521 = vmin.f32 %v3372, 20.0
      %v3522 = vmin.f32 %v3441, 20.0
      %v3523 = vmin.f32 %v3443, 20.0
      %v3524 = vmin.f32 %v3512, 20.0
      %v3525 = vmul.f32 %v3520, 1.442695
      %v3526 = vpow.pop %v3525
      %v3527 = vmul.f32 %v3521, 1.442695
      %v3528 = vpow.pop %v3527
      %v3529 = vmul.f32 %v3522, 1.442695
      %v3530 = vpow.pop %v3529
      %v3531 = vmul.f32 %v3523, 1.442695
      %v3532 = vpow.pop %v3531
      %v3533 = vmul.f32 %v3524, 1.442695
      %v3534 = vpow.pop %v3533
      %v3535 = vadd.f32 %v3526, 1.0
      %v3536 = vlog2.pop %v3535
      %v3537 = vmul.f32 %v3536, 0.6931472
      %v3538 = vmul.f32 -0.5, %v3526
      %v3539 = vadd.f32 %v3538, 1.0
      %v3540 = vmul.f32 %v3539, %v3526
      %v3541 = vand.u32 2147483647, %v3526
      %vm3542 = vcmp.lt.f32.partialorder %v3541, 0.0004427343
      %v3543 = vsel %vm3542, %v3540, %v3537
      %v3544 = vadd.f32 %v3528, 1.0
      %v3545 = vlog2.pop %v3544
      %v3546 = vmul.f32 %v3545, 0.6931472
      %v3547 = vmul.f32 -0.5, %v3528
      %v3548 = vadd.f32 %v3547, 1.0
      %v3549 = vmul.f32 %v3548, %v3528
      %v3550 = vand.u32 2147483647, %v3528
      %vm3551 = vcmp.lt.f32.partialorder %v3550, 0.0004427343
      %v3552 = vsel %vm3551, %v3549, %v3546
      %v3553 = vadd.f32 %v3530, 1.0
      %v3554 = vlog2.pop %v3553
      %v3555 = vmul.f32 %v3554, 0.6931472
      %v3556 = vmul.f32 -0.5, %v3530
      %v3557 = vadd.f32 %v3556, 1.0
      %v3558 = vmul.f32 %v3557, %v3530
      %v3559 = vand.u32 2147483647, %v3530
      %vm3560 = vcmp.lt.f32.partialorder %v3559, 0.0004427343
      %v3561 = vsel %vm3560, %v3558, %v3555
      %v3562 = vadd.f32 %v3532, 1.0
      %v3563 = vlog2.pop %v3562
      %v3564 = vmul.f32 %v3563, 0.6931472
      %v3565 = vmul.f32 -0.5, %v3532
      %v3566 = vadd.f32 %v3565, 1.0
      %v3567 = vmul.f32 %v3566, %v3532
      %v3568 = vand.u32 2147483647, %v3532
      %vm3569 = vcmp.lt.f32.partialorder %v3568, 0.0004427343
      %v3570 = vsel %vm3569, %v3567, %v3564
      %v3571 = vadd.f32 %v3534, 1.0
      %v3572 = vlog2.pop %v3571
      %v3573 = vmul.f32 %v3572, 0.6931472
      %v3574 = vmul.f32 -0.5, %v3534
      %v3575 = vadd.f32 %v3574, 1.0
      %v3576 = vmul.f32 %v3575, %v3534
      %v3577 = vand.u32 2147483647, %v3534
      %vm3578 = vcmp.lt.f32.partialorder %v3577, 0.0004427343
      %v3579 = vsel %vm3578, %v3576, %v3573
      %v3580 = vsel %vm3515, %v3370, %v3543
      %v3581 = vsel %vm3516, %v3372, %v3552
      %v3582 = vsel %vm3517, %v3441, %v3561
      %v3583 = vsel %vm3518, %v3443, %v3570
      %v3584 = vsel %vm3519, %v3512, %v3579
      %v3585 = vtanh.pop %v3580
      %v3586 = vtanh.pop %v3581
      %v3587 = vtanh.pop %v3582
      %v3588 = vtanh.pop %v3583
      %v3589 = vtanh.pop %v3584
      %v3590 = vmul.f32 %v3370, %v3585
      %v3591 = vmul.f32 %v3372, %v3586
      %v3592 = vmul.f32 %v3441, %v3587
      %v3593 = vmul.f32 %v3443, %v3588
      %v3594 = vmul.f32 %v3512, %v3589
      %v3599 = vcombine.low %v3590, %v3591
      %v3600 = vcombine.low %v3592, %v3593
      %3603 = vst [vmem:[%s251] sm:$0x77] %v3599
      %3604 = vst [vmem:[%s251 + $0x8] sm:$0x77] %v3600
      %vm3605 = vcmask 518144
      %3606 = vst.msk [vmem:[%s251 + $0x10] sm:$0x7] %vm3605, %v3594
      %p3607 = scmp.lt.s32.totalorder %s17, 1
      %s3608 = scalar_select %p3607, %s17, 1
      %s3609 = smul.addr %s3608, 5
      %s3610 = smul.addr %s3609, 4
      %s3611 = scalar_lea.vmem %s6, %s3610
      // Predicated region
      $region45: #{cvitc_head_forward.1} parent=43 // pred_check
        %p3612 = pneg %p166
      $region46: #{cvitc_head_forward.1} parent=43 // pred_check_branch
        %3614 = sbr.rel (%p3612) target = $region48
      $region47: #{cvitc_head_forward.1} parent=43 // pred_region
        _
      $region48: #{cvitc_head_forward.1} parent=43 // pred_fallthru
        _
    $region44: #{cvitc_head_forward.1} parent=5 // pred_fallthru
      _
    %p3615 = scmp.le.s32.totalorder 2, %s12
    // Predicated region
    $region49: #{cvitc_head_forward.1} parent=5 // pred_check
      %p3616 = pneg %p3615
    $region50: #{cvitc_head_forward.1} parent=5 // pred_check_branch
      %3618 = sbr.rel (%p3616) target = $region52
    $region51: #{cvitc_head_forward.1} parent=5 // pred_region
      %s3619 = ssub.s32 %s12, 2
      // Predicated region
      $region53: #{cvitc_head_forward.1} parent=51 // pred_check
        %p3620 = pneg %p172
      $region54: #{cvitc_head_forward.1} parent=51 // pred_check_branch
        %3622 = sbr.rel (%p3620) target = $region56
      $region55: #{cvitc_head_forward.1} parent=51 // pred_region
        %p3623 = scmp.lt.s32.totalorder %s18, 1
        %s3624 = scalar_select %p3623, %s18, 1
        %s3625 = smul.addr %s3624, 5
        %s3626 = smul.addr %s3625, 4
        %s3627 = scalar_lea.vmem %s6, %s3626
      $region56: #{cvitc_head_forward.1} parent=51 // pred_fallthru
        _
    $region52: #{cvitc_head_forward.1} parent=5 // pred_fallthru
      _
  $region6: #{cvitc_head_forward.1} parent=0 // loop_footer
    %s16 = sadd.s32 1, %s12
  $region7: #{cvitc_head_forward.1} parent=0 // loop_footer_branch
    %11 = sbr.rel target = $region3
  $region8: #{cvitc_head_forward.1} parent=0 // loop_exit
    _

</llo_original>
